<compile_context>
chip_gen: v7x
topology: tpu7x:2x2x1
jax: 0.10.0
libtpu: 0.0.40
codegen_flags: <defaults>
</compile_context>

<pallas_src>
import functools

import numpy as np
import jax
import jax.numpy as jnp
from jax.experimental import pallas as pl
from jax.experimental.pallas import tpu as pltpu


# -----------------------------------------------------------------------------
# Pallas kernel: full ConvLSTM layer stack for one batch element (grid over B).
# -----------------------------------------------------------------------------
def _convlstm_stack_kernel(x_ref, w_ref, b_ref, mask_ref, h_out_ref, c_out_ref,
                           cur_ref, col_ref, cc_ref,
                           *, H, W, KH, KW, hid, Cin, C, num_layers):
    # x_ref     : (1, Cin, H*W)     f32   layer-0 input (NCHW flattened)
    # w_ref     : (L, 4*hid, K)     bf16  per-layer conv weights (im2col^T layout)
    # b_ref     : (L, 4*hid, 1)     f32   per-layer conv bias (column)
    # mask_ref  : (KH*KW, H*W)      f32   per-tap 'same'-padding validity masks
    # h_out_ref : (L, 1, hid, H*W)  f32   per-layer h_next (NCHW flattened)
    # c_out_ref : (L, 1, hid, H*W)  f32   per-layer c_next (NCHW flattened)
    # cur_ref   : (C, H*W)          f32   current layer's conv input (scratch)
    # col_ref   : (K, H*W)          bf16  im2col matrix (scratch)
    # cc_ref    : (4*hid, H*W)      f32   conv output (scratch; bounds live ranges)
    HW = H * W
    ph, pw = KH // 2, KW // 2

    # Layer-0 conv input: x channels, zero-padded to C rows (channel-major).
    # The zero init matters: layer-0 weight rows Cin:C are zero, but
    # uninitialized VMEM could hold NaNs (0 * NaN = NaN in the matmul).
    if Cin == C:
        cur_ref[...] = x_ref[0]
    else:
        cur_ref[...] = jnp.zeros(cur_ref.shape, cur_ref.dtype)
        cur_ref[0:Cin, :] = x_ref[0]

    # TODO(synk): general nonzero (h, c) initial-state path (adds the W_h part
    # of the conv and the f-gate * c_cur term); forward(hidden_state=None) is
    # specialized to zero initial states here.
    for layer in range(num_layers):                     # static unroll over layers
        # ---- im2col, channel-major: each tap is a lane-dense (C, H*W) store.
        # Taps come from an XLU lane roll of the flat activation plus a
        # precomputed multiplicative edge mask — no padded scratch, no strided
        # slices, no reshapes.
        cur = cur_ref[...]                              # (C, HW) f32
        for kh in range(KH):
            for kw in range(KW):
                dh, dw = kh - ph, kw - pw
                off = dh * W + dw                       # lane offset of this tap
                j = kh * KW + kw
                if off == 0:
                    patch = cur
                else:
                    patch = pltpu.roll(cur, (-off) % HW, axis=1)
                    patch = patch * mask_ref[j:j + 1, :]
                col_ref[j * C:(j + 1) * C, :] = patch.astype(jnp.bfloat16)

        # ---- single fused conv matmul on the MXU: (4*hid, K) x (K, H*W),
        # bf16 operands / f32 accumulation.  The result lands directly in the
        # channel-major store layout; routing it through VMEM bounds its live
        # range so the gate epilogue does not spill.
        cc_ref[...] = (jnp.dot(w_ref[layer], col_ref[...],
                               preferred_element_type=jnp.float32)
                       + b_ref[layer])

        # ---- gates: plain sublane slicing of the channel-major conv output;
        # all elementwise math runs f32 on dense 256-lane rows.
        # Zero initial state => the f-gate * c_cur term vanishes.
        i_t = jax.nn.sigmoid(cc_ref[0 * hid:1 * hid, :])
        o_t = jax.nn.sigmoid(cc_ref[2 * hid:3 * hid, :])
        g_t = jnp.tanh(cc_ref[3 * hid:4 * hid, :])
        c_t = i_t * g_t                                 # (hid, HW) f32
        h_t = o_t * jnp.tanh(c_t)                       # (hid, HW) f32

        # ---- lane-dense stores; (hid, H*W) is already NCHW flattened.
        h_out_ref[layer, 0, :, :] = h_t
        c_out_ref[layer, 0, :, :] = c_t

        # ---- next layer consumes h_t directly (channel-major handoff: zero
        # data movement).  If Cin > hid the extra rows keep stale layer-0 data,
        # but the corresponding weight rows are zero, so it is harmless.
        if layer + 1 < num_layers:
            cur_ref[0:hid, :] = h_t


# -----------------------------------------------------------------------------
# One-time parameter preparation (hoisted out of the per-call wrapper).
# -----------------------------------------------------------------------------
def prepare_params(params, input_dim, hidden_dim, kernel_size, num_layers):
    """Slice the x-block of each conv weight (zero initial h => h-block drops),
    pad input channels to C = max(input_dim, hidden_dim), reshape to the
    channel-major im2col layout (4*hid, K) and cast to bf16 (MXU operand)."""
    KH, KW = kernel_size
    hid = hidden_dim
    C = max(input_dim, hid)
    K = KH * KW * C
    w_list, b_list = [], []
    for l in range(num_layers):
        w, b = params[l]                    # (KH, KW, cin_l + hid, 4*hid), (4*hid,)
        cin_l = input_dim if l == 0 else hid
        w_x = w[:, :, :cin_l, :]
        w_x = jnp.pad(w_x, ((0, 0), (0, 0), (0, C - cin_l), (0, 0)))
        w_list.append(jnp.transpose(w_x.reshape(K, 4 * hid)).astype(jnp.bfloat16))
        b_list.append(b.reshape(4 * hid, 1).astype(jnp.float32))
    return jnp.stack(w_list), jnp.stack(b_list)      # (L,4*hid,K) bf16, (L,4*hid,1) f32


def _padding_masks(H, W, KH, KW):
    """Per-tap 'same'-padding validity masks, (KH*KW, H*W) f32, built host-side."""
    ph, pw = KH // 2, KW // 2
    m = np.zeros((KH * KW, H, W), np.float32)
    for kh in range(KH):
        for kw in range(KW):
            dh, dw = kh - ph, kw - pw
            m[kh * KW + kw,
              max(0, -dh):min(H, H - dh),
              max(0, -dw):min(W, W - dw)] = 1.0
    return jnp.asarray(m.reshape(KH * KW, H * W))


# -----------------------------------------------------------------------------
# Wrapper: ConvLSTM.forward(x, hidden_state=None)  ->  (output, internal_state)
# -----------------------------------------------------------------------------
def convlstm_forward(x_nchw, prepared, hidden_dim, kernel_size, num_layers):
    w_all, b_all = prepared
    B, Cin, H, W = x_nchw.shape
    KH, KW = kernel_size
    hid = hidden_dim
    C = max(Cin, hid)
    K = KH * KW * C
    HW = H * W
    # Layout guards (documented shape assumptions of the channel-major kernel).
    assert HW % 128 == 0, "H*W must be a multiple of 128 (lane tile)"
    assert hid % 8 == 0, "hidden_dim must be a multiple of 8 (sublane tile)"

    # NCHW is already channel-major: the layer-0 input is a free reshape — no
    # HBM transpose and no channel pad (padding to C rows happens in-kernel).
    x = x_nchw.reshape(B, Cin, HW).astype(jnp.float32)
    masks = _padding_masks(H, W, KH, KW)

    kernel = functools.partial(_convlstm_stack_kernel, H=H, W=W, KH=KH, KW=KW,
                               hid=hid, Cin=Cin, C=C, num_layers=num_layers)

    h_out, c_out = pl.pallas_call(
        kernel,
        grid=(B,),
        in_specs=[
            pl.BlockSpec((1, Cin, HW), lambda b: (b, 0, 0)),
            pl.BlockSpec((num_layers, 4 * hid, K), lambda b: (0, 0, 0)),
            pl.BlockSpec((num_layers, 4 * hid, 1), lambda b: (0, 0, 0)),
            pl.BlockSpec((KH * KW, HW), lambda b: (0, 0)),
        ],
        out_specs=[
            pl.BlockSpec((num_layers, 1, hid, HW), lambda b: (0, b, 0, 0)),
            pl.BlockSpec((num_layers, 1, hid, HW), lambda b: (0, b, 0, 0)),
        ],
        out_shape=[
            jax.ShapeDtypeStruct((num_layers, B, hid, HW), jnp.float32),
            jax.ShapeDtypeStruct((num_layers, B, hid, HW), jnp.float32),
        ],
        scratch_shapes=[
            pltpu.VMEM((C, HW), jnp.float32),          # current layer's conv input
            pltpu.VMEM((K, HW), jnp.bfloat16),         # im2col matrix (K, H*W)
            pltpu.VMEM((4 * hid, HW), jnp.float32),    # conv output
        ],
        compiler_params=pltpu.CompilerParams(
            # One batch element per TensorCore on v7x; on single-TC v5e/v6e the
            # B-step serial grid costs <1 us.  Total VMEM residency is <1 MiB,
            # so no vmem_limit override is needed on any generation.
            dimension_semantics=("parallel",),
        ),
    )(x, w_all, b_all, masks)

    # (L, B, hid, H*W) is already NCHW-flattened: reshape only, no transpose.
    h_nchw = h_out.reshape(num_layers, B, hid, H, W)
    c_nchw = c_out.reshape(num_layers, B, hid, H, W)
    output = h_nchw[num_layers - 1]
    internal_state = [(h_nchw[l], c_nchw[l]) for l in range(num_layers)]
    return output, internal_state


# -----------------------------------------------------------------------------
# Deterministic parameter init (nn.Conv2d-equivalent shapes; HWIO layout:
# (KH, KW, cin_total, 4*hidden) instead of PyTorch's (4*hidden, cin_total, KH, KW)).
# -----------------------------------------------------------------------------
def init_params(key, input_dim, hidden_dim, kernel_size, num_layers):
    KH, KW = kernel_size
    params = []
    for i in range(num_layers):
        cin = input_dim if i == 0 else hidden_dim
        c_total = cin + hidden_dim
        key, kw_, kb_ = jax.random.split(key, 3)
        fan_in = c_total * KH * KW
        bound = 1.0 / jnp.sqrt(fan_in)
        w = jax.random.uniform(kw_, (KH, KW, c_total, 4 * hidden_dim),
                               jnp.float32, -bound, bound)
        b = jax.random.uniform(kb_, (4 * hidden_dim,), jnp.float32, -bound, bound)
        params.append((w, b))
    return params


# -----------------------------------------------------------------------------
# Pure-JAX f32 reference (correctness check only).
# -----------------------------------------------------------------------------
def _ref_cell(x, h, c, w, b, kernel_size):
    ph, pw = kernel_size[0] // 2, kernel_size[1] // 2
    combined = jnp.concatenate([x, h], axis=-1)
    cc = jax.lax.conv_general_dilated(
        combined, w, window_strides=(1, 1), padding=((ph, ph), (pw, pw)),
        dimension_numbers=("NHWC", "HWIO", "NHWC")) + b
    hid = h.shape[-1]
    i = jax.nn.sigmoid(cc[..., 0 * hid:1 * hid])
    f = jax.nn.sigmoid(cc[..., 1 * hid:2 * hid])
    o = jax.nn.sigmoid(cc[..., 2 * hid:3 * hid])
    g = jnp.tanh(cc[..., 3 * hid:4 * hid])
    c_next = f * c + i * g
    h_next = o * jnp.tanh(c_next)
    return h_next, c_next


def _ref_forward(x_nchw, params, hidden_dim, kernel_size, num_layers):
    x = jnp.transpose(x_nchw, (0, 2, 3, 1))
    B, H, W, _ = x.shape
    out = x
    states = []
    for i in range(num_layers):
        w, b = params[i]
        h0 = jnp.zeros((B, H, W, hidden_dim), jnp.float32)
        c0 = jnp.zeros((B, H, W, hidden_dim), jnp.float32)
        out, c = _ref_cell(out, h0, c0, w, b, kernel_size)
        states.append((jnp.transpose(out, (0, 3, 1, 2)),
                       jnp.transpose(c, (0, 3, 1, 2))))
    return jnp.transpose(out, (0, 3, 1, 2)), states


if __name__ == "__main__":
    B, Cin, H, W = 2, 4, 16, 16
    hidden_dim = 32
    kernel_size = (3, 3)
    num_layers = 2

    key = jax.random.PRNGKey(0)
    key, kx = jax.random.split(key)
    x = jax.random.normal(kx, (B, Cin, H, W), jnp.float32)
    params = init_params(key, Cin, hidden_dim, kernel_size, num_layers)

    # One-time weight preparation (hoisted out of the forward call).
    prepared = prepare_params(params, Cin, hidden_dim, kernel_size, num_layers)

    out, internal_state = convlstm_forward(x, prepared, hidden_dim,
                                           kernel_size, num_layers)
    out = jax.block_until_ready(out)

    assert out.shape == (B, hidden_dim, H, W)
    assert len(internal_state) == num_layers
    assert internal_state[0][0].shape == (B, hidden_dim, H, W)

    # Numerical check against the pure-f32 JAX reference.  The kernel feeds the
    # MXU bf16 operands (f32 accumulation, f32 gate math), so the tolerance is
    # the ~1e-2 level recommended for bf16 matmul inputs.
    ref_out, ref_state = _ref_forward(x, params, hidden_dim, kernel_size,
                                      num_layers)
    assert jnp.allclose(out, ref_out, atol=2e-2, rtol=2e-2), "output mismatch"
    for l in range(num_layers):
        assert jnp.allclose(internal_state[l][0], ref_state[l][0],
                            atol=2e-2, rtol=2e-2), f"h mismatch layer {l}"
        assert jnp.allclose(internal_state[l][1], ref_state[l][1],
                            atol=2e-2, rtol=2e-2), f"c mismatch layer {l}"

    print("KERNEL_OK")
</pallas_src>

<mosaic_0001>
module attributes {stable_mosaic.version = 11 : i64} {
  func.func @_convlstm_stack_kernel(%arg0: i32, %arg1: memref<1x4x256xf32, #tpu.memory_space<vmem>>, %arg2: memref<2x128x288xbf16, #tpu.memory_space<vmem>>, %arg3: memref<2x128x1xf32, #tpu.memory_space<vmem>>, %arg4: memref<9x256xf32, #tpu.memory_space<vmem>>, %arg5: memref<2x1x32x256xf32, #tpu.memory_space<vmem>>, %arg6: memref<2x1x32x256xf32, #tpu.memory_space<vmem>>, %arg7: memref<32x256xf32, #tpu.memory_space<vmem>>, %arg8: memref<288x256xbf16, #tpu.memory_space<vmem>>, %arg9: memref<128x256xf32, #tpu.memory_space<vmem>>) attributes {dimension_semantics = [#tpu.dimension_semantics<parallel>], iteration_bounds = array<i64: 2>, scalar_prefetch = 0 : i64, scratch_operands = 3 : i64, tpu.core_type = #tpu.core_type<tc>, window_params = [{transform_indices = @transform_0, window_bounds = array<i64: 1, 4, 256>}, {pipeline_mode = #tpu.pipeline_mode<synchronous>, transform_indices = @transform_1, window_bounds = array<i64: 2, 128, 288>}, {pipeline_mode = #tpu.pipeline_mode<synchronous>, transform_indices = @transform_2, window_bounds = array<i64: 2, 128, 1>}, {pipeline_mode = #tpu.pipeline_mode<synchronous>, transform_indices = @transform_3, window_bounds = array<i64: 9, 256>}, {transform_indices = @transform_4, window_bounds = array<i64: 2, 1, 32, 256>}, {transform_indices = @transform_5, window_bounds = array<i64: 2, 1, 32, 256>}]} {
    %cst = arith.constant 0.000000e+00 : f32
    %0 = vector.broadcast %cst : f32 to vector<32x256xf32>
    %c0 = arith.constant 0 : index
    %c0_0 = arith.constant 0 : index
    %1 = vector.load %arg7[%c0, %c0_0] : memref<32x256xf32, #tpu.memory_space<vmem>>, vector<32x256xf32>
    tpu.vector_store %arg7[%c0, %c0_0], %0 {strides = array<i32>} : memref<32x256xf32, #tpu.memory_space<vmem>>, vector<32x256xf32>,
    %c0_1 = arith.constant 0 : index
    %c0_2 = arith.constant 0 : index
    %c0_3 = arith.constant 0 : index
    %2 = vector.load %arg1[%c0_1, %c0_2, %c0_3] : memref<1x4x256xf32, #tpu.memory_space<vmem>>, vector<1x4x256xf32>
    %3 = vector.shape_cast %2 : vector<1x4x256xf32> to vector<4x256xf32>
    %c0_4 = arith.constant 0 : index
    %c0_5 = arith.constant 0 : index
    %4 = vector.load %arg7[%c0_4, %c0_5] : memref<32x256xf32, #tpu.memory_space<vmem>>, vector<4x256xf32>
    tpu.vector_store %arg7[%c0_4, %c0_5], %3 {strides = array<i32>} : memref<32x256xf32, #tpu.memory_space<vmem>>, vector<4x256xf32>,
    %c0_6 = arith.constant 0 : index
    %c0_7 = arith.constant 0 : index
    %5 = vector.load %arg7[%c0_6, %c0_7] : memref<32x256xf32, #tpu.memory_space<vmem>>, vector<32x256xf32>
    %c17_i32 = arith.constant 17 : i32
    %6 = tpu.dynamic_rotate %5 by %c17_i32 dim 1 : vector<32x256xf32>, i32 -> vector<32x256xf32>
    %c0_8 = arith.constant 0 : index
    %c0_9 = arith.constant 0 : index
    %7 = vector.load %arg4[%c0_8, %c0_9] : memref<9x256xf32, #tpu.memory_space<vmem>>, vector<1x256xf32>
    %8 = vector.broadcast %7 : vector<1x256xf32> to vector<32x256xf32>
    %9 = arith.mulf %6, %8 : vector<32x256xf32>
    %10 = arith.truncf %9 : vector<32x256xf32> to vector<32x256xbf16>
    %c0_10 = arith.constant 0 : index
    %c0_11 = arith.constant 0 : index
    %11 = vector.load %arg8[%c0_10, %c0_11] : memref<288x256xbf16, #tpu.memory_space<vmem>>, vector<32x256xbf16>
    tpu.vector_store %arg8[%c0_10, %c0_11], %10 {strides = array<i32>} : memref<288x256xbf16, #tpu.memory_space<vmem>>, vector<32x256xbf16>,
    %c16_i32 = arith.constant 16 : i32
    %12 = tpu.dynamic_rotate %5 by %c16_i32 dim 1 : vector<32x256xf32>, i32 -> vector<32x256xf32>
    %c1 = arith.constant 1 : index
    %c0_12 = arith.constant 0 : index
    %13 = vector.load %arg4[%c1, %c0_12] : memref<9x256xf32, #tpu.memory_space<vmem>>, vector<1x256xf32>
    %14 = vector.broadcast %13 : vector<1x256xf32> to vector<32x256xf32>
    %15 = arith.mulf %12, %14 : vector<32x256xf32>
    %16 = arith.truncf %15 : vector<32x256xf32> to vector<32x256xbf16>
    %c32 = arith.constant 32 : index
    %c0_13 = arith.constant 0 : index
    %17 = vector.load %arg8[%c32, %c0_13] : memref<288x256xbf16, #tpu.memory_space<vmem>>, vector<32x256xbf16>
    tpu.vector_store %arg8[%c32, %c0_13], %16 {strides = array<i32>} : memref<288x256xbf16, #tpu.memory_space<vmem>>, vector<32x256xbf16>,
    %c15_i32 = arith.constant 15 : i32
    %18 = tpu.dynamic_rotate %5 by %c15_i32 dim 1 : vector<32x256xf32>, i32 -> vector<32x256xf32>
    %c2 = arith.constant 2 : index
    %c0_14 = arith.constant 0 : index
    %19 = vector.load %arg4[%c2, %c0_14] : memref<9x256xf32, #tpu.memory_space<vmem>>, vector<1x256xf32>
    %20 = vector.broadcast %19 : vector<1x256xf32> to vector<32x256xf32>
    %21 = arith.mulf %18, %20 : vector<32x256xf32>
    %22 = arith.truncf %21 : vector<32x256xf32> to vector<32x256xbf16>
    %c64 = arith.constant 64 : index
    %c0_15 = arith.constant 0 : index
    %23 = vector.load %arg8[%c64, %c0_15] : memref<288x256xbf16, #tpu.memory_space<vmem>>, vector<32x256xbf16>
    tpu.vector_store %arg8[%c64, %c0_15], %22 {strides = array<i32>} : memref<288x256xbf16, #tpu.memory_space<vmem>>, vector<32x256xbf16>,
    %c1_i32 = arith.constant 1 : i32
    %24 = tpu.dynamic_rotate %5 by %c1_i32 dim 1 : vector<32x256xf32>, i32 -> vector<32x256xf32>
    %c3 = arith.constant 3 : index
    %c0_16 = arith.constant 0 : index
    %25 = vector.load %arg4[%c3, %c0_16] : memref<9x256xf32, #tpu.memory_space<vmem>>, vector<1x256xf32>
    %26 = vector.broadcast %25 : vector<1x256xf32> to vector<32x256xf32>
    %27 = arith.mulf %24, %26 : vector<32x256xf32>
    %28 = arith.truncf %27 : vector<32x256xf32> to vector<32x256xbf16>
    %c96 = arith.constant 96 : index
    %c0_17 = arith.constant 0 : index
    %29 = vector.load %arg8[%c96, %c0_17] : memref<288x256xbf16, #tpu.memory_space<vmem>>, vector<32x256xbf16>
    tpu.vector_store %arg8[%c96, %c0_17], %28 {strides = array<i32>} : memref<288x256xbf16, #tpu.memory_space<vmem>>, vector<32x256xbf16>,
    %30 = arith.truncf %5 : vector<32x256xf32> to vector<32x256xbf16>
    %c128 = arith.constant 128 : index
    %c0_18 = arith.constant 0 : index
    %31 = vector.load %arg8[%c128, %c0_18] : memref<288x256xbf16, #tpu.memory_space<vmem>>, vector<32x256xbf16>
    tpu.vector_store %arg8[%c128, %c0_18], %30 {strides = array<i32>} : memref<288x256xbf16, #tpu.memory_space<vmem>>, vector<32x256xbf16>,
    %c255_i32 = arith.constant 255 : i32
    %32 = tpu.dynamic_rotate %5 by %c255_i32 dim 1 : vector<32x256xf32>, i32 -> vector<32x256xf32>
    %c5 = arith.constant 5 : index
    %c0_19 = arith.constant 0 : index
    %33 = vector.load %arg4[%c5, %c0_19] : memref<9x256xf32, #tpu.memory_space<vmem>>, vector<1x256xf32>
    %34 = vector.broadcast %33 : vector<1x256xf32> to vector<32x256xf32>
    %35 = arith.mulf %32, %34 : vector<32x256xf32>
    %36 = arith.truncf %35 : vector<32x256xf32> to vector<32x256xbf16>
    %c160 = arith.constant 160 : index
    %c0_20 = arith.constant 0 : index
    %37 = vector.load %arg8[%c160, %c0_20] : memref<288x256xbf16, #tpu.memory_space<vmem>>, vector<32x256xbf16>
    tpu.vector_store %arg8[%c160, %c0_20], %36 {strides = array<i32>} : memref<288x256xbf16, #tpu.memory_space<vmem>>, vector<32x256xbf16>,
    %c241_i32 = arith.constant 241 : i32
    %38 = tpu.dynamic_rotate %5 by %c241_i32 dim 1 : vector<32x256xf32>, i32 -> vector<32x256xf32>
    %c6 = arith.constant 6 : index
    %c0_21 = arith.constant 0 : index
    %39 = vector.load %arg4[%c6, %c0_21] : memref<9x256xf32, #tpu.memory_space<vmem>>, vector<1x256xf32>
    %40 = vector.broadcast %39 : vector<1x256xf32> to vector<32x256xf32>
    %41 = arith.mulf %38, %40 : vector<32x256xf32>
    %42 = arith.truncf %41 : vector<32x256xf32> to vector<32x256xbf16>
    %c192 = arith.constant 192 : index
    %c0_22 = arith.constant 0 : index
    %43 = vector.load %arg8[%c192, %c0_22] : memref<288x256xbf16, #tpu.memory_space<vmem>>, vector<32x256xbf16>
    tpu.vector_store %arg8[%c192, %c0_22], %42 {strides = array<i32>} : memref<288x256xbf16, #tpu.memory_space<vmem>>, vector<32x256xbf16>,
    %c240_i32 = arith.constant 240 : i32
    %44 = tpu.dynamic_rotate %5 by %c240_i32 dim 1 : vector<32x256xf32>, i32 -> vector<32x256xf32>
    %c7 = arith.constant 7 : index
    %c0_23 = arith.constant 0 : index
    %45 = vector.load %arg4[%c7, %c0_23] : memref<9x256xf32, #tpu.memory_space<vmem>>, vector<1x256xf32>
    %46 = vector.broadcast %45 : vector<1x256xf32> to vector<32x256xf32>
    %47 = arith.mulf %44, %46 : vector<32x256xf32>
    %48 = arith.truncf %47 : vector<32x256xf32> to vector<32x256xbf16>
    %c224 = arith.constant 224 : index
    %c0_24 = arith.constant 0 : index
    %49 = vector.load %arg8[%c224, %c0_24] : memref<288x256xbf16, #tpu.memory_space<vmem>>, vector<32x256xbf16>
    tpu.vector_store %arg8[%c224, %c0_24], %48 {strides = array<i32>} : memref<288x256xbf16, #tpu.memory_space<vmem>>, vector<32x256xbf16>,
    %c239_i32 = arith.constant 239 : i32
    %50 = tpu.dynamic_rotate %5 by %c239_i32 dim 1 : vector<32x256xf32>, i32 -> vector<32x256xf32>
    %c8 = arith.constant 8 : index
    %c0_25 = arith.constant 0 : index
    %51 = vector.load %arg4[%c8, %c0_25] : memref<9x256xf32, #tpu.memory_space<vmem>>, vector<1x256xf32>
    %52 = vector.broadcast %51 : vector<1x256xf32> to vector<32x256xf32>
    %53 = arith.mulf %50, %52 : vector<32x256xf32>
    %54 = arith.truncf %53 : vector<32x256xf32> to vector<32x256xbf16>
    %c256 = arith.constant 256 : index
    %c0_26 = arith.constant 0 : index
    %55 = vector.load %arg8[%c256, %c0_26] : memref<288x256xbf16, #tpu.memory_space<vmem>>, vector<32x256xbf16>
    tpu.vector_store %arg8[%c256, %c0_26], %54 {strides = array<i32>} : memref<288x256xbf16, #tpu.memory_space<vmem>>, vector<32x256xbf16>,
    %c0_27 = arith.constant 0 : index
    %c0_28 = arith.constant 0 : index
    %c0_29 = arith.constant 0 : index
    %56 = vector.load %arg2[%c0_27, %c0_28, %c0_29] : memref<2x128x288xbf16, #tpu.memory_space<vmem>>, vector<1x128x288xbf16>
    %57 = vector.shape_cast %56 : vector<1x128x288xbf16> to vector<128x288xbf16>
    %c0_30 = arith.constant 0 : index
    %c0_31 = arith.constant 0 : index
    %58 = vector.load %arg8[%c0_30, %c0_31] : memref<288x256xbf16, #tpu.memory_space<vmem>>, vector<288x256xbf16>
    %cst_32 = arith.constant dense<0.000000e+00> : vector<128x256xf32>
    %59 = tpu.matmul %57, %58, %cst_32 {dimension_numbers = #tpu.dot_dimension_numbers<[1], [0], [0], [1], [0, 0, 1, 1], [], []>} : vector<128x288xbf16>, vector<288x256xbf16>, vector<128x256xf32> -> vector<128x256xf32>
    %c0_33 = arith.constant 0 : index
    %c0_34 = arith.constant 0 : index
    %c0_35 = arith.constant 0 : index
    %60 = vector.load %arg3[%c0_33, %c0_34, %c0_35] : memref<2x128x1xf32, #tpu.memory_space<vmem>>, vector<1x128x1xf32>
    %61 = vector.shape_cast %60 : vector<1x128x1xf32> to vector<128x1xf32>
    %62 = vector.broadcast %61 : vector<128x1xf32> to vector<128x256xf32>
    %63 = arith.addf %59, %62 : vector<128x256xf32>
    %c0_36 = arith.constant 0 : index
    %c0_37 = arith.constant 0 : index
    %64 = vector.load %arg9[%c0_36, %c0_37] : memref<128x256xf32, #tpu.memory_space<vmem>>, vector<128x256xf32>
    tpu.vector_store %arg9[%c0_36, %c0_37], %63 {strides = array<i32>} : memref<128x256xf32, #tpu.memory_space<vmem>>, vector<128x256xf32>,
    %c0_38 = arith.constant 0 : index
    %c0_39 = arith.constant 0 : index
    %65 = vector.load %arg9[%c0_38, %c0_39] : memref<128x256xf32, #tpu.memory_space<vmem>>, vector<32x256xf32>
    %66 = arith.negf %65 : vector<32x256xf32>
    %67 = math.exp %66 : vector<32x256xf32>
    %cst_40 = arith.constant 1.000000e+00 : f32
    %68 = vector.broadcast %cst_40 : f32 to vector<32x256xf32>
    %69 = arith.addf %68, %67 : vector<32x256xf32>
    %70 = arith.divf %68, %69 : vector<32x256xf32>
    %c64_41 = arith.constant 64 : index
    %c0_42 = arith.constant 0 : index
    %71 = vector.load %arg9[%c64_41, %c0_42] : memref<128x256xf32, #tpu.memory_space<vmem>>, vector<32x256xf32>
    %72 = arith.negf %71 : vector<32x256xf32>
    %73 = math.exp %72 : vector<32x256xf32>
    %cst_43 = arith.constant 1.000000e+00 : f32
    %74 = vector.broadcast %cst_43 : f32 to vector<32x256xf32>
    %75 = arith.addf %74, %73 : vector<32x256xf32>
    %76 = arith.divf %74, %75 : vector<32x256xf32>
    %c96_44 = arith.constant 96 : index
    %c0_45 = arith.constant 0 : index
    %77 = vector.load %arg9[%c96_44, %c0_45] : memref<128x256xf32, #tpu.memory_space<vmem>>, vector<32x256xf32>
    %78 = math.tanh %77 : vector<32x256xf32>
    %79 = arith.mulf %70, %78 : vector<32x256xf32>
    %80 = math.tanh %79 : vector<32x256xf32>
    %81 = arith.mulf %76, %80 : vector<32x256xf32>
    %c0_46 = arith.constant 0 : index
    %c0_47 = arith.constant 0 : index
    %c0_48 = arith.constant 0 : index
    %c0_49 = arith.constant 0 : index
    %82 = vector.load %arg5[%c0_46, %c0_47, %c0_48, %c0_49] : memref<2x1x32x256xf32, #tpu.memory_space<vmem>>, vector<1x1x32x256xf32>
    %83 = vector.shape_cast %82 : vector<1x1x32x256xf32> to vector<32x256xf32>
    %84 = vector.shape_cast %81 : vector<32x256xf32> to vector<1x1x32x256xf32>
    tpu.vector_store %arg5[%c0_46, %c0_47, %c0_48, %c0_49], %84 {strides = array<i32>} : memref<2x1x32x256xf32, #tpu.memory_space<vmem>>, vector<1x1x32x256xf32>,
    %c0_50 = arith.constant 0 : index
    %c0_51 = arith.constant 0 : index
    %c0_52 = arith.constant 0 : index
    %c0_53 = arith.constant 0 : index
    %85 = vector.load %arg6[%c0_50, %c0_51, %c0_52, %c0_53] : memref<2x1x32x256xf32, #tpu.memory_space<vmem>>, vector<1x1x32x256xf32>
    %86 = vector.shape_cast %85 : vector<1x1x32x256xf32> to vector<32x256xf32>
    %87 = vector.shape_cast %79 : vector<32x256xf32> to vector<1x1x32x256xf32>
    tpu.vector_store %arg6[%c0_50, %c0_51, %c0_52, %c0_53], %87 {strides = array<i32>} : memref<2x1x32x256xf32, #tpu.memory_space<vmem>>, vector<1x1x32x256xf32>,
    %c0_54 = arith.constant 0 : index
    %c0_55 = arith.constant 0 : index
    %88 = vector.load %arg7[%c0_54, %c0_55] : memref<32x256xf32, #tpu.memory_space<vmem>>, vector<32x256xf32>
    tpu.vector_store %arg7[%c0_54, %c0_55], %81 {strides = array<i32>} : memref<32x256xf32, #tpu.memory_space<vmem>>, vector<32x256xf32>,
    %c0_56 = arith.constant 0 : index
    %c0_57 = arith.constant 0 : index
    %89 = vector.load %arg7[%c0_56, %c0_57] : memref<32x256xf32, #tpu.memory_space<vmem>>, vector<32x256xf32>
    %c17_i32_58 = arith.constant 17 : i32
    %90 = tpu.dynamic_rotate %89 by %c17_i32_58 dim 1 : vector<32x256xf32>, i32 -> vector<32x256xf32>
    %c0_59 = arith.constant 0 : index
    %c0_60 = arith.constant 0 : index
    %91 = vector.load %arg4[%c0_59, %c0_60] : memref<9x256xf32, #tpu.memory_space<vmem>>, vector<1x256xf32>
    %92 = vector.broadcast %91 : vector<1x256xf32> to vector<32x256xf32>
    %93 = arith.mulf %90, %92 : vector<32x256xf32>
    %94 = arith.truncf %93 : vector<32x256xf32> to vector<32x256xbf16>
    %c0_61 = arith.constant 0 : index
    %c0_62 = arith.constant 0 : index
    %95 = vector.load %arg8[%c0_61, %c0_62] : memref<288x256xbf16, #tpu.memory_space<vmem>>, vector<32x256xbf16>
    tpu.vector_store %arg8[%c0_61, %c0_62], %94 {strides = array<i32>} : memref<288x256xbf16, #tpu.memory_space<vmem>>, vector<32x256xbf16>,
    %c16_i32_63 = arith.constant 16 : i32
    %96 = tpu.dynamic_rotate %89 by %c16_i32_63 dim 1 : vector<32x256xf32>, i32 -> vector<32x256xf32>
    %c1_64 = arith.constant 1 : index
    %c0_65 = arith.constant 0 : index
    %97 = vector.load %arg4[%c1_64, %c0_65] : memref<9x256xf32, #tpu.memory_space<vmem>>, vector<1x256xf32>
    %98 = vector.broadcast %97 : vector<1x256xf32> to vector<32x256xf32>
    %99 = arith.mulf %96, %98 : vector<32x256xf32>
    %100 = arith.truncf %99 : vector<32x256xf32> to vector<32x256xbf16>
    %c32_66 = arith.constant 32 : index
    %c0_67 = arith.constant 0 : index
    %101 = vector.load %arg8[%c32_66, %c0_67] : memref<288x256xbf16, #tpu.memory_space<vmem>>, vector<32x256xbf16>
    tpu.vector_store %arg8[%c32_66, %c0_67], %100 {strides = array<i32>} : memref<288x256xbf16, #tpu.memory_space<vmem>>, vector<32x256xbf16>,
    %c15_i32_68 = arith.constant 15 : i32
    %102 = tpu.dynamic_rotate %89 by %c15_i32_68 dim 1 : vector<32x256xf32>, i32 -> vector<32x256xf32>
    %c2_69 = arith.constant 2 : index
    %c0_70 = arith.constant 0 : index
    %103 = vector.load %arg4[%c2_69, %c0_70] : memref<9x256xf32, #tpu.memory_space<vmem>>, vector<1x256xf32>
    %104 = vector.broadcast %103 : vector<1x256xf32> to vector<32x256xf32>
    %105 = arith.mulf %102, %104 : vector<32x256xf32>
    %106 = arith.truncf %105 : vector<32x256xf32> to vector<32x256xbf16>
    %c64_71 = arith.constant 64 : index
    %c0_72 = arith.constant 0 : index
    %107 = vector.load %arg8[%c64_71, %c0_72] : memref<288x256xbf16, #tpu.memory_space<vmem>>, vector<32x256xbf16>
    tpu.vector_store %arg8[%c64_71, %c0_72], %106 {strides = array<i32>} : memref<288x256xbf16, #tpu.memory_space<vmem>>, vector<32x256xbf16>,
    %c1_i32_73 = arith.constant 1 : i32
    %108 = tpu.dynamic_rotate %89 by %c1_i32_73 dim 1 : vector<32x256xf32>, i32 -> vector<32x256xf32>
    %c3_74 = arith.constant 3 : index
    %c0_75 = arith.constant 0 : index
    %109 = vector.load %arg4[%c3_74, %c0_75] : memref<9x256xf32, #tpu.memory_space<vmem>>, vector<1x256xf32>
    %110 = vector.broadcast %109 : vector<1x256xf32> to vector<32x256xf32>
    %111 = arith.mulf %108, %110 : vector<32x256xf32>
    %112 = arith.truncf %111 : vector<32x256xf32> to vector<32x256xbf16>
    %c96_76 = arith.constant 96 : index
    %c0_77 = arith.constant 0 : index
    %113 = vector.load %arg8[%c96_76, %c0_77] : memref<288x256xbf16, #tpu.memory_space<vmem>>, vector<32x256xbf16>
    tpu.vector_store %arg8[%c96_76, %c0_77], %112 {strides = array<i32>} : memref<288x256xbf16, #tpu.memory_space<vmem>>, vector<32x256xbf16>,
    %114 = arith.truncf %89 : vector<32x256xf32> to vector<32x256xbf16>
    %c128_78 = arith.constant 128 : index
    %c0_79 = arith.constant 0 : index
    %115 = vector.load %arg8[%c128_78, %c0_79] : memref<288x256xbf16, #tpu.memory_space<vmem>>, vector<32x256xbf16>
    tpu.vector_store %arg8[%c128_78, %c0_79], %114 {strides = array<i32>} : memref<288x256xbf16, #tpu.memory_space<vmem>>, vector<32x256xbf16>,
    %c255_i32_80 = arith.constant 255 : i32
    %116 = tpu.dynamic_rotate %89 by %c255_i32_80 dim 1 : vector<32x256xf32>, i32 -> vector<32x256xf32>
    %c5_81 = arith.constant 5 : index
    %c0_82 = arith.constant 0 : index
    %117 = vector.load %arg4[%c5_81, %c0_82] : memref<9x256xf32, #tpu.memory_space<vmem>>, vector<1x256xf32>
    %118 = vector.broadcast %117 : vector<1x256xf32> to vector<32x256xf32>
    %119 = arith.mulf %116, %118 : vector<32x256xf32>
    %120 = arith.truncf %119 : vector<32x256xf32> to vector<32x256xbf16>
    %c160_83 = arith.constant 160 : index
    %c0_84 = arith.constant 0 : index
    %121 = vector.load %arg8[%c160_83, %c0_84] : memref<288x256xbf16, #tpu.memory_space<vmem>>, vector<32x256xbf16>
    tpu.vector_store %arg8[%c160_83, %c0_84], %120 {strides = array<i32>} : memref<288x256xbf16, #tpu.memory_space<vmem>>, vector<32x256xbf16>,
    %c241_i32_85 = arith.constant 241 : i32
    %122 = tpu.dynamic_rotate %89 by %c241_i32_85 dim 1 : vector<32x256xf32>, i32 -> vector<32x256xf32>
    %c6_86 = arith.constant 6 : index
    %c0_87 = arith.constant 0 : index
    %123 = vector.load %arg4[%c6_86, %c0_87] : memref<9x256xf32, #tpu.memory_space<vmem>>, vector<1x256xf32>
    %124 = vector.broadcast %123 : vector<1x256xf32> to vector<32x256xf32>
    %125 = arith.mulf %122, %124 : vector<32x256xf32>
    %126 = arith.truncf %125 : vector<32x256xf32> to vector<32x256xbf16>
    %c192_88 = arith.constant 192 : index
    %c0_89 = arith.constant 0 : index
    %127 = vector.load %arg8[%c192_88, %c0_89] : memref<288x256xbf16, #tpu.memory_space<vmem>>, vector<32x256xbf16>
    tpu.vector_store %arg8[%c192_88, %c0_89], %126 {strides = array<i32>} : memref<288x256xbf16, #tpu.memory_space<vmem>>, vector<32x256xbf16>,
    %c240_i32_90 = arith.constant 240 : i32
    %128 = tpu.dynamic_rotate %89 by %c240_i32_90 dim 1 : vector<32x256xf32>, i32 -> vector<32x256xf32>
    %c7_91 = arith.constant 7 : index
    %c0_92 = arith.constant 0 : index
    %129 = vector.load %arg4[%c7_91, %c0_92] : memref<9x256xf32, #tpu.memory_space<vmem>>, vector<1x256xf32>
    %130 = vector.broadcast %129 : vector<1x256xf32> to vector<32x256xf32>
    %131 = arith.mulf %128, %130 : vector<32x256xf32>
    %132 = arith.truncf %131 : vector<32x256xf32> to vector<32x256xbf16>
    %c224_93 = arith.constant 224 : index
    %c0_94 = arith.constant 0 : index
    %133 = vector.load %arg8[%c224_93, %c0_94] : memref<288x256xbf16, #tpu.memory_space<vmem>>, vector<32x256xbf16>
    tpu.vector_store %arg8[%c224_93, %c0_94], %132 {strides = array<i32>} : memref<288x256xbf16, #tpu.memory_space<vmem>>, vector<32x256xbf16>,
    %c239_i32_95 = arith.constant 239 : i32
    %134 = tpu.dynamic_rotate %89 by %c239_i32_95 dim 1 : vector<32x256xf32>, i32 -> vector<32x256xf32>
    %c8_96 = arith.constant 8 : index
    %c0_97 = arith.constant 0 : index
    %135 = vector.load %arg4[%c8_96, %c0_97] : memref<9x256xf32, #tpu.memory_space<vmem>>, vector<1x256xf32>
    %136 = vector.broadcast %135 : vector<1x256xf32> to vector<32x256xf32>
    %137 = arith.mulf %134, %136 : vector<32x256xf32>
    %138 = arith.truncf %137 : vector<32x256xf32> to vector<32x256xbf16>
    %c256_98 = arith.constant 256 : index
    %c0_99 = arith.constant 0 : index
    %139 = vector.load %arg8[%c256_98, %c0_99] : memref<288x256xbf16, #tpu.memory_space<vmem>>, vector<32x256xbf16>
    tpu.vector_store %arg8[%c256_98, %c0_99], %138 {strides = array<i32>} : memref<288x256xbf16, #tpu.memory_space<vmem>>, vector<32x256xbf16>,
    %c1_100 = arith.constant 1 : index
    %c0_101 = arith.constant 0 : index
    %c0_102 = arith.constant 0 : index
    %140 = vector.load %arg2[%c1_100, %c0_101, %c0_102] : memref<2x128x288xbf16, #tpu.memory_space<vmem>>, vector<1x128x288xbf16>
    %141 = vector.shape_cast %140 : vector<1x128x288xbf16> to vector<128x288xbf16>
    %c0_103 = arith.constant 0 : index
    %c0_104 = arith.constant 0 : index
    %142 = vector.load %arg8[%c0_103, %c0_104] : memref<288x256xbf16, #tpu.memory_space<vmem>>, vector<288x256xbf16>
    %cst_105 = arith.constant dense<0.000000e+00> : vector<128x256xf32>
    %143 = tpu.matmul %141, %142, %cst_105 {dimension_numbers = #tpu.dot_dimension_numbers<[1], [0], [0], [1], [0, 0, 1, 1], [], []>} : vector<128x288xbf16>, vector<288x256xbf16>, vector<128x256xf32> -> vector<128x256xf32>
    %c1_106 = arith.constant 1 : index
    %c0_107 = arith.constant 0 : index
    %c0_108 = arith.constant 0 : index
    %144 = vector.load %arg3[%c1_106, %c0_107, %c0_108] : memref<2x128x1xf32, #tpu.memory_space<vmem>>, vector<1x128x1xf32>
    %145 = vector.shape_cast %144 : vector<1x128x1xf32> to vector<128x1xf32>
    %146 = vector.broadcast %145 : vector<128x1xf32> to vector<128x256xf32>
    %147 = arith.addf %143, %146 : vector<128x256xf32>
    %c0_109 = arith.constant 0 : index
    %c0_110 = arith.constant 0 : index
    %148 = vector.load %arg9[%c0_109, %c0_110] : memref<128x256xf32, #tpu.memory_space<vmem>>, vector<128x256xf32>
    tpu.vector_store %arg9[%c0_109, %c0_110], %147 {strides = array<i32>} : memref<128x256xf32, #tpu.memory_space<vmem>>, vector<128x256xf32>,
    %c0_111 = arith.constant 0 : index
    %c0_112 = arith.constant 0 : index
    %149 = vector.load %arg9[%c0_111, %c0_112] : memref<128x256xf32, #tpu.memory_space<vmem>>, vector<32x256xf32>
    %150 = arith.negf %149 : vector<32x256xf32>
    %151 = math.exp %150 : vector<32x256xf32>
    %cst_113 = arith.constant 1.000000e+00 : f32
    %152 = vector.broadcast %cst_113 : f32 to vector<32x256xf32>
    %153 = arith.addf %152, %151 : vector<32x256xf32>
    %154 = arith.divf %152, %153 : vector<32x256xf32>
    %c64_114 = arith.constant 64 : index
    %c0_115 = arith.constant 0 : index
    %155 = vector.load %arg9[%c64_114, %c0_115] : memref<128x256xf32, #tpu.memory_space<vmem>>, vector<32x256xf32>
    %156 = arith.negf %155 : vector<32x256xf32>
    %157 = math.exp %156 : vector<32x256xf32>
    %cst_116 = arith.constant 1.000000e+00 : f32
    %158 = vector.broadcast %cst_116 : f32 to vector<32x256xf32>
    %159 = arith.addf %158, %157 : vector<32x256xf32>
    %160 = arith.divf %158, %159 : vector<32x256xf32>
    %c96_117 = arith.constant 96 : index
    %c0_118 = arith.constant 0 : index
    %161 = vector.load %arg9[%c96_117, %c0_118] : memref<128x256xf32, #tpu.memory_space<vmem>>, vector<32x256xf32>
    %162 = math.tanh %161 : vector<32x256xf32>
    %163 = arith.mulf %154, %162 : vector<32x256xf32>
    %164 = math.tanh %163 : vector<32x256xf32>
    %165 = arith.mulf %160, %164 : vector<32x256xf32>
    %c1_119 = arith.constant 1 : index
    %c0_120 = arith.constant 0 : index
    %c0_121 = arith.constant 0 : index
    %c0_122 = arith.constant 0 : index
    %166 = vector.load %arg5[%c1_119, %c0_120, %c0_121, %c0_122] : memref<2x1x32x256xf32, #tpu.memory_space<vmem>>, vector<1x1x32x256xf32>
    %167 = vector.shape_cast %166 : vector<1x1x32x256xf32> to vector<32x256xf32>
    %168 = vector.shape_cast %165 : vector<32x256xf32> to vector<1x1x32x256xf32>
    tpu.vector_store %arg5[%c1_119, %c0_120, %c0_121, %c0_122], %168 {strides = array<i32>} : memref<2x1x32x256xf32, #tpu.memory_space<vmem>>, vector<1x1x32x256xf32>,
    %c1_123 = arith.constant 1 : index
    %c0_124 = arith.constant 0 : index
    %c0_125 = arith.constant 0 : index
    %c0_126 = arith.constant 0 : index
    %169 = vector.load %arg6[%c1_123, %c0_124, %c0_125, %c0_126] : memref<2x1x32x256xf32, #tpu.memory_space<vmem>>, vector<1x1x32x256xf32>
    %170 = vector.shape_cast %169 : vector<1x1x32x256xf32> to vector<32x256xf32>
    %171 = vector.shape_cast %163 : vector<32x256xf32> to vector<1x1x32x256xf32>
    tpu.vector_store %arg6[%c1_123, %c0_124, %c0_125, %c0_126], %171 {strides = array<i32>} : memref<2x1x32x256xf32, #tpu.memory_space<vmem>>, vector<1x1x32x256xf32>,
    return
  }
  func.func @transform_0(%arg0: i32) -> (i32, i32, i32) {
    %c0_i32 = arith.constant 0 : i32
    %c0_i32_0 = arith.constant 0 : i32
    %c0_i32_1 = arith.constant 0 : i32
    return %arg0, %c0_i32, %c0_i32_0 : i32, i32, i32
  }
  func.func @transform_1(%arg0: i32) -> (i32, i32, i32) {
    %c0_i32 = arith.constant 0 : i32
    %c0_i32_0 = arith.constant 0 : i32
    %c0_i32_1 = arith.constant 0 : i32
    %c0_i32_2 = arith.constant 0 : i32
    return %c0_i32, %c0_i32_0, %c0_i32_1 : i32, i32, i32
  }
  func.func @transform_2(%arg0: i32) -> (i32, i32, i32) {
    %c0_i32 = arith.constant 0 : i32
    %c0_i32_0 = arith.constant 0 : i32
    %c0_i32_1 = arith.constant 0 : i32
    %c0_i32_2 = arith.constant 0 : i32
    return %c0_i32, %c0_i32_0, %c0_i32_1 : i32, i32, i32
  }
  func.func @transform_3(%arg0: i32) -> (i32, i32) {
    %c0_i32 = arith.constant 0 : i32
    %c0_i32_0 = arith.constant 0 : i32
    %c0_i32_1 = arith.constant 0 : i32
    return %c0_i32, %c0_i32_0 : i32, i32
  }
  func.func @transform_4(%arg0: i32) -> (i32, i32, i32, i32) {
    %c0_i32 = arith.constant 0 : i32
    %c0_i32_0 = arith.constant 0 : i32
    %c0_i32_1 = arith.constant 0 : i32
    %c0_i32_2 = arith.constant 0 : i32
    return %c0_i32, %arg0, %c0_i32_0, %c0_i32_1 : i32, i32, i32, i32
  }
  func.func @transform_5(%arg0: i32) -> (i32, i32, i32, i32) {
    %c0_i32 = arith.constant 0 : i32
    %c0_i32_0 = arith.constant 0 : i32
    %c0_i32_1 = arith.constant 0 : i32
    %c0_i32_2 = arith.constant 0 : i32
    return %c0_i32, %arg0, %c0_i32_0, %c0_i32_1 : i32, i32, i32, i32
  }
}

</mosaic_0001>

<llo_original>
// kernel: tpu_custom_call.1
$region0: #{tpu_custom_call.1}
  #allocation0 [shape = 'u32[]', space=smem, size = 0x4, offset = 0x4, fixed_abs, tag = 'smem constant byte address 0x4 - core index']
  #allocation1 [shape = 'u32[144,128]{1,0:T(1,128)}', space=vmem, size = 0x12000, scoped, tag = 'internal scratch']
  #allocation2 [shape = 'f32[32,256]{1,0:T(8,128)}', space=vmem, size = 0x8000, scoped, tag = 'scratch operand']
  #allocation3 [shape = 'bf16[288,256]{1,0:T(16,128)(2,1)}', space=vmem, size = 0x24000, scoped, tag = 'scratch operand']
  #allocation4 [shape = 'f32[128,256]{1,0:T(8,128)}', space=vmem, size = 0x20000, scoped, tag = 'scratch operand']
  #allocation9 [shape = 's32[]', space=sflag, size = 0x4, offset = 0, fixed_abs, tag = 'sflag constant byte address 0x0 - dummy sync flag']
  #allocation11 [shape = 's32[]', space=sflag, size = 0x4, offset = 0, fixed_abs, tag = 'sflag constant byte address 0x0 - dummy sync flag']
  %s0 = inlined_call_operand.vmem [shape: f32[2,4,256], index: 0, kind: input, shape index: {}]
  %s1 = inlined_call_operand.vmem [shape: bf16[2,128,288], index: 1, kind: input, shape index: {}]
  %s2 = inlined_call_operand.vmem [shape: f32[2,128,1], index: 2, kind: input, shape index: {}]
  %s3 = inlined_call_operand.vmem [shape: f32[9,256], index: 3, kind: input, shape index: {}]
  %s4 = inlined_call_operand.hbm [shape: f32[2,2,32,256], index: 4, kind: output, shape index: {0}]
  %s5 = inlined_call_operand.hbm [shape: f32[2,2,32,256], index: 5, kind: output, shape index: {1}]
  %6 = xla_tuple %s4, %s5
  %s7 = sld [smem:[#allocation0]]
  $region57: #{tpu_custom_call.1} parent=0
    _
  %s9 = ssub.s32 1, %s7
  %s10 = scalar_select 0, %s9, %s7
  $region1: #{tpu_custom_call.1} parent=0
    #allocation5 [shape = 'u8[131072]{0}', space=vmem, size = 0x20000, scoped, tag = 'output window, operand 0']
    #allocation6 [shape = 's32[2]{0}', space=sflag, size = 0x8, scoped, tag = 'scoped memory for tpu_custom_call.1']
    #allocation7 [shape = 'u8[131072]{0}', space=vmem, size = 0x20000, scoped, tag = 'output window, operand 1']
    #allocation8 [shape = 's32[2]{0}', space=sflag, size = 0x8, scoped, tag = 'scoped memory for tpu_custom_call.1']
    %11 = vsyncpa [#allocation6], 0
    %s12 = scalar_lea.sflag [#allocation6], 1
    %13 = vsyncpa %s12, 0
    %14 = vsyncpa [#allocation8], 0
    %s15 = scalar_lea.sflag [#allocation8], 1
    %16 = vsyncpa %s15, 0
    loop: start=0, step=1, limit=4
    $region2: #{tpu_custom_call.1} parent=1 // loop_pre_header
      _
    $region3: #{tpu_custom_call.1} parent=1 // loop_header
      %s18 = sphi 0, %s22
      %p19 = scmp.ge.s32.totalorder %s18, 4
      %s28 = sphi 0, %s30
      %s31 = sphi 0, %s28
      %s32 = sphi 0, %s31
      %s48 = sphi 0, %s32
      %s52 = sphi 0, %s52
      %s54 = sphi 0, %s52
      %s55 = sphi 0, %s54
      %s69 = sphi 0, %s55
      %s73 = sphi 0, %s73
      %s75 = sphi 0, %s73
      %s76 = sphi 0, %s75
      %s90 = sphi 0, %s76
      %s94 = sphi 0, %s94
      %s96 = sphi 0, %s94
      %s97 = sphi 0, %s96
      %s111 = sphi 0, %s97
      %s117 = sphi 0, %s119
      %s120 = sphi 0, %s117
      %s121 = sphi 0, %s120
      %s137 = sphi 0, %s121
      %s143 = sphi 0, %s145
      %s146 = sphi 0, %s143
      %s147 = sphi 0, %s146
      %s163 = sphi 0, %s147
    $region4: #{tpu_custom_call.1} parent=1 // loop_header_branch
      %21 = sbr.rel (%p19) target = $region8
    $region5: #{tpu_custom_call.1} parent=1 // loop_body
      %s23 = ssub.s32 %s18, 1
      %s24 = ssub.s32 %s18, 2
      %s25 = sadd.s32 %s18, 1
      %s26 = ssub.s32 %s18, %s25
      %p27 = scmp.eq.s32.totalorder %s26, 0
      %s29 = sadd.s32 %s28, 1
      %s30 = scalar_select %p27, %s28, %s29
      %p33 = pneg %p27
      %p34 = scmp.eq.s32.totalorder %s18, 1
      %p35 = por %p33, %p34
      %p36 = scmp.ne.s32.totalorder %s28, %s31
      %p37 = scmp.eq.s32.totalorder %s18, 0
      %p38 = por %p36, %p37
      %p39 = scmp.ne.s32.totalorder %s28, %s31
      %p40 = scmp.eq.s32.totalorder %s23, 1
      %p41 = por %p39, %p40
      %p42 = scmp.ne.s32.totalorder %s31, %s32
      %p43 = scmp.eq.s32.totalorder %s23, 0
      %p44 = por %p42, %p43
      %p45 = scmp.ne.s32.totalorder %s31, %s32
      %p46 = scmp.eq.s32.totalorder %s24, 1
      %p47 = por %p45, %p46
      %p49 = scmp.ne.s32.totalorder %s32, %s48
      %p50 = scmp.eq.s32.totalorder %s24, 0
      %p51 = por %p49, %p50
      %s53 = sadd.s32 %s52, 1
      %p56 = scmp.eq.s32.totalorder %s18, 1
      %p57 = scmp.ne.s32.totalorder %s52, %s54
      %p58 = scmp.eq.s32.totalorder %s18, 0
      %p59 = por %p57, %p58
      %p60 = scmp.ne.s32.totalorder %s52, %s54
      %p61 = scmp.eq.s32.totalorder %s23, 1
      %p62 = por %p60, %p61
      %p63 = scmp.ne.s32.totalorder %s54, %s55
      %p64 = scmp.eq.s32.totalorder %s23, 0
      %p65 = por %p63, %p64
      %p66 = scmp.ne.s32.totalorder %s54, %s55
      %p67 = scmp.eq.s32.totalorder %s24, 1
      %p68 = por %p66, %p67
      %p70 = scmp.ne.s32.totalorder %s55, %s69
      %p71 = scmp.eq.s32.totalorder %s24, 0
      %p72 = por %p70, %p71
      %s74 = sadd.s32 %s73, 1
      %p77 = scmp.eq.s32.totalorder %s18, 1
      %p78 = scmp.ne.s32.totalorder %s73, %s75
      %p79 = scmp.eq.s32.totalorder %s18, 0
      %p80 = por %p78, %p79
      %p81 = scmp.ne.s32.totalorder %s73, %s75
      %p82 = scmp.eq.s32.totalorder %s23, 1
      %p83 = por %p81, %p82
      %p84 = scmp.ne.s32.totalorder %s75, %s76
      %p85 = scmp.eq.s32.totalorder %s23, 0
      %p86 = por %p84, %p85
      %p87 = scmp.ne.s32.totalorder %s75, %s76
      %p88 = scmp.eq.s32.totalorder %s24, 1
      %p89 = por %p87, %p88
      %p91 = scmp.ne.s32.totalorder %s76, %s90
      %p92 = scmp.eq.s32.totalorder %s24, 0
      %p93 = por %p91, %p92
      %s95 = sadd.s32 %s94, 1
      %p98 = scmp.eq.s32.totalorder %s18, 1
      %p99 = scmp.ne.s32.totalorder %s94, %s96
      %p100 = scmp.eq.s32.totalorder %s18, 0
      %p101 = por %p99, %p100
      %p102 = scmp.ne.s32.totalorder %s94, %s96
      %p103 = scmp.eq.s32.totalorder %s23, 1
      %p104 = por %p102, %p103
      %p105 = scmp.ne.s32.totalorder %s96, %s97
      %p106 = scmp.eq.s32.totalorder %s23, 0
      %p107 = por %p105, %p106
      %p108 = scmp.ne.s32.totalorder %s96, %s97
      %p109 = scmp.eq.s32.totalorder %s24, 1
      %p110 = por %p108, %p109
      %p112 = scmp.ne.s32.totalorder %s97, %s111
      %p113 = scmp.eq.s32.totalorder %s24, 0
      %p114 = por %p112, %p113
      %s115 = ssub.s32 %s18, %s25
      %p116 = scmp.eq.s32.totalorder %s115, 0
      %s118 = sadd.s32 %s117, 1
      %s119 = scalar_select %p116, %s117, %s118
      %p122 = pneg %p116
      %p123 = scmp.eq.s32.totalorder %s18, 1
      %p124 = por %p122, %p123
      %p125 = scmp.ne.s32.totalorder %s117, %s120
      %p126 = scmp.eq.s32.totalorder %s18, 0
      %p127 = por %p125, %p126
      %p128 = scmp.ne.s32.totalorder %s117, %s120
      %p129 = scmp.eq.s32.totalorder %s23, 1
      %p130 = por %p128, %p129
      %p131 = scmp.ne.s32.totalorder %s120, %s121
      %p132 = scmp.eq.s32.totalorder %s23, 0
      %p133 = por %p131, %p132
      %p134 = scmp.ne.s32.totalorder %s120, %s121
      %p135 = scmp.eq.s32.totalorder %s24, 1
      %p136 = por %p134, %p135
      %p138 = scmp.ne.s32.totalorder %s121, %s137
      %p139 = scmp.eq.s32.totalorder %s24, 0
      %p140 = por %p138, %p139
      %s141 = ssub.s32 %s18, %s25
      %p142 = scmp.eq.s32.totalorder %s141, 0
      %s144 = sadd.s32 %s143, 1
      %s145 = scalar_select %p142, %s143, %s144
      %p148 = pneg %p142
      %p149 = scmp.eq.s32.totalorder %s18, 1
      %p150 = por %p148, %p149
      %p151 = scmp.ne.s32.totalorder %s143, %s146
      %p152 = scmp.eq.s32.totalorder %s18, 0
      %p153 = por %p151, %p152
      %p154 = scmp.ne.s32.totalorder %s143, %s146
      %p155 = scmp.eq.s32.totalorder %s23, 1
      %p156 = por %p154, %p155
      %p157 = scmp.ne.s32.totalorder %s146, %s147
      %p158 = scmp.eq.s32.totalorder %s23, 0
      %p159 = por %p157, %p158
      %p160 = scmp.ne.s32.totalorder %s146, %s147
      %p161 = scmp.eq.s32.totalorder %s24, 1
      %p162 = por %p160, %p161
      %p164 = scmp.ne.s32.totalorder %s147, %s163
      %p165 = scmp.eq.s32.totalorder %s24, 0
      %p166 = por %p164, %p165
      %p167 = scmp.le.s32.totalorder 1, %s18
      %p168 = scmp.lt.s32.totalorder %s18, 3
      %p169 = pnand %p167, %p168
      %p170 = pneg %p169
      // Predicated region
      $region9: #{tpu_custom_call.1} parent=5 // pred_check
        _
      $region10: #{tpu_custom_call.1} parent=5 // pred_check_branch
        %172 = sbr.rel (%p169) target = $region12
      $region11: #{tpu_custom_call.1} parent=5 // pred_region
        %s173 = ssub.s32 %s18, 1
        // Predicated region
        $region13: #{tpu_custom_call.1} parent=11 // pred_check
          %p174 = pneg %p65
        $region14: #{tpu_custom_call.1} parent=11 // pred_check_branch
          %176 = sbr.rel (%p174) target = $region16
        $region15: #{tpu_custom_call.1} parent=11 // pred_region
          _
        $region16: #{tpu_custom_call.1} parent=11 // pred_fallthru
          _
        // Predicated region
        $region17: #{tpu_custom_call.1} parent=11 // pred_check
          %p177 = pneg %p86
        $region18: #{tpu_custom_call.1} parent=11 // pred_check_branch
          %179 = sbr.rel (%p177) target = $region20
        $region19: #{tpu_custom_call.1} parent=11 // pred_region
          _
        $region20: #{tpu_custom_call.1} parent=11 // pred_fallthru
          _
        // Predicated region
        $region21: #{tpu_custom_call.1} parent=11 // pred_check
          %p180 = pneg %p107
        $region22: #{tpu_custom_call.1} parent=11 // pred_check_branch
          %182 = sbr.rel (%p180) target = $region24
        $region23: #{tpu_custom_call.1} parent=11 // pred_region
          _
        $region24: #{tpu_custom_call.1} parent=11 // pred_fallthru
          _
      $region12: #{tpu_custom_call.1} parent=5 // pred_fallthru
        _
      %p183 = scmp.lt.s32.totalorder %s18, 2
      // Predicated region
      $region25: #{tpu_custom_call.1} parent=5 // pred_check
        %p184 = pneg %p183
      $region26: #{tpu_custom_call.1} parent=5 // pred_check_branch
        %186 = sbr.rel (%p184) target = $region28
      $region27: #{tpu_custom_call.1} parent=5 // pred_region
        // Predicated region
        $region29: #{tpu_custom_call.1} parent=27 // pred_check
          %p187 = pneg %p38
        $region30: #{tpu_custom_call.1} parent=27 // pred_check_branch
          %189 = sbr.rel (%p187) target = $region32
        $region31: #{tpu_custom_call.1} parent=27 // pred_region
          %p190 = scmp.lt.s32.totalorder %s18, 1
          %s191 = scalar_select %p190, %s18, 1
          %s192 = smul.addr %s191, 2
          %s193 = smul.addr %s192, 4
          %s194 = scalar_lea.vmem %s0, %s193
        $region32: #{tpu_custom_call.1} parent=27 // pred_fallthru
          _
      $region28: #{tpu_custom_call.1} parent=5 // pred_fallthru
        _
      %p195 = scmp.le.s32.totalorder 1, %s18
      %p196 = scmp.lt.s32.totalorder %s18, 3
      %p197 = pnand %p195, %p196
      %p198 = pneg %p197
      // Predicated region
      $region33: #{tpu_custom_call.1} parent=5 // pred_check
        _
      $region34: #{tpu_custom_call.1} parent=5 // pred_check_branch
        %200 = sbr.rel (%p197) target = $region36
      $region35: #{tpu_custom_call.1} parent=5 // pred_region
        %s201 = ssub.s32 %s18, 1
        %p202 = scmp.lt.s32.totalorder %s23, 1
        %s203 = scalar_select %p202, %s23, 1
        %s204 = smul.addr %s203, 2
        %s205 = smul.addr %s204, 4
        %s206 = scalar_lea.vmem %s0, %s205
        %p207 = pneg %p44
        %p208 = pneg %p41
        %p209 = pneg %p65
        %p210 = pneg %p62
        %p211 = pneg %p86
        %p212 = pneg %p83
        %p213 = pneg %p107
        %p214 = pneg %p104
        %p215 = pneg %p133
        %p216 = pneg %p130
        %s217 = sand.u32 %s120, 1
        %s218 = scalar_lea.sflag [#allocation6], %s217
        %s219 = sand.u32 %s120, 1
        %s220 = smul.addr %s219, 128
        %s221 = scalar_lea.vmem [#allocation5], %s220
        %p222 = pneg %p159
        %p223 = pneg %p156
        %s224 = sand.u32 %s146, 1
        %s225 = scalar_lea.sflag [#allocation8], %s224
        %s226 = sand.u32 %s146, 1
        %s227 = smul.addr %s226, 128
        %s228 = scalar_lea.vmem [#allocation7], %s227
        %p229 = scmp.lt.s32.totalorder %s23, 1
        %s230 = scalar_select %p229, %s23, 1
        %s231 = smul.addr %s230, 2
        %s232 = smul.addr %s231, 4
        %s233 = scalar_lea.vmem %s0, %s232
        %235 = vst [vmem:[#allocation2] sm:$0xff] 0.0
        %236 = vst [vmem:[#allocation2 + $0x8] sm:$0xff] 0.0
        %237 = vst [vmem:[#allocation2 + $0x10] sm:$0xff] 0.0
        %238 = vst [vmem:[#allocation2 + $0x18] sm:$0xff] 0.0
        %239 = vst [vmem:[#allocation2 + $0x20] sm:$0xff] 0.0
        %240 = vst [vmem:[#allocation2 + $0x28] sm:$0xff] 0.0
        %241 = vst [vmem:[#allocation2 + $0x30] sm:$0xff] 0.0
        %242 = vst [vmem:[#allocation2 + $0x38] sm:$0xff] 0.0
        %v243 = vld [vmem:[%s233] sm:$0xff]
        %v245 = vcombine.high %v243, %v243
        %247 = vst [vmem:[#allocation2] sm:$0xf] %v243
        %248 = vst [vmem:[#allocation2 + $0x8] sm:$0xf] %v245
        %v249 = vld [vmem:[#allocation2] sm:$0xff]
        %v250 = vld [vmem:[#allocation2 + $0x8] sm:$0xff]
        %v251 = vld [vmem:[#allocation2 + $0x10] sm:$0xff]
        %v252 = vld [vmem:[#allocation2 + $0x18] sm:$0xff]
        %v253 = vld [vmem:[#allocation2 + $0x20] sm:$0xff]
        %v254 = vld [vmem:[#allocation2 + $0x28] sm:$0xff]
        %v255 = vld [vmem:[#allocation2 + $0x30] sm:$0xff]
        %v256 = vld [vmem:[#allocation2 + $0x38] sm:$0xff]
        %257 = vrot.lane.b32.xlu0 %v249, 17
        %v258 = vpop.permute.xlu0 %257
        %259 = vrot.lane.b32.xlu0 %v251, 17
        %v260 = vpop.permute.xlu0 %259
        %261 = vrot.lane.b32.xlu0 %v253, 17
        %v262 = vpop.permute.xlu0 %261
        %263 = vrot.lane.b32.xlu0 %v255, 17
        %v264 = vpop.permute.xlu0 %263
        %265 = vrot.lane.b32.xlu0 %v250, 17
        %v266 = vpop.permute.xlu0 %265
        %267 = vrot.lane.b32.xlu0 %v252, 17
        %v268 = vpop.permute.xlu0 %267
        %269 = vrot.lane.b32.xlu0 %v254, 17
        %v270 = vpop.permute.xlu0 %269
        %271 = vrot.lane.b32.xlu0 %v256, 17
        %v272 = vpop.permute.xlu0 %271
        %v273 = vlaneseq
        %v274 = vand.u32 %v273, 127
        %vm275 = vcmp.lt.s32.totalorder %v274, 17
        %v276 = vsel %vm275, %v258, %v266
        %v277 = vsel %vm275, %v260, %v268
        %v278 = vsel %vm275, %v262, %v270
        %v279 = vsel %vm275, %v264, %v272
        %v280 = vsel %vm275, %v266, %v258
        %v281 = vsel %vm275, %v268, %v260
        %v282 = vsel %vm275, %v270, %v262
        %v283 = vsel %vm275, %v272, %v264
        %v284 = vld [vmem:[%s3] ss:$8 sm:$0x3]
        %v286 = vlaneseq
        %v287 = vshrl.u32 %v286, 7
        %v288 = vsub.s32 0, %v287
        %v289 = vrot.slane %v284, %v288
        %v290 = vlaneseq
        %v291 = vshrl.u32 %v290, 7
        %v292 = vsub.s32 1, %v291
        %v293 = vrot.slane %v284, %v292
        %v296 = vmul.f32 %v280, %v289
        %v297 = vmul.f32 %v276, %v293
        %v298 = vmul.f32 %v281, %v289
        %v299 = vmul.f32 %v277, %v293
        %v300 = vmul.f32 %v282, %v289
        %v301 = vmul.f32 %v278, %v293
        %v302 = vmul.f32 %v283, %v289
        %v303 = vmul.f32 %v279, %v293
        %v304 = vpack.c.bf16 %v298, %v296
        %v305 = vpack.c.bf16 %v299, %v297
        %v306 = vpack.c.bf16 %v302, %v300
        %v307 = vpack.c.bf16 %v303, %v301
        %308 = vst [vmem:[#allocation3] sm:$0xff] %v304
        %309 = vst [vmem:[#allocation3 + $0x8] sm:$0xff] %v305
        %310 = vst [vmem:[#allocation3 + $0x10] sm:$0xff] %v306
        %311 = vst [vmem:[#allocation3 + $0x18] sm:$0xff] %v307
        %312 = vrot.lane.b32.xlu0 %v249, 16
        %v313 = vpop.permute.xlu0 %312
        %314 = vrot.lane.b32.xlu0 %v251, 16
        %v315 = vpop.permute.xlu0 %314
        %316 = vrot.lane.b32.xlu0 %v253, 16
        %v317 = vpop.permute.xlu0 %316
        %318 = vrot.lane.b32.xlu0 %v255, 16
        %v319 = vpop.permute.xlu0 %318
        %320 = vrot.lane.b32.xlu0 %v250, 16
        %v321 = vpop.permute.xlu0 %320
        %322 = vrot.lane.b32.xlu0 %v252, 16
        %v323 = vpop.permute.xlu0 %322
        %324 = vrot.lane.b32.xlu0 %v254, 16
        %v325 = vpop.permute.xlu0 %324
        %326 = vrot.lane.b32.xlu0 %v256, 16
        %v327 = vpop.permute.xlu0 %326
        %vm328 = vcmp.lt.s32.totalorder %v274, 16
        %v329 = vsel %vm328, %v313, %v321
        %v330 = vsel %vm328, %v315, %v323
        %v331 = vsel %vm328, %v317, %v325
        %v332 = vsel %vm328, %v319, %v327
        %v333 = vsel %vm328, %v321, %v313
        %v334 = vsel %vm328, %v323, %v315
        %v335 = vsel %vm328, %v325, %v317
        %v336 = vsel %vm328, %v327, %v319
        %s337 = scalar_lea.vmem %s3, 1
        %v338 = vld [vmem:[%s337] ss:$8 sm:$0x3]
        %v340 = vlaneseq
        %v341 = vshrl.u32 %v340, 7
        %v342 = vsub.s32 0, %v341
        %v343 = vrot.slane %v338, %v342
        %v344 = vlaneseq
        %v345 = vshrl.u32 %v344, 7
        %v346 = vsub.s32 1, %v345
        %v347 = vrot.slane %v338, %v346
        %v350 = vmul.f32 %v333, %v343
        %v351 = vmul.f32 %v329, %v347
        %v352 = vmul.f32 %v334, %v343
        %v353 = vmul.f32 %v330, %v347
        %v354 = vmul.f32 %v335, %v343
        %v355 = vmul.f32 %v331, %v347
        %v356 = vmul.f32 %v336, %v343
        %v357 = vmul.f32 %v332, %v347
        %v358 = vpack.c.bf16 %v352, %v350
        %v359 = vpack.c.bf16 %v353, %v351
        %v360 = vpack.c.bf16 %v356, %v354
        %v361 = vpack.c.bf16 %v357, %v355
        %362 = vst [vmem:[#allocation3 + $0x20] sm:$0xff] %v358
        %363 = vst [vmem:[#allocation3 + $0x28] sm:$0xff] %v359
        %364 = vst [vmem:[#allocation3 + $0x30] sm:$0xff] %v360
        %365 = vst [vmem:[#allocation3 + $0x38] sm:$0xff] %v361
        %366 = vrot.lane.b32.xlu0 %v249, 15
        %v367 = vpop.permute.xlu0 %366
        %368 = vrot.lane.b32.xlu0 %v251, 15
        %v369 = vpop.permute.xlu0 %368
        %370 = vrot.lane.b32.xlu0 %v253, 15
        %v371 = vpop.permute.xlu0 %370
        %372 = vrot.lane.b32.xlu0 %v255, 15
        %v373 = vpop.permute.xlu0 %372
        %374 = vrot.lane.b32.xlu0 %v250, 15
        %v375 = vpop.permute.xlu0 %374
        %376 = vrot.lane.b32.xlu0 %v252, 15
        %v377 = vpop.permute.xlu0 %376
        %378 = vrot.lane.b32.xlu0 %v254, 15
        %v379 = vpop.permute.xlu0 %378
        %380 = vrot.lane.b32.xlu0 %v256, 15
        %v381 = vpop.permute.xlu0 %380
        %vm382 = vcmp.lt.s32.totalorder %v274, 15
        %v383 = vsel %vm382, %v367, %v375
        %v384 = vsel %vm382, %v369, %v377
        %v385 = vsel %vm382, %v371, %v379
        %v386 = vsel %vm382, %v373, %v381
        %v387 = vsel %vm382, %v375, %v367
        %v388 = vsel %vm382, %v377, %v369
        %v389 = vsel %vm382, %v379, %v371
        %v390 = vsel %vm382, %v381, %v373
        %s391 = scalar_lea.vmem %s3, 2
        %v392 = vld [vmem:[%s391] ss:$8 sm:$0x3]
        %v394 = vlaneseq
        %v395 = vshrl.u32 %v394, 7
        %v396 = vsub.s32 0, %v395
        %v397 = vrot.slane %v392, %v396
        %v398 = vlaneseq
        %v399 = vshrl.u32 %v398, 7
        %v400 = vsub.s32 1, %v399
        %v401 = vrot.slane %v392, %v400
        %v404 = vmul.f32 %v387, %v397
        %v405 = vmul.f32 %v383, %v401
        %v406 = vmul.f32 %v388, %v397
        %v407 = vmul.f32 %v384, %v401
        %v408 = vmul.f32 %v389, %v397
        %v409 = vmul.f32 %v385, %v401
        %v410 = vmul.f32 %v390, %v397
        %v411 = vmul.f32 %v386, %v401
        %v412 = vpack.c.bf16 %v406, %v404
        %v413 = vpack.c.bf16 %v407, %v405
        %v414 = vpack.c.bf16 %v410, %v408
        %v415 = vpack.c.bf16 %v411, %v409
        %416 = vst [vmem:[#allocation3 + $0x40] sm:$0xff] %v412
        %417 = vst [vmem:[#allocation3 + $0x48] sm:$0xff] %v413
        %418 = vst [vmem:[#allocation3 + $0x50] sm:$0xff] %v414
        %419 = vst [vmem:[#allocation3 + $0x58] sm:$0xff] %v415
        %420 = vrot.lane.b32.xlu0 %v249, 1
        %v421 = vpop.permute.xlu0 %420
        %422 = vrot.lane.b32.xlu0 %v251, 1
        %v423 = vpop.permute.xlu0 %422
        %424 = vrot.lane.b32.xlu0 %v253, 1
        %v425 = vpop.permute.xlu0 %424
        %426 = vrot.lane.b32.xlu0 %v255, 1
        %v427 = vpop.permute.xlu0 %426
        %428 = vrot.lane.b32.xlu0 %v250, 1
        %v429 = vpop.permute.xlu0 %428
        %430 = vrot.lane.b32.xlu0 %v252, 1
        %v431 = vpop.permute.xlu0 %430
        %432 = vrot.lane.b32.xlu0 %v254, 1
        %v433 = vpop.permute.xlu0 %432
        %434 = vrot.lane.b32.xlu0 %v256, 1
        %v435 = vpop.permute.xlu0 %434
        %vm436 = vcmp.lt.s32.totalorder %v274, 1
        %v437 = vsel %vm436, %v421, %v429
        %v438 = vsel %vm436, %v423, %v431
        %v439 = vsel %vm436, %v425, %v433
        %v440 = vsel %vm436, %v427, %v435
        %v441 = vsel %vm436, %v429, %v421
        %v442 = vsel %vm436, %v431, %v423
        %v443 = vsel %vm436, %v433, %v425
        %v444 = vsel %vm436, %v435, %v427
        %s445 = scalar_lea.vmem %s3, 3
        %v446 = vld [vmem:[%s445] ss:$8 sm:$0x3]
        %v448 = vlaneseq
        %v449 = vshrl.u32 %v448, 7
        %v450 = vsub.s32 0, %v449
        %v451 = vrot.slane %v446, %v450
        %v452 = vlaneseq
        %v453 = vshrl.u32 %v452, 7
        %v454 = vsub.s32 1, %v453
        %v455 = vrot.slane %v446, %v454
        %v458 = vmul.f32 %v441, %v451
        %v459 = vmul.f32 %v437, %v455
        %v460 = vmul.f32 %v442, %v451
        %v461 = vmul.f32 %v438, %v455
        %v462 = vmul.f32 %v443, %v451
        %v463 = vmul.f32 %v439, %v455
        %v464 = vmul.f32 %v444, %v451
        %v465 = vmul.f32 %v440, %v455
        %v466 = vpack.c.bf16 %v460, %v458
        %v467 = vpack.c.bf16 %v461, %v459
        %v468 = vpack.c.bf16 %v464, %v462
        %v469 = vpack.c.bf16 %v465, %v463
        %470 = vst [vmem:[#allocation3 + $0x60] sm:$0xff] %v466
        %471 = vst [vmem:[#allocation3 + $0x68] sm:$0xff] %v467
        %472 = vst [vmem:[#allocation3 + $0x70] sm:$0xff] %v468
        %473 = vst [vmem:[#allocation3 + $0x78] sm:$0xff] %v469
        %v474 = vpack.c.bf16 %v251, %v249
        %v475 = vpack.c.bf16 %v252, %v250
        %v476 = vpack.c.bf16 %v255, %v253
        %v477 = vpack.c.bf16 %v256, %v254
        %478 = vst [vmem:[#allocation3 + $0x80] sm:$0xff] %v474
        %479 = vst [vmem:[#allocation3 + $0x88] sm:$0xff] %v475
        %480 = vst [vmem:[#allocation3 + $0x90] sm:$0xff] %v476
        %481 = vst [vmem:[#allocation3 + $0x98] sm:$0xff] %v477
        %482 = vrot.lane.b32.xlu0 %v249, 127
        %v483 = vpop.permute.xlu0 %482
        %484 = vrot.lane.b32.xlu0 %v251, 127
        %v485 = vpop.permute.xlu0 %484
        %486 = vrot.lane.b32.xlu0 %v253, 127
        %v487 = vpop.permute.xlu0 %486
        %488 = vrot.lane.b32.xlu0 %v255, 127
        %v489 = vpop.permute.xlu0 %488
        %490 = vrot.lane.b32.xlu0 %v250, 127
        %v491 = vpop.permute.xlu0 %490
        %492 = vrot.lane.b32.xlu0 %v252, 127
        %v493 = vpop.permute.xlu0 %492
        %494 = vrot.lane.b32.xlu0 %v254, 127
        %v495 = vpop.permute.xlu0 %494
        %496 = vrot.lane.b32.xlu0 %v256, 127
        %v497 = vpop.permute.xlu0 %496
        %vm498 = vcmp.lt.s32.totalorder %v274, 127
        %v499 = vsel %vm498, %v483, %v491
        %v500 = vsel %vm498, %v485, %v493
        %v501 = vsel %vm498, %v487, %v495
        %v502 = vsel %vm498, %v489, %v497
        %v503 = vsel %vm498, %v491, %v483
        %v504 = vsel %vm498, %v493, %v485
        %v505 = vsel %vm498, %v495, %v487
        %v506 = vsel %vm498, %v497, %v489
        %s507 = scalar_lea.vmem %s3, 5
        %v508 = vld [vmem:[%s507] ss:$8 sm:$0x3]
        %v510 = vlaneseq
        %v511 = vshrl.u32 %v510, 7
        %v512 = vsub.s32 0, %v511
        %v513 = vrot.slane %v508, %v512
        %v514 = vlaneseq
        %v515 = vshrl.u32 %v514, 7
        %v516 = vsub.s32 1, %v515
        %v517 = vrot.slane %v508, %v516
        %v520 = vmul.f32 %v499, %v513
        %v521 = vmul.f32 %v503, %v517
        %v522 = vmul.f32 %v500, %v513
        %v523 = vmul.f32 %v504, %v517
        %v524 = vmul.f32 %v501, %v513
        %v525 = vmul.f32 %v505, %v517
        %v526 = vmul.f32 %v502, %v513
        %v527 = vmul.f32 %v506, %v517
        %v528 = vpack.c.bf16 %v522, %v520
        %v529 = vpack.c.bf16 %v523, %v521
        %v530 = vpack.c.bf16 %v526, %v524
        %v531 = vpack.c.bf16 %v527, %v525
        %532 = vst [vmem:[#allocation3 + $0xa0] sm:$0xff] %v528
        %533 = vst [vmem:[#allocation3 + $0xa8] sm:$0xff] %v529
        %534 = vst [vmem:[#allocation3 + $0xb0] sm:$0xff] %v530
        %535 = vst [vmem:[#allocation3 + $0xb8] sm:$0xff] %v531
        %536 = vrot.lane.b32.xlu0 %v249, 113
        %v537 = vpop.permute.xlu0 %536
        %538 = vrot.lane.b32.xlu0 %v251, 113
        %v539 = vpop.permute.xlu0 %538
        %540 = vrot.lane.b32.xlu0 %v253, 113
        %v541 = vpop.permute.xlu0 %540
        %542 = vrot.lane.b32.xlu0 %v255, 113
        %v543 = vpop.permute.xlu0 %542
        %544 = vrot.lane.b32.xlu0 %v250, 113
        %v545 = vpop.permute.xlu0 %544
        %546 = vrot.lane.b32.xlu0 %v252, 113
        %v547 = vpop.permute.xlu0 %546
        %548 = vrot.lane.b32.xlu0 %v254, 113
        %v549 = vpop.permute.xlu0 %548
        %550 = vrot.lane.b32.xlu0 %v256, 113
        %v551 = vpop.permute.xlu0 %550
        %vm552 = vcmp.lt.s32.totalorder %v274, 113
        %v553 = vsel %vm552, %v537, %v545
        %v554 = vsel %vm552, %v539, %v547
        %v555 = vsel %vm552, %v541, %v549
        %v556 = vsel %vm552, %v543, %v551
        %v557 = vsel %vm552, %v545, %v537
        %v558 = vsel %vm552, %v547, %v539
        %v559 = vsel %vm552, %v549, %v541
        %v560 = vsel %vm552, %v551, %v543
        %s561 = scalar_lea.vmem %s3, 6
        %v562 = vld [vmem:[%s561] ss:$8 sm:$0x3]
        %v564 = vlaneseq
        %v565 = vshrl.u32 %v564, 7
        %v566 = vsub.s32 0, %v565
        %v567 = vrot.slane %v562, %v566
        %v568 = vlaneseq
        %v569 = vshrl.u32 %v568, 7
        %v570 = vsub.s32 1, %v569
        %v571 = vrot.slane %v562, %v570
        %v574 = vmul.f32 %v553, %v567
        %v575 = vmul.f32 %v557, %v571
        %v576 = vmul.f32 %v554, %v567
        %v577 = vmul.f32 %v558, %v571
        %v578 = vmul.f32 %v555, %v567
        %v579 = vmul.f32 %v559, %v571
        %v580 = vmul.f32 %v556, %v567
        %v581 = vmul.f32 %v560, %v571
        %v582 = vpack.c.bf16 %v576, %v574
        %v583 = vpack.c.bf16 %v577, %v575
        %v584 = vpack.c.bf16 %v580, %v578
        %v585 = vpack.c.bf16 %v581, %v579
        %586 = vst [vmem:[#allocation3 + $0xc0] sm:$0xff] %v582
        %587 = vst [vmem:[#allocation3 + $0xc8] sm:$0xff] %v583
        %588 = vst [vmem:[#allocation3 + $0xd0] sm:$0xff] %v584
        %589 = vst [vmem:[#allocation3 + $0xd8] sm:$0xff] %v585
        %590 = vrot.lane.b32.xlu0 %v249, 112
        %v591 = vpop.permute.xlu0 %590
        %592 = vrot.lane.b32.xlu0 %v251, 112
        %v593 = vpop.permute.xlu0 %592
        %594 = vrot.lane.b32.xlu0 %v253, 112
        %v595 = vpop.permute.xlu0 %594
        %596 = vrot.lane.b32.xlu0 %v255, 112
        %v597 = vpop.permute.xlu0 %596
        %598 = vrot.lane.b32.xlu0 %v250, 112
        %v599 = vpop.permute.xlu0 %598
        %600 = vrot.lane.b32.xlu0 %v252, 112
        %v601 = vpop.permute.xlu0 %600
        %602 = vrot.lane.b32.xlu0 %v254, 112
        %v603 = vpop.permute.xlu0 %602
        %604 = vrot.lane.b32.xlu0 %v256, 112
        %v605 = vpop.permute.xlu0 %604
        %vm606 = vcmp.lt.s32.totalorder %v274, 112
        %v607 = vsel %vm606, %v591, %v599
        %v608 = vsel %vm606, %v593, %v601
        %v609 = vsel %vm606, %v595, %v603
        %v610 = vsel %vm606, %v597, %v605
        %v611 = vsel %vm606, %v599, %v591
        %v612 = vsel %vm606, %v601, %v593
        %v613 = vsel %vm606, %v603, %v595
        %v614 = vsel %vm606, %v605, %v597
        %s615 = scalar_lea.vmem %s3, 7
        %v616 = vld [vmem:[%s615] ss:$8 sm:$0x3]
        %v618 = vlaneseq
        %v619 = vshrl.u32 %v618, 7
        %v620 = vsub.s32 0, %v619
        %v621 = vrot.slane %v616, %v620
        %v622 = vlaneseq
        %v623 = vshrl.u32 %v622, 7
        %v624 = vsub.s32 1, %v623
        %v625 = vrot.slane %v616, %v624
        %v628 = vmul.f32 %v607, %v621
        %v629 = vmul.f32 %v611, %v625
        %v630 = vmul.f32 %v608, %v621
        %v631 = vmul.f32 %v612, %v625
        %v632 = vmul.f32 %v609, %v621
        %v633 = vmul.f32 %v613, %v625
        %v634 = vmul.f32 %v610, %v621
        %v635 = vmul.f32 %v614, %v625
        %v636 = vpack.c.bf16 %v630, %v628
        %v637 = vpack.c.bf16 %v631, %v629
        %v638 = vpack.c.bf16 %v634, %v632
        %v639 = vpack.c.bf16 %v635, %v633
        %640 = vst [vmem:[#allocation3 + $0xe0] sm:$0xff] %v636
        %641 = vst [vmem:[#allocation3 + $0xe8] sm:$0xff] %v637
        %642 = vst [vmem:[#allocation3 + $0xf0] sm:$0xff] %v638
        %643 = vst [vmem:[#allocation3 + $0xf8] sm:$0xff] %v639
        %644 = vrot.lane.b32.xlu0 %v249, 111
        %v645 = vpop.permute.xlu0 %644
        %646 = vrot.lane.b32.xlu0 %v251, 111
        %v647 = vpop.permute.xlu0 %646
        %648 = vrot.lane.b32.xlu0 %v253, 111
        %v649 = vpop.permute.xlu0 %648
        %650 = vrot.lane.b32.xlu0 %v255, 111
        %v651 = vpop.permute.xlu0 %650
        %652 = vrot.lane.b32.xlu0 %v250, 111
        %v653 = vpop.permute.xlu0 %652
        %654 = vrot.lane.b32.xlu0 %v252, 111
        %v655 = vpop.permute.xlu0 %654
        %656 = vrot.lane.b32.xlu0 %v254, 111
        %v657 = vpop.permute.xlu0 %656
        %658 = vrot.lane.b32.xlu0 %v256, 111
        %v659 = vpop.permute.xlu0 %658
        %vm660 = vcmp.lt.s32.totalorder %v274, 111
        %v661 = vsel %vm660, %v645, %v653
        %v662 = vsel %vm660, %v647, %v655
        %v663 = vsel %vm660, %v649, %v657
        %v664 = vsel %vm660, %v651, %v659
        %v665 = vsel %vm660, %v653, %v645
        %v666 = vsel %vm660, %v655, %v647
        %v667 = vsel %vm660, %v657, %v649
        %v668 = vsel %vm660, %v659, %v651
        %s669 = scalar_lea.vmem %s3, 16
        %v670 = vld [vmem:[%s669] ss:$8 sm:$0x3]
        %v672 = vlaneseq
        %v673 = vshrl.u32 %v672, 7
        %v674 = vsub.s32 0, %v673
        %v675 = vrot.slane %v670, %v674
        %v676 = vlaneseq
        %v677 = vshrl.u32 %v676, 7
        %v678 = vsub.s32 1, %v677
        %v679 = vrot.slane %v670, %v678
        %v682 = vmul.f32 %v661, %v675
        %v683 = vmul.f32 %v665, %v679
        %v684 = vmul.f32 %v662, %v675
        %v685 = vmul.f32 %v666, %v679
        %v686 = vmul.f32 %v663, %v675
        %v687 = vmul.f32 %v667, %v679
        %v688 = vmul.f32 %v664, %v675
        %v689 = vmul.f32 %v668, %v679
        %v690 = vpack.c.bf16 %v684, %v682
        %v691 = vpack.c.bf16 %v685, %v683
        %v692 = vpack.c.bf16 %v688, %v686
        %v693 = vpack.c.bf16 %v689, %v687
        %694 = vst [vmem:[#allocation3 + $0x100] sm:$0xff] %v690
        %695 = vst [vmem:[#allocation3 + $0x108] sm:$0xff] %v691
        %696 = vst [vmem:[#allocation3 + $0x110] sm:$0xff] %v692
        %697 = vst [vmem:[#allocation3 + $0x118] sm:$0xff] %v693
        %v698 = vld [vmem:[%s1] sm:$0xff]
        %v699 = vld [vmem:[%s1 + $0x8] sm:$0xf]
        %v700 = vld [vmem:[%s1 + $0xc] sm:$0xff]
        %v701 = vld [vmem:[%s1 + $0x14] sm:$0xf]
        %v702 = vld [vmem:[%s1 + $0x18] sm:$0xff]
        %v703 = vld [vmem:[%s1 + $0x20] sm:$0xf]
        %v704 = vld [vmem:[%s1 + $0x24] sm:$0xff]
        %v705 = vld [vmem:[%s1 + $0x2c] sm:$0xf]
        %v706 = vld [vmem:[%s1 + $0x30] sm:$0xff]
        %v707 = vld [vmem:[%s1 + $0x38] sm:$0xf]
        %v708 = vld [vmem:[%s1 + $0x3c] sm:$0xff]
        %v709 = vld [vmem:[%s1 + $0x44] sm:$0xf]
        %v710 = vld [vmem:[%s1 + $0x48] sm:$0xff]
        %v711 = vld [vmem:[%s1 + $0x50] sm:$0xf]
        %v712 = vld [vmem:[%s1 + $0x54] sm:$0xff]
        %v713 = vld [vmem:[%s1 + $0x5c] sm:$0xf]
        %v714 = vld [vmem:[%s1 + $0x60] sm:$0xff]
        %v715 = vld [vmem:[%s1 + $0x68] sm:$0xf]
        %v716 = vld [vmem:[%s1 + $0x6c] sm:$0xff]
        %v717 = vld [vmem:[%s1 + $0x74] sm:$0xf]
        %v718 = vld [vmem:[%s1 + $0x78] sm:$0xff]
        %v719 = vld [vmem:[%s1 + $0x80] sm:$0xf]
        %v720 = vld [vmem:[%s1 + $0x84] sm:$0xff]
        %v721 = vld [vmem:[%s1 + $0x8c] sm:$0xf]
        %v722 = vld [vmem:[%s1 + $0x90] sm:$0xff]
        %v723 = vld [vmem:[%s1 + $0x98] sm:$0xf]
        %v724 = vld [vmem:[%s1 + $0x9c] sm:$0xff]
        %v725 = vld [vmem:[%s1 + $0xa4] sm:$0xf]
        %v726 = vld [vmem:[%s1 + $0xa8] sm:$0xff]
        %v727 = vld [vmem:[%s1 + $0xb0] sm:$0xf]
        %v728 = vld [vmem:[%s1 + $0xb4] sm:$0xff]
        %v729 = vld [vmem:[%s1 + $0xbc] sm:$0xf]
        %v730 = vld [vmem:[#allocation3] sm:$0xff]
        %v731 = vld [vmem:[#allocation3 + $0x8] sm:$0xff]
        %v732 = vld [vmem:[#allocation3 + $0x10] sm:$0xff]
        %v733 = vld [vmem:[#allocation3 + $0x18] sm:$0xff]
        %v734 = vld [vmem:[#allocation3 + $0x20] sm:$0xff]
        %v735 = vld [vmem:[#allocation3 + $0x28] sm:$0xff]
        %v736 = vld [vmem:[#allocation3 + $0x30] sm:$0xff]
        %v737 = vld [vmem:[#allocation3 + $0x38] sm:$0xff]
        %v738 = vld [vmem:[#allocation3 + $0x40] sm:$0xff]
        %v739 = vld [vmem:[#allocation3 + $0x48] sm:$0xff]
        %v740 = vld [vmem:[#allocation3 + $0x50] sm:$0xff]
        %v741 = vld [vmem:[#allocation3 + $0x58] sm:$0xff]
        %v742 = vld [vmem:[#allocation3 + $0x60] sm:$0xff]
        %v743 = vld [vmem:[#allocation3 + $0x68] sm:$0xff]
        %v744 = vld [vmem:[#allocation3 + $0x70] sm:$0xff]
        %v745 = vld [vmem:[#allocation3 + $0x78] sm:$0xff]
        %v746 = vld [vmem:[#allocation3 + $0x80] sm:$0xff]
        %v747 = vld [vmem:[#allocation3 + $0x88] sm:$0xff]
        %v748 = vld [vmem:[#allocation3 + $0x90] sm:$0xff]
        %v749 = vld [vmem:[#allocation3 + $0x98] sm:$0xff]
        %v750 = vld [vmem:[#allocation3 + $0xa0] sm:$0xff]
        %v751 = vld [vmem:[#allocation3 + $0xa8] sm:$0xff]
        %v752 = vld [vmem:[#allocation3 + $0xb0] sm:$0xff]
        %v753 = vld [vmem:[#allocation3 + $0xb8] sm:$0xff]
        %v754 = vld [vmem:[#allocation3 + $0xc0] sm:$0xff]
        %v755 = vld [vmem:[#allocation3 + $0xc8] sm:$0xff]
        %v756 = vld [vmem:[#allocation3 + $0xd0] sm:$0xff]
        %v757 = vld [vmem:[#allocation3 + $0xd8] sm:$0xff]
        %v758 = vld [vmem:[#allocation3 + $0xe0] sm:$0xff]
        %v759 = vld [vmem:[#allocation3 + $0xe8] sm:$0xff]
        %v760 = vld [vmem:[#allocation3 + $0xf0] sm:$0xff]
        %v761 = vld [vmem:[#allocation3 + $0xf8] sm:$0xff]
        %v762 = vld [vmem:[#allocation3 + $0x100] sm:$0xff]
        %v763 = vld [vmem:[#allocation3 + $0x108] sm:$0xff]
        %v764 = vld [vmem:[#allocation3 + $0x110] sm:$0xff]
        %v765 = vld [vmem:[#allocation3 + $0x118] sm:$0xff]
        %v766 = vld [vmem:[%s2] sm:$0xff]
        %v767 = vld [vmem:[%s2 + $0x8] sm:$0xff]
        %v768 = vld [vmem:[%s2 + $0x10] sm:$0xff]
        %v769 = vld [vmem:[%s2 + $0x18] sm:$0xff]
        %v770 = vld [vmem:[%s2 + $0x20] sm:$0xff]
        %v771 = vld [vmem:[%s2 + $0x28] sm:$0xff]
        %v772 = vld [vmem:[%s2 + $0x30] sm:$0xff]
        %v773 = vld [vmem:[%s2 + $0x38] sm:$0xff]
        %v774 = vld [vmem:[%s2 + $0x40] sm:$0xff]
        %v775 = vld [vmem:[%s2 + $0x48] sm:$0xff]
        %v776 = vld [vmem:[%s2 + $0x50] sm:$0xff]
        %v777 = vld [vmem:[%s2 + $0x58] sm:$0xff]
        %v778 = vld [vmem:[%s2 + $0x60] sm:$0xff]
        %v779 = vld [vmem:[%s2 + $0x68] sm:$0xff]
        %v780 = vld [vmem:[%s2 + $0x70] sm:$0xff]
        %v781 = vld [vmem:[%s2 + $0x78] sm:$0xff]
        %783 = vset.pattern.permute.xlu0 0
        %784 = vperm.xlu0 %783, %v766
        %v785 = vpop.permute.xlu0 %784
        %788 = vset.pattern.permute.xlu0 0
        %789 = vperm.xlu0 %788, %v767
        %v790 = vpop.permute.xlu0 %789
        %793 = vset.pattern.permute.xlu0 0
        %794 = vperm.xlu0 %793, %v768
        %v795 = vpop.permute.xlu0 %794
        %798 = vset.pattern.permute.xlu0 0
        %799 = vperm.xlu0 %798, %v769
        %v800 = vpop.permute.xlu0 %799
        %803 = vset.pattern.permute.xlu0 0
        %804 = vperm.xlu0 %803, %v770
        %v805 = vpop.permute.xlu0 %804
        %808 = vset.pattern.permute.xlu0 0
        %809 = vperm.xlu0 %808, %v771
        %v810 = vpop.permute.xlu0 %809
        %813 = vset.pattern.permute.xlu0 0
        %814 = vperm.xlu0 %813, %v772
        %v815 = vpop.permute.xlu0 %814
        %818 = vset.pattern.permute.xlu0 0
        %819 = vperm.xlu0 %818, %v773
        %v820 = vpop.permute.xlu0 %819
        %823 = vset.pattern.permute.xlu0 0
        %824 = vperm.xlu0 %823, %v774
        %v825 = vpop.permute.xlu0 %824
        %828 = vset.pattern.permute.xlu0 0
        %829 = vperm.xlu0 %828, %v775
        %v830 = vpop.permute.xlu0 %829
        %833 = vset.pattern.permute.xlu0 0
        %834 = vperm.xlu0 %833, %v776
        %v835 = vpop.permute.xlu0 %834
        %838 = vset.pattern.permute.xlu0 0
        %839 = vperm.xlu0 %838, %v777
        %v840 = vpop.permute.xlu0 %839
        %843 = vset.pattern.permute.xlu0 0
        %844 = vperm.xlu0 %843, %v778
        %v845 = vpop.permute.xlu0 %844
        %848 = vset.pattern.permute.xlu0 0
        %849 = vperm.xlu0 %848, %v779
        %v850 = vpop.permute.xlu0 %849
        %853 = vset.pattern.permute.xlu0 0
        %854 = vperm.xlu0 %853, %v780
        %v855 = vpop.permute.xlu0 %854
        %858 = vset.pattern.permute.xlu0 0
        %859 = vperm.xlu0 %858, %v781
        %v860 = vpop.permute.xlu0 %859
        %v894 = vunpack.c.l.b16 %v698
        %v895 = vunpack.c.h.b16 %v698
        %v896 = vunpack.c.l.b16 %v699
        %v897 = vunpack.c.l.b16 %v700
        %v898 = vunpack.c.h.b16 %v700
        %v899 = vunpack.c.l.b16 %v701
        %v900 = vunpack.c.l.b16 %v702
        %v901 = vunpack.c.h.b16 %v702
        %v902 = vunpack.c.l.b16 %v703
        %v903 = vunpack.c.l.b16 %v704
        %v904 = vunpack.c.h.b16 %v704
        %v905 = vunpack.c.l.b16 %v705
        %v906 = vunpack.c.l.b16 %v706
        %v907 = vunpack.c.h.b16 %v706
        %v908 = vunpack.c.l.b16 %v707
        %v909 = vunpack.c.l.b16 %v708
        %v910 = vunpack.c.h.b16 %v708
        %v911 = vunpack.c.l.b16 %v709
        %v912 = vunpack.c.l.b16 %v710
        %v913 = vunpack.c.h.b16 %v710
        %v914 = vunpack.c.l.b16 %v711
        %v915 = vunpack.c.l.b16 %v712
        %v916 = vunpack.c.h.b16 %v712
        %v917 = vunpack.c.l.b16 %v713
        %v918 = vunpack.c.l.b16 %v714
        %v919 = vunpack.c.h.b16 %v714
        %v920 = vunpack.c.l.b16 %v715
        %v921 = vunpack.c.l.b16 %v716
        %v922 = vunpack.c.h.b16 %v716
        %v923 = vunpack.c.l.b16 %v717
        %v924 = vunpack.c.l.b16 %v718
        %v925 = vunpack.c.h.b16 %v718
        %v926 = vunpack.c.l.b16 %v719
        %v927 = vunpack.c.l.b16 %v720
        %v928 = vunpack.c.h.b16 %v720
        %v929 = vunpack.c.l.b16 %v721
        %v930 = vunpack.c.l.b16 %v722
        %v931 = vunpack.c.h.b16 %v722
        %v932 = vunpack.c.l.b16 %v723
        %v933 = vunpack.c.l.b16 %v724
        %v934 = vunpack.c.h.b16 %v724
        %v935 = vunpack.c.l.b16 %v725
        %v936 = vunpack.c.l.b16 %v726
        %v937 = vunpack.c.h.b16 %v726
        %v938 = vunpack.c.l.b16 %v727
        %v939 = vunpack.c.l.b16 %v728
        %v940 = vunpack.c.h.b16 %v728
        %v941 = vunpack.c.l.b16 %v729
        %v942 = vpack.c.b16 %v897, %v894
        %v943 = vpack.c.b16 %v898, %v895
        %v944 = vpack.c.b16 %v899, %v896
        %v945 = vpack.c.b16 %v903, %v900
        %v946 = vpack.c.b16 %v904, %v901
        %v947 = vpack.c.b16 %v905, %v902
        %v948 = vpack.c.b16 %v909, %v906
        %v949 = vpack.c.b16 %v910, %v907
        %v950 = vpack.c.b16 %v911, %v908
        %v951 = vpack.c.b16 %v915, %v912
        %v952 = vpack.c.b16 %v916, %v913
        %v953 = vpack.c.b16 %v917, %v914
        %v954 = vpack.c.b16 %v921, %v918
        %v955 = vpack.c.b16 %v922, %v919
        %v956 = vpack.c.b16 %v923, %v920
        %v957 = vpack.c.b16 %v927, %v924
        %v958 = vpack.c.b16 %v928, %v925
        %v959 = vpack.c.b16 %v929, %v926
        %v960 = vpack.c.b16 %v933, %v930
        %v961 = vpack.c.b16 %v934, %v931
        %v962 = vpack.c.b16 %v935, %v932
        %v963 = vpack.c.b16 %v939, %v936
        %v964 = vpack.c.b16 %v940, %v937
        %v965 = vpack.c.b16 %v941, %v938
        %vm982 = vcmask 261120
        %v984 = vsel %vm982, %v944, 0
        %v987 = vsel %vm982, %v947, 0
        %v990 = vsel %vm982, %v950, 0
        %v993 = vsel %vm982, %v953, 0
        %v996 = vsel %vm982, %v956, 0
        %v999 = vsel %vm982, %v959, 0
        %v1002 = vsel %vm982, %v962, 0
        %v1005 = vsel %vm982, %v965, 0
        %1007 = vmatprep.subr.bf16.mxu0 %v731
        %1008 = vmatpush1.bf16.msra.mxu0 %v730
        %1009 = vmatprep.subr.bf16.mxu0 %v733
        %1010 = vmatpush1.bf16.msra.mxu0 %v732
        %1011 = vmatprep.subr.bf16.mxu0 %v735
        %1012 = vmatpush1.bf16.msra.mxu0 %v734
        %1013 = vmatprep.subr.bf16.mxu0 %v737
        %1014 = vmatpush1.bf16.msra.mxu0 %v736
        %1015 = vmatprep.subr.bf16.mxu0 %v739
        %1016 = vmatpush1.bf16.msra.mxu0 %v738
        %1017 = vmatprep.subr.bf16.mxu0 %v741
        %1018 = vmatpush1.bf16.msra.mxu0 %v740
        %1019 = vmatprep.subr.bf16.mxu0 %v743
        %1020 = vmatpush1.bf16.msra.mxu0 %v742
        %1021 = vmatprep.subr.bf16.mxu0 %v745
        %1022 = vmatpush1.bf16.msra.mxu0 %v744
        %1023 = vmatprep.subr.bf16.mxu0 %v747
        %1024 = vmatpush1.bf16.msra.mxu0 %v746
        %1025 = vmatprep.subr.bf16.mxu0 %v749
        %1026 = vmatpush1.bf16.msra.mxu0 %v748
        %1027 = vmatprep.subr.bf16.mxu0 %v751
        %1028 = vmatpush1.bf16.msra.mxu0 %v750
        %1029 = vmatprep.subr.bf16.mxu0 %v753
        %1030 = vmatpush1.bf16.msra.mxu0 %v752
        %1031 = vmatprep.subr.bf16.mxu0 %v755
        %1032 = vmatpush1.bf16.msra.mxu0 %v754
        %1033 = vmatprep.subr.bf16.mxu0 %v757
        %1034 = vmatpush1.bf16.msra.mxu0 %v756
        %1035 = vmatprep.subr.bf16.mxu0 %v759
        %1036 = vmatpush1.bf16.msra.mxu0 %v758
        %1037 = vmatprep.subr.bf16.mxu0 %v761
        %1038 = vmatpush1.bf16.msra.mxu0 %v760
        %1039 = vmatprep.mubr.bf16.mxu0 %v943
        %1040 = vmatmul.mubr.bf16.gmra.mrb[0].mxu0 %v942
        %v1041 = vpop.f32.mrb[0].mxu0
        %v1042 = vadd.f32 %v785, %v1041
        %v1043 = vpop.f32.mrb[0].mxu0
        %v1044 = vadd.f32 %v785, %v1043
        %v1045 = vpop.f32.mrb[0].mxu0
        %v1046 = vadd.f32 %v790, %v1045
        %v1047 = vpop.f32.mrb[0].mxu0
        %v1048 = vadd.f32 %v790, %v1047
        %1049 = vmatprep.mubr.bf16.mxu0 %v946
        %1050 = vmatmul.mubr.bf16.gmra.mrb[0].mxu0 %v945
        %v1051 = vpop.f32.mrb[0].mxu0
        %v1052 = vadd.f32 %v795, %v1051
        %v1053 = vpop.f32.mrb[0].mxu0
        %v1054 = vadd.f32 %v795, %v1053
        %v1055 = vpop.f32.mrb[0].mxu0
        %v1056 = vadd.f32 %v800, %v1055
        %v1057 = vpop.f32.mrb[0].mxu0
        %v1058 = vadd.f32 %v800, %v1057
        %1059 = vmatprep.mubr.bf16.mxu0 %v949
        %1060 = vmatmul.mubr.bf16.gmra.mrb[0].mxu0 %v948
        %v1061 = vpop.f32.mrb[0].mxu0
        %v1062 = vadd.f32 %v805, %v1061
        %v1063 = vpop.f32.mrb[0].mxu0
        %v1064 = vadd.f32 %v805, %v1063
        %v1065 = vpop.f32.mrb[0].mxu0
        %v1066 = vadd.f32 %v810, %v1065
        %v1067 = vpop.f32.mrb[0].mxu0
        %v1068 = vadd.f32 %v810, %v1067
        %1069 = vmatprep.mubr.bf16.mxu0 %v952
        %1070 = vmatmul.mubr.bf16.gmra.mrb[0].mxu0 %v951
        %v1071 = vpop.f32.mrb[0].mxu0
        %v1072 = vadd.f32 %v815, %v1071
        %v1073 = vpop.f32.mrb[0].mxu0
        %v1074 = vadd.f32 %v815, %v1073
        %v1075 = vpop.f32.mrb[0].mxu0
        %v1076 = vadd.f32 %v820, %v1075
        %v1077 = vpop.f32.mrb[0].mxu0
        %v1078 = vadd.f32 %v820, %v1077
        %1079 = vmatprep.mubr.bf16.mxu0 %v955
        %1080 = vmatmul.mubr.bf16.gmra.mrb[0].mxu0 %v954
        %v1081 = vpop.f32.mrb[0].mxu0
        %v1082 = vadd.f32 %v825, %v1081
        %v1083 = vpop.f32.mrb[0].mxu0
        %v1084 = vadd.f32 %v825, %v1083
        %v1085 = vpop.f32.mrb[0].mxu0
        %v1086 = vadd.f32 %v830, %v1085
        %v1087 = vpop.f32.mrb[0].mxu0
        %v1088 = vadd.f32 %v830, %v1087
        %1089 = vmatprep.mubr.bf16.mxu0 %v958
        %1090 = vmatmul.mubr.bf16.gmra.mrb[0].mxu0 %v957
        %v1091 = vpop.f32.mrb[0].mxu0
        %v1092 = vadd.f32 %v835, %v1091
        %v1093 = vpop.f32.mrb[0].mxu0
        %v1094 = vadd.f32 %v835, %v1093
        %v1095 = vpop.f32.mrb[0].mxu0
        %v1096 = vadd.f32 %v840, %v1095
        %v1097 = vpop.f32.mrb[0].mxu0
        %v1098 = vadd.f32 %v840, %v1097
        %1099 = vmatprep.mubr.bf16.mxu0 %v961
        %1100 = vmatmul.mubr.bf16.gmra.mrb[0].mxu0 %v960
        %v1101 = vpop.f32.mrb[0].mxu0
        %v1102 = vadd.f32 %v845, %v1101
        %v1103 = vpop.f32.mrb[0].mxu0
        %v1104 = vadd.f32 %v845, %v1103
        %v1105 = vpop.f32.mrb[0].mxu0
        %v1106 = vadd.f32 %v850, %v1105
        %v1107 = vpop.f32.mrb[0].mxu0
        %v1108 = vadd.f32 %v850, %v1107
        %1109 = vmatprep.mubr.bf16.mxu0 %v964
        %1110 = vmatmul.mubr.bf16.gmra.mrb[0].mxu0 %v963
        %v1111 = vpop.f32.mrb[0].mxu0
        %v1112 = vadd.f32 %v855, %v1111
        %v1113 = vpop.f32.mrb[0].mxu0
        %v1114 = vadd.f32 %v855, %v1113
        %v1115 = vpop.f32.mrb[0].mxu0
        %v1116 = vadd.f32 %v860, %v1115
        %v1117 = vpop.f32.mrb[0].mxu0
        %v1118 = vadd.f32 %v860, %v1117
        %1119 = vdwg.mxu0
        %1120 = vmatprep.subr.bf16.mxu0 %v763
        %1121 = vmatpush1.bf16.msra.mxu0 %v762
        %1122 = vmatprep.subr.bf16.mxu0 %v765
        %1123 = vmatpush1.bf16.msra.mxu0 %v764
        %1124 = vmatprep.subr.bf16.mxu0 0
        %1125 = vmatpush1.bf16.msra.mxu0 0
        %1126 = vmatprep.subr.bf16.mxu0 0
        %1127 = vmatpush1.bf16.msra.mxu0 0
        %1128 = vmatprep.subr.bf16.mxu0 0
        %1129 = vmatpush1.bf16.msra.mxu0 0
        %1130 = vmatprep.subr.bf16.mxu0 0
        %1131 = vmatpush1.bf16.msra.mxu0 0
        %1132 = vmatprep.subr.bf16.mxu0 0
        %1133 = vmatpush1.bf16.msra.mxu0 0
        %1134 = vmatprep.subr.bf16.mxu0 0
        %1135 = vmatpush1.bf16.msra.mxu0 0
        %1136 = vmatprep.subr.bf16.mxu0 0
        %1137 = vmatpush1.bf16.msra.mxu0 0
        %1138 = vmatprep.subr.bf16.mxu0 0
        %1139 = vmatpush1.bf16.msra.mxu0 0
        %1140 = vmatprep.subr.bf16.mxu0 0
        %1141 = vmatpush1.bf16.msra.mxu0 0
        %1142 = vmatprep.subr.bf16.mxu0 0
        %1143 = vmatpush1.bf16.msra.mxu0 0
        %1144 = vmatprep.subr.bf16.mxu0 0
        %1145 = vmatpush1.bf16.msra.mxu0 0
        %1146 = vmatprep.subr.bf16.mxu0 0
        %1147 = vmatpush1.bf16.msra.mxu0 0
        %1148 = vmatprep.subr.bf16.mxu0 0
        %1149 = vmatpush1.bf16.msra.mxu0 0
        %1150 = vmatprep.subr.bf16.mxu0 0
        %1151 = vmatpush1.bf16.msra.mxu0 0
        %1152 = vmatprep.mubr.bf16.mxu0 0
        %1153 = vmatmul.mubr.bf16.gmra.mrb[0].mxu0 %v984
        %v1154 = vpop.f32.mrb[0].mxu0
        %v1155 = vadd.f32 %v1042, %v1154
        %v1156 = vpop.f32.mrb[0].mxu0
        %v1157 = vadd.f32 %v1044, %v1156
        %v1158 = vpop.f32.mrb[0].mxu0
        %v1159 = vadd.f32 %v1046, %v1158
        %v1160 = vpop.f32.mrb[0].mxu0
        %v1161 = vadd.f32 %v1048, %v1160
        %1162 = vmatprep.mubr.bf16.mxu0 0
        %1163 = vmatmul.mubr.bf16.gmra.mrb[0].mxu0 %v987
        %v1164 = vpop.f32.mrb[0].mxu0
        %v1165 = vadd.f32 %v1052, %v1164
        %v1166 = vpop.f32.mrb[0].mxu0
        %v1167 = vadd.f32 %v1054, %v1166
        %v1168 = vpop.f32.mrb[0].mxu0
        %v1169 = vadd.f32 %v1056, %v1168
        %v1170 = vpop.f32.mrb[0].mxu0
        %v1171 = vadd.f32 %v1058, %v1170
        %1172 = vmatprep.mubr.bf16.mxu0 0
        %1173 = vmatmul.mubr.bf16.gmra.mrb[0].mxu0 %v990
        %v1174 = vpop.f32.mrb[0].mxu0
        %v1175 = vadd.f32 %v1062, %v1174
        %v1176 = vpop.f32.mrb[0].mxu0
        %v1177 = vadd.f32 %v1064, %v1176
        %v1178 = vpop.f32.mrb[0].mxu0
        %v1179 = vadd.f32 %v1066, %v1178
        %v1180 = vpop.f32.mrb[0].mxu0
        %v1181 = vadd.f32 %v1068, %v1180
        %1182 = vmatprep.mubr.bf16.mxu0 0
        %1183 = vmatmul.mubr.bf16.gmra.mrb[0].mxu0 %v993
        %v1184 = vpop.f32.mrb[0].mxu0
        %v1185 = vadd.f32 %v1072, %v1184
        %v1186 = vpop.f32.mrb[0].mxu0
        %v1187 = vadd.f32 %v1074, %v1186
        %v1188 = vpop.f32.mrb[0].mxu0
        %v1189 = vadd.f32 %v1076, %v1188
        %v1190 = vpop.f32.mrb[0].mxu0
        %v1191 = vadd.f32 %v1078, %v1190
        %1192 = vmatprep.mubr.bf16.mxu0 0
        %1193 = vmatmul.mubr.bf16.gmra.mrb[0].mxu0 %v996
        %v1194 = vpop.f32.mrb[0].mxu0
        %v1195 = vadd.f32 %v1082, %v1194
        %v1196 = vpop.f32.mrb[0].mxu0
        %v1197 = vadd.f32 %v1084, %v1196
        %v1198 = vpop.f32.mrb[0].mxu0
        %v1199 = vadd.f32 %v1086, %v1198
        %v1200 = vpop.f32.mrb[0].mxu0
        %v1201 = vadd.f32 %v1088, %v1200
        %1202 = vmatprep.mubr.bf16.mxu0 0
        %1203 = vmatmul.mubr.bf16.gmra.mrb[0].mxu0 %v999
        %v1204 = vpop.f32.mrb[0].mxu0
        %v1205 = vadd.f32 %v1092, %v1204
        %v1206 = vpop.f32.mrb[0].mxu0
        %v1207 = vadd.f32 %v1094, %v1206
        %v1208 = vpop.f32.mrb[0].mxu0
        %v1209 = vadd.f32 %v1096, %v1208
        %v1210 = vpop.f32.mrb[0].mxu0
        %v1211 = vadd.f32 %v1098, %v1210
        %1212 = vmatprep.mubr.bf16.mxu0 0
        %1213 = vmatmul.mubr.bf16.gmra.mrb[0].mxu0 %v1002
        %v1214 = vpop.f32.mrb[0].mxu0
        %v1215 = vadd.f32 %v1102, %v1214
        %v1216 = vpop.f32.mrb[0].mxu0
        %v1217 = vadd.f32 %v1104, %v1216
        %v1218 = vpop.f32.mrb[0].mxu0
        %v1219 = vadd.f32 %v1106, %v1218
        %v1220 = vpop.f32.mrb[0].mxu0
        %v1221 = vadd.f32 %v1108, %v1220
        %1222 = vmatprep.mubr.bf16.mxu0 0
        %1223 = vmatmul.mubr.bf16.gmra.mrb[0].mxu0 %v1005
        %v1224 = vpop.f32.mrb[0].mxu0
        %v1225 = vadd.f32 %v1112, %v1224
        %v1226 = vpop.f32.mrb[0].mxu0
        %v1227 = vadd.f32 %v1114, %v1226
        %v1228 = vpop.f32.mrb[0].mxu0
        %v1229 = vadd.f32 %v1116, %v1228
        %v1230 = vpop.f32.mrb[0].mxu0
        %v1231 = vadd.f32 %v1118, %v1230
        %1232 = vdwg.mxu0
        %1233 = vst [vmem:[#allocation4] sm:$0xff] %v1155
        %1234 = vst [vmem:[#allocation4 + $0x8] sm:$0xff] %v1157
        %1235 = vst [vmem:[#allocation4 + $0x10] sm:$0xff] %v1159
        %1236 = vst [vmem:[#allocation4 + $0x18] sm:$0xff] %v1161
        %1237 = vst [vmem:[#allocation4 + $0x20] sm:$0xff] %v1165
        %1238 = vst [vmem:[#allocation4 + $0x28] sm:$0xff] %v1167
        %1239 = vst [vmem:[#allocation4 + $0x30] sm:$0xff] %v1169
        %1240 = vst [vmem:[#allocation4 + $0x38] sm:$0xff] %v1171
        %1241 = vst [vmem:[#allocation4 + $0x40] sm:$0xff] %v1175
        %1242 = vst [vmem:[#allocation4 + $0x48] sm:$0xff] %v1177
        %1243 = vst [vmem:[#allocation4 + $0x50] sm:$0xff] %v1179
        %1244 = vst [vmem:[#allocation4 + $0x58] sm:$0xff] %v1181
        %1245 = vst [vmem:[#allocation4 + $0x60] sm:$0xff] %v1185
        %1246 = vst [vmem:[#allocation4 + $0x68] sm:$0xff] %v1187
        %1247 = vst [vmem:[#allocation4 + $0x70] sm:$0xff] %v1189
        %1248 = vst [vmem:[#allocation4 + $0x78] sm:$0xff] %v1191
        %1249 = vst [vmem:[#allocation4 + $0x80] sm:$0xff] %v1195
        %1250 = vst [vmem:[#allocation4 + $0x88] sm:$0xff] %v1197
        %1251 = vst [vmem:[#allocation4 + $0x90] sm:$0xff] %v1199
        %1252 = vst [vmem:[#allocation4 + $0x98] sm:$0xff] %v1201
        %1253 = vst [vmem:[#allocation4 + $0xa0] sm:$0xff] %v1205
        %1254 = vst [vmem:[#allocation4 + $0xa8] sm:$0xff] %v1207
        %1255 = vst [vmem:[#allocation4 + $0xb0] sm:$0xff] %v1209
        %1256 = vst [vmem:[#allocation4 + $0xb8] sm:$0xff] %v1211
        %1257 = vst [vmem:[#allocation4 + $0xc0] sm:$0xff] %v1215
        %1258 = vst [vmem:[#allocation4 + $0xc8] sm:$0xff] %v1217
        %1259 = vst [vmem:[#allocation4 + $0xd0] sm:$0xff] %v1219
        %1260 = vst [vmem:[#allocation4 + $0xd8] sm:$0xff] %v1221
        %1261 = vst [vmem:[#allocation4 + $0xe0] sm:$0xff] %v1225
        %1262 = vst [vmem:[#allocation4 + $0xe8] sm:$0xff] %v1227
        %1263 = vst [vmem:[#allocation4 + $0xf0] sm:$0xff] %v1229
        %1264 = vst [vmem:[#allocation4 + $0xf8] sm:$0xff] %v1231
        %v1265 = vld [vmem:[#allocation4] sm:$0xff]
        %v1266 = vld [vmem:[#allocation4 + $0x8] sm:$0xff]
        %v1267 = vld [vmem:[#allocation4 + $0x10] sm:$0xff]
        %v1268 = vld [vmem:[#allocation4 + $0x18] sm:$0xff]
        %v1269 = vld [vmem:[#allocation4 + $0x20] sm:$0xff]
        %v1270 = vld [vmem:[#allocation4 + $0x28] sm:$0xff]
        %v1271 = vld [vmem:[#allocation4 + $0x30] sm:$0xff]
        %v1272 = vld [vmem:[#allocation4 + $0x38] sm:$0xff]
        %v1273 = vxor.u32 %v1265, 2147483648
        %v1274 = vxor.u32 %v1266, 2147483648
        %v1275 = vxor.u32 %v1267, 2147483648
        %v1276 = vxor.u32 %v1268, 2147483648
        %v1277 = vxor.u32 %v1269, 2147483648
        %v1278 = vxor.u32 %v1270, 2147483648
        %v1279 = vxor.u32 %v1271, 2147483648
        %v1280 = vxor.u32 %v1272, 2147483648
        %v1281 = vmul.f32 %v1273, 1.442695
        %v1282 = vpow.pop %v1281
        %v1283 = vmul.f32 %v1274, 1.442695
        %v1284 = vpow.pop %v1283
        %v1285 = vmul.f32 %v1275, 1.442695
        %v1286 = vpow.pop %v1285
        %v1287 = vmul.f32 %v1276, 1.442695
        %v1288 = vpow.pop %v1287
        %v1289 = vmul.f32 %v1277, 1.442695
        %v1290 = vpow.pop %v1289
        %v1291 = vmul.f32 %v1278, 1.442695
        %v1292 = vpow.pop %v1291
        %v1293 = vmul.f32 %v1279, 1.442695
        %v1294 = vpow.pop %v1293
        %v1295 = vmul.f32 %v1280, 1.442695
        %v1296 = vpow.pop %v1295
        %v1297 = vadd.f32 %v1282, 1.0
        %v1298 = vadd.f32 %v1284, 1.0
        %v1299 = vadd.f32 %v1286, 1.0
        %v1300 = vadd.f32 %v1288, 1.0
        %v1301 = vadd.f32 %v1290, 1.0
        %v1302 = vadd.f32 %v1292, 1.0
        %v1303 = vadd.f32 %v1294, 1.0
        %v1304 = vadd.f32 %v1296, 1.0
        %v1305 = vrcp.pop %v1297
        %v1306 = vmul.f32 1.0, %v1305
        %v1307 = vrcp.pop %v1298
        %v1308 = vmul.f32 1.0, %v1307
        %v1309 = vrcp.pop %v1299
        %v1310 = vmul.f32 1.0, %v1309
        %v1311 = vrcp.pop %v1300
        %v1312 = vmul.f32 1.0, %v1311
        %v1313 = vrcp.pop %v1301
        %v1314 = vmul.f32 1.0, %v1313
        %v1315 = vrcp.pop %v1302
        %v1316 = vmul.f32 1.0, %v1315
        %v1317 = vrcp.pop %v1303
        %v1318 = vmul.f32 1.0, %v1317
        %v1319 = vrcp.pop %v1304
        %v1320 = vmul.f32 1.0, %v1319
        %v1321 = vld [vmem:[#allocation4 + $0x80] sm:$0xff]
        %v1322 = vld [vmem:[#allocation4 + $0x88] sm:$0xff]
        %v1323 = vld [vmem:[#allocation4 + $0x90] sm:$0xff]
        %v1324 = vld [vmem:[#allocation4 + $0x98] sm:$0xff]
        %v1325 = vld [vmem:[#allocation4 + $0xa0] sm:$0xff]
        %v1326 = vld [vmem:[#allocation4 + $0xa8] sm:$0xff]
        %v1327 = vld [vmem:[#allocation4 + $0xb0] sm:$0xff]
        %v1328 = vld [vmem:[#allocation4 + $0xb8] sm:$0xff]
        %v1329 = vxor.u32 %v1321, 2147483648
        %v1330 = vxor.u32 %v1322, 2147483648
        %v1331 = vxor.u32 %v1323, 2147483648
        %v1332 = vxor.u32 %v1324, 2147483648
        %v1333 = vxor.u32 %v1325, 2147483648
        %v1334 = vxor.u32 %v1326, 2147483648
        %v1335 = vxor.u32 %v1327, 2147483648
        %v1336 = vxor.u32 %v1328, 2147483648
        %v1337 = vmul.f32 %v1329, 1.442695
        %v1338 = vpow.pop %v1337
        %v1339 = vmul.f32 %v1330, 1.442695
        %v1340 = vpow.pop %v1339
        %v1341 = vmul.f32 %v1331, 1.442695
        %v1342 = vpow.pop %v1341
        %v1343 = vmul.f32 %v1332, 1.442695
        %v1344 = vpow.pop %v1343
        %v1345 = vmul.f32 %v1333, 1.442695
        %v1346 = vpow.pop %v1345
        %v1347 = vmul.f32 %v1334, 1.442695
        %v1348 = vpow.pop %v1347
        %v1349 = vmul.f32 %v1335, 1.442695
        %v1350 = vpow.pop %v1349
        %v1351 = vmul.f32 %v1336, 1.442695
        %v1352 = vpow.pop %v1351
        %v1353 = vadd.f32 %v1338, 1.0
        %v1354 = vadd.f32 %v1340, 1.0
        %v1355 = vadd.f32 %v1342, 1.0
        %v1356 = vadd.f32 %v1344, 1.0
        %v1357 = vadd.f32 %v1346, 1.0
        %v1358 = vadd.f32 %v1348, 1.0
        %v1359 = vadd.f32 %v1350, 1.0
        %v1360 = vadd.f32 %v1352, 1.0
        %v1361 = vrcp.pop %v1353
        %v1362 = vmul.f32 1.0, %v1361
        %v1363 = vrcp.pop %v1354
        %v1364 = vmul.f32 1.0, %v1363
        %v1365 = vrcp.pop %v1355
        %v1366 = vmul.f32 1.0, %v1365
        %v1367 = vrcp.pop %v1356
        %v1368 = vmul.f32 1.0, %v1367
        %v1369 = vrcp.pop %v1357
        %v1370 = vmul.f32 1.0, %v1369
        %v1371 = vrcp.pop %v1358
        %v1372 = vmul.f32 1.0, %v1371
        %v1373 = vrcp.pop %v1359
        %v1374 = vmul.f32 1.0, %v1373
        %v1375 = vrcp.pop %v1360
        %v1376 = vmul.f32 1.0, %v1375
        %v1377 = vld [vmem:[#allocation4 + $0xc0] sm:$0xff]
        %v1378 = vld [vmem:[#allocation4 + $0xc8] sm:$0xff]
        %v1379 = vld [vmem:[#allocation4 + $0xd0] sm:$0xff]
        %v1380 = vld [vmem:[#allocation4 + $0xd8] sm:$0xff]
        %v1381 = vld [vmem:[#allocation4 + $0xe0] sm:$0xff]
        %v1382 = vld [vmem:[#allocation4 + $0xe8] sm:$0xff]
        %v1383 = vld [vmem:[#allocation4 + $0xf0] sm:$0xff]
        %v1384 = vld [vmem:[#allocation4 + $0xf8] sm:$0xff]
        %v1385 = vtanh.pop %v1377
        %v1386 = vtanh.pop %v1378
        %v1387 = vtanh.pop %v1379
        %v1388 = vtanh.pop %v1380
        %v1389 = vtanh.pop %v1381
        %v1390 = vtanh.pop %v1382
        %v1391 = vtanh.pop %v1383
        %v1392 = vtanh.pop %v1384
        %v1393 = vmul.f32 %v1306, %v1385
        %v1394 = vmul.f32 %v1308, %v1386
        %v1395 = vmul.f32 %v1310, %v1387
        %v1396 = vmul.f32 %v1312, %v1388
        %v1397 = vmul.f32 %v1314, %v1389
        %v1398 = vmul.f32 %v1316, %v1390
        %v1399 = vmul.f32 %v1318, %v1391
        %v1400 = vmul.f32 %v1320, %v1392
        %v1401 = vtanh.pop %v1393
        %v1402 = vtanh.pop %v1394
        %v1403 = vtanh.pop %v1395
        %v1404 = vtanh.pop %v1396
        %v1405 = vtanh.pop %v1397
        %v1406 = vtanh.pop %v1398
        %v1407 = vtanh.pop %v1399
        %v1408 = vtanh.pop %v1400
        %v1409 = vmul.f32 %v1362, %v1401
        %v1410 = vmul.f32 %v1364, %v1402
        %v1411 = vmul.f32 %v1366, %v1403
        %v1412 = vmul.f32 %v1368, %v1404
        %v1413 = vmul.f32 %v1370, %v1405
        %v1414 = vmul.f32 %v1372, %v1406
        %v1415 = vmul.f32 %v1374, %v1407
        %v1416 = vmul.f32 %v1376, %v1408
        %1417 = vst [vmem:[%s221] sm:$0xff] %v1409
        %1418 = vst [vmem:[%s221 + $0x8] sm:$0xff] %v1410
        %1419 = vst [vmem:[%s221 + $0x10] sm:$0xff] %v1411
        %1420 = vst [vmem:[%s221 + $0x18] sm:$0xff] %v1412
        %1421 = vst [vmem:[%s221 + $0x20] sm:$0xff] %v1413
        %1422 = vst [vmem:[%s221 + $0x28] sm:$0xff] %v1414
        %1423 = vst [vmem:[%s221 + $0x30] sm:$0xff] %v1415
        %1424 = vst [vmem:[%s221 + $0x38] sm:$0xff] %v1416
        %1425 = vst [vmem:[%s228] sm:$0xff] %v1393
        %1426 = vst [vmem:[%s228 + $0x8] sm:$0xff] %v1394
        %1427 = vst [vmem:[%s228 + $0x10] sm:$0xff] %v1395
        %1428 = vst [vmem:[%s228 + $0x18] sm:$0xff] %v1396
        %1429 = vst [vmem:[%s228 + $0x20] sm:$0xff] %v1397
        %1430 = vst [vmem:[%s228 + $0x28] sm:$0xff] %v1398
        %1431 = vst [vmem:[%s228 + $0x30] sm:$0xff] %v1399
        %1432 = vst [vmem:[%s228 + $0x38] sm:$0xff] %v1400
        %1433 = vst [vmem:[#allocation2] sm:$0xff] %v1409
        %1434 = vst [vmem:[#allocation2 + $0x8] sm:$0xff] %v1410
        %1435 = vst [vmem:[#allocation2 + $0x10] sm:$0xff] %v1411
        %1436 = vst [vmem:[#allocation2 + $0x18] sm:$0xff] %v1412
        %1437 = vst [vmem:[#allocation2 + $0x20] sm:$0xff] %v1413
        %1438 = vst [vmem:[#allocation2 + $0x28] sm:$0xff] %v1414
        %1439 = vst [vmem:[#allocation2 + $0x30] sm:$0xff] %v1415
        %1440 = vst [vmem:[#allocation2 + $0x38] sm:$0xff] %v1416
        %v1441 = vld [vmem:[#allocation2] sm:$0xff]
        %v1442 = vld [vmem:[#allocation2 + $0x8] sm:$0xff]
        %v1443 = vld [vmem:[#allocation2 + $0x10] sm:$0xff]
        %v1444 = vld [vmem:[#allocation2 + $0x18] sm:$0xff]
        %v1445 = vld [vmem:[#allocation2 + $0x20] sm:$0xff]
        %v1446 = vld [vmem:[#allocation2 + $0x28] sm:$0xff]
        %v1447 = vld [vmem:[#allocation2 + $0x30] sm:$0xff]
        %v1448 = vld [vmem:[#allocation2 + $0x38] sm:$0xff]
        %1449 = vrot.lane.b32.xlu0 %v1441, 17
        %v1450 = vpop.permute.xlu0 %1449
        %1451 = vrot.lane.b32.xlu0 %v1443, 17
        %v1452 = vpop.permute.xlu0 %1451
        %1453 = vrot.lane.b32.xlu0 %v1445, 17
        %v1454 = vpop.permute.xlu0 %1453
        %1455 = vrot.lane.b32.xlu0 %v1447, 17
        %v1456 = vpop.permute.xlu0 %1455
        %1457 = vrot.lane.b32.xlu0 %v1442, 17
        %v1458 = vpop.permute.xlu0 %1457
        %1459 = vrot.lane.b32.xlu0 %v1444, 17
        %v1460 = vpop.permute.xlu0 %1459
        %1461 = vrot.lane.b32.xlu0 %v1446, 17
        %v1462 = vpop.permute.xlu0 %1461
        %1463 = vrot.lane.b32.xlu0 %v1448, 17
        %v1464 = vpop.permute.xlu0 %1463
        %v1465 = vsel %vm275, %v1450, %v1458
        %v1466 = vsel %vm275, %v1452, %v1460
        %v1467 = vsel %vm275, %v1454, %v1462
        %v1468 = vsel %vm275, %v1456, %v1464
        %v1469 = vsel %vm275, %v1458, %v1450
        %v1470 = vsel %vm275, %v1460, %v1452
        %v1471 = vsel %vm275, %v1462, %v1454
        %v1472 = vsel %vm275, %v1464, %v1456
        %v1473 = vld [vmem:[%s3] ss:$8 sm:$0x3]
        %v1475 = vlaneseq
        %v1476 = vshrl.u32 %v1475, 7
        %v1477 = vsub.s32 0, %v1476
        %v1478 = vrot.slane %v1473, %v1477
        %v1479 = vlaneseq
        %v1480 = vshrl.u32 %v1479, 7
        %v1481 = vsub.s32 1, %v1480
        %v1482 = vrot.slane %v1473, %v1481
        %v1485 = vmul.f32 %v1469, %v1478
        %v1486 = vmul.f32 %v1465, %v1482
        %v1487 = vmul.f32 %v1470, %v1478
        %v1488 = vmul.f32 %v1466, %v1482
        %v1489 = vmul.f32 %v1471, %v1478
        %v1490 = vmul.f32 %v1467, %v1482
        %v1491 = vmul.f32 %v1472, %v1478
        %v1492 = vmul.f32 %v1468, %v1482
        %v1493 = vpack.c.bf16 %v1487, %v1485
        %v1494 = vpack.c.bf16 %v1488, %v1486
        %v1495 = vpack.c.bf16 %v1491, %v1489
        %v1496 = vpack.c.bf16 %v1492, %v1490
        %1497 = vst [vmem:[#allocation3] sm:$0xff] %v1493
        %1498 = vst [vmem:[#allocation3 + $0x8] sm:$0xff] %v1494
        %1499 = vst [vmem:[#allocation3 + $0x10] sm:$0xff] %v1495
        %1500 = vst [vmem:[#allocation3 + $0x18] sm:$0xff] %v1496
        %1501 = vrot.lane.b32.xlu0 %v1441, 16
        %v1502 = vpop.permute.xlu0 %1501
        %1503 = vrot.lane.b32.xlu0 %v1443, 16
        %v1504 = vpop.permute.xlu0 %1503
        %1505 = vrot.lane.b32.xlu0 %v1445, 16
        %v1506 = vpop.permute.xlu0 %1505
        %1507 = vrot.lane.b32.xlu0 %v1447, 16
        %v1508 = vpop.permute.xlu0 %1507
        %1509 = vrot.lane.b32.xlu0 %v1442, 16
        %v1510 = vpop.permute.xlu0 %1509
        %1511 = vrot.lane.b32.xlu0 %v1444, 16
        %v1512 = vpop.permute.xlu0 %1511
        %1513 = vrot.lane.b32.xlu0 %v1446, 16
        %v1514 = vpop.permute.xlu0 %1513
        %1515 = vrot.lane.b32.xlu0 %v1448, 16
        %v1516 = vpop.permute.xlu0 %1515
        %v1517 = vsel %vm328, %v1502, %v1510
        %v1518 = vsel %vm328, %v1504, %v1512
        %v1519 = vsel %vm328, %v1506, %v1514
        %v1520 = vsel %vm328, %v1508, %v1516
        %v1521 = vsel %vm328, %v1510, %v1502
        %v1522 = vsel %vm328, %v1512, %v1504
        %v1523 = vsel %vm328, %v1514, %v1506
        %v1524 = vsel %vm328, %v1516, %v1508
        %v1525 = vld [vmem:[%s337] ss:$8 sm:$0x3]
        %v1527 = vlaneseq
        %v1528 = vshrl.u32 %v1527, 7
        %v1529 = vsub.s32 0, %v1528
        %v1530 = vrot.slane %v1525, %v1529
        %v1531 = vlaneseq
        %v1532 = vshrl.u32 %v1531, 7
        %v1533 = vsub.s32 1, %v1532
        %v1534 = vrot.slane %v1525, %v1533
        %v1537 = vmul.f32 %v1521, %v1530
        %v1538 = vmul.f32 %v1517, %v1534
        %v1539 = vmul.f32 %v1522, %v1530
        %v1540 = vmul.f32 %v1518, %v1534
        %v1541 = vmul.f32 %v1523, %v1530
        %v1542 = vmul.f32 %v1519, %v1534
        %v1543 = vmul.f32 %v1524, %v1530
        %v1544 = vmul.f32 %v1520, %v1534
        %v1545 = vpack.c.bf16 %v1539, %v1537
        %v1546 = vpack.c.bf16 %v1540, %v1538
        %v1547 = vpack.c.bf16 %v1543, %v1541
        %v1548 = vpack.c.bf16 %v1544, %v1542
        %1549 = vst [vmem:[#allocation3 + $0x20] sm:$0xff] %v1545
        %1550 = vst [vmem:[#allocation3 + $0x28] sm:$0xff] %v1546
        %1551 = vst [vmem:[#allocation3 + $0x30] sm:$0xff] %v1547
        %1552 = vst [vmem:[#allocation3 + $0x38] sm:$0xff] %v1548
        %1553 = vrot.lane.b32.xlu0 %v1441, 15
        %v1554 = vpop.permute.xlu0 %1553
        %1555 = vrot.lane.b32.xlu0 %v1443, 15
        %v1556 = vpop.permute.xlu0 %1555
        %1557 = vrot.lane.b32.xlu0 %v1445, 15
        %v1558 = vpop.permute.xlu0 %1557
        %1559 = vrot.lane.b32.xlu0 %v1447, 15
        %v1560 = vpop.permute.xlu0 %1559
        %1561 = vrot.lane.b32.xlu0 %v1442, 15
        %v1562 = vpop.permute.xlu0 %1561
        %1563 = vrot.lane.b32.xlu0 %v1444, 15
        %v1564 = vpop.permute.xlu0 %1563
        %1565 = vrot.lane.b32.xlu0 %v1446, 15
        %v1566 = vpop.permute.xlu0 %1565
        %1567 = vrot.lane.b32.xlu0 %v1448, 15
        %v1568 = vpop.permute.xlu0 %1567
        %v1569 = vsel %vm382, %v1554, %v1562
        %v1570 = vsel %vm382, %v1556, %v1564
        %v1571 = vsel %vm382, %v1558, %v1566
        %v1572 = vsel %vm382, %v1560, %v1568
        %v1573 = vsel %vm382, %v1562, %v1554
        %v1574 = vsel %vm382, %v1564, %v1556
        %v1575 = vsel %vm382, %v1566, %v1558
        %v1576 = vsel %vm382, %v1568, %v1560
        %v1577 = vld [vmem:[%s391] ss:$8 sm:$0x3]
        %v1579 = vlaneseq
        %v1580 = vshrl.u32 %v1579, 7
        %v1581 = vsub.s32 0, %v1580
        %v1582 = vrot.slane %v1577, %v1581
        %v1583 = vlaneseq
        %v1584 = vshrl.u32 %v1583, 7
        %v1585 = vsub.s32 1, %v1584
        %v1586 = vrot.slane %v1577, %v1585
        %v1589 = vmul.f32 %v1573, %v1582
        %v1590 = vmul.f32 %v1569, %v1586
        %v1591 = vmul.f32 %v1574, %v1582
        %v1592 = vmul.f32 %v1570, %v1586
        %v1593 = vmul.f32 %v1575, %v1582
        %v1594 = vmul.f32 %v1571, %v1586
        %v1595 = vmul.f32 %v1576, %v1582
        %v1596 = vmul.f32 %v1572, %v1586
        %v1597 = vpack.c.bf16 %v1591, %v1589
        %v1598 = vpack.c.bf16 %v1592, %v1590
        %v1599 = vpack.c.bf16 %v1595, %v1593
        %v1600 = vpack.c.bf16 %v1596, %v1594
        %1601 = vst [vmem:[#allocation3 + $0x40] sm:$0xff] %v1597
        %1602 = vst [vmem:[#allocation3 + $0x48] sm:$0xff] %v1598
        %1603 = vst [vmem:[#allocation3 + $0x50] sm:$0xff] %v1599
        %1604 = vst [vmem:[#allocation3 + $0x58] sm:$0xff] %v1600
        %1605 = vrot.lane.b32.xlu0 %v1441, 1
        %v1606 = vpop.permute.xlu0 %1605
        %1607 = vrot.lane.b32.xlu0 %v1443, 1
        %v1608 = vpop.permute.xlu0 %1607
        %1609 = vrot.lane.b32.xlu0 %v1445, 1
        %v1610 = vpop.permute.xlu0 %1609
        %1611 = vrot.lane.b32.xlu0 %v1447, 1
        %v1612 = vpop.permute.xlu0 %1611
        %1613 = vrot.lane.b32.xlu0 %v1442, 1
        %v1614 = vpop.permute.xlu0 %1613
        %1615 = vrot.lane.b32.xlu0 %v1444, 1
        %v1616 = vpop.permute.xlu0 %1615
        %1617 = vrot.lane.b32.xlu0 %v1446, 1
        %v1618 = vpop.permute.xlu0 %1617
        %1619 = vrot.lane.b32.xlu0 %v1448, 1
        %v1620 = vpop.permute.xlu0 %1619
        %v1621 = vsel %vm436, %v1606, %v1614
        %v1622 = vsel %vm436, %v1608, %v1616
        %v1623 = vsel %vm436, %v1610, %v1618
        %v1624 = vsel %vm436, %v1612, %v1620
        %v1625 = vsel %vm436, %v1614, %v1606
        %v1626 = vsel %vm436, %v1616, %v1608
        %v1627 = vsel %vm436, %v1618, %v1610
        %v1628 = vsel %vm436, %v1620, %v1612
        %v1629 = vld [vmem:[%s445] ss:$8 sm:$0x3]
        %v1631 = vlaneseq
        %v1632 = vshrl.u32 %v1631, 7
        %v1633 = vsub.s32 0, %v1632
        %v1634 = vrot.slane %v1629, %v1633
        %v1635 = vlaneseq
        %v1636 = vshrl.u32 %v1635, 7
        %v1637 = vsub.s32 1, %v1636
        %v1638 = vrot.slane %v1629, %v1637
        %v1641 = vmul.f32 %v1625, %v1634
        %v1642 = vmul.f32 %v1621, %v1638
        %v1643 = vmul.f32 %v1626, %v1634
        %v1644 = vmul.f32 %v1622, %v1638
        %v1645 = vmul.f32 %v1627, %v1634
        %v1646 = vmul.f32 %v1623, %v1638
        %v1647 = vmul.f32 %v1628, %v1634
        %v1648 = vmul.f32 %v1624, %v1638
        %v1649 = vpack.c.bf16 %v1643, %v1641
        %v1650 = vpack.c.bf16 %v1644, %v1642
        %v1651 = vpack.c.bf16 %v1647, %v1645
        %v1652 = vpack.c.bf16 %v1648, %v1646
        %1653 = vst [vmem:[#allocation3 + $0x60] sm:$0xff] %v1649
        %1654 = vst [vmem:[#allocation3 + $0x68] sm:$0xff] %v1650
        %1655 = vst [vmem:[#allocation3 + $0x70] sm:$0xff] %v1651
        %1656 = vst [vmem:[#allocation3 + $0x78] sm:$0xff] %v1652
        %v1657 = vpack.c.bf16 %v1443, %v1441
        %v1658 = vpack.c.bf16 %v1444, %v1442
        %v1659 = vpack.c.bf16 %v1447, %v1445
        %v1660 = vpack.c.bf16 %v1448, %v1446
        %1661 = vst [vmem:[#allocation3 + $0x80] sm:$0xff] %v1657
        %1662 = vst [vmem:[#allocation3 + $0x88] sm:$0xff] %v1658
        %1663 = vst [vmem:[#allocation3 + $0x90] sm:$0xff] %v1659
        %1664 = vst [vmem:[#allocation3 + $0x98] sm:$0xff] %v1660
        %1665 = vrot.lane.b32.xlu0 %v1441, 127
        %v1666 = vpop.permute.xlu0 %1665
        %1667 = vrot.lane.b32.xlu0 %v1443, 127
        %v1668 = vpop.permute.xlu0 %1667
        %1669 = vrot.lane.b32.xlu0 %v1445, 127
        %v1670 = vpop.permute.xlu0 %1669
        %1671 = vrot.lane.b32.xlu0 %v1447, 127
        %v1672 = vpop.permute.xlu0 %1671
        %1673 = vrot.lane.b32.xlu0 %v1442, 127
        %v1674 = vpop.permute.xlu0 %1673
        %1675 = vrot.lane.b32.xlu0 %v1444, 127
        %v1676 = vpop.permute.xlu0 %1675
        %1677 = vrot.lane.b32.xlu0 %v1446, 127
        %v1678 = vpop.permute.xlu0 %1677
        %1679 = vrot.lane.b32.xlu0 %v1448, 127
        %v1680 = vpop.permute.xlu0 %1679
        %v1681 = vsel %vm498, %v1666, %v1674
        %v1682 = vsel %vm498, %v1668, %v1676
        %v1683 = vsel %vm498, %v1670, %v1678
        %v1684 = vsel %vm498, %v1672, %v1680
        %v1685 = vsel %vm498, %v1674, %v1666
        %v1686 = vsel %vm498, %v1676, %v1668
        %v1687 = vsel %vm498, %v1678, %v1670
        %v1688 = vsel %vm498, %v1680, %v1672
        %v1689 = vld [vmem:[%s507] ss:$8 sm:$0x3]
        %v1691 = vlaneseq
        %v1692 = vshrl.u32 %v1691, 7
        %v1693 = vsub.s32 0, %v1692
        %v1694 = vrot.slane %v1689, %v1693
        %v1695 = vlaneseq
        %v1696 = vshrl.u32 %v1695, 7
        %v1697 = vsub.s32 1, %v1696
        %v1698 = vrot.slane %v1689, %v1697
        %v1701 = vmul.f32 %v1681, %v1694
        %v1702 = vmul.f32 %v1685, %v1698
        %v1703 = vmul.f32 %v1682, %v1694
        %v1704 = vmul.f32 %v1686, %v1698
        %v1705 = vmul.f32 %v1683, %v1694
        %v1706 = vmul.f32 %v1687, %v1698
        %v1707 = vmul.f32 %v1684, %v1694
        %v1708 = vmul.f32 %v1688, %v1698
        %v1709 = vpack.c.bf16 %v1703, %v1701
        %v1710 = vpack.c.bf16 %v1704, %v1702
        %v1711 = vpack.c.bf16 %v1707, %v1705
        %v1712 = vpack.c.bf16 %v1708, %v1706
        %1713 = vst [vmem:[#allocation3 + $0xa0] sm:$0xff] %v1709
        %1714 = vst [vmem:[#allocation3 + $0xa8] sm:$0xff] %v1710
        %1715 = vst [vmem:[#allocation3 + $0xb0] sm:$0xff] %v1711
        %1716 = vst [vmem:[#allocation3 + $0xb8] sm:$0xff] %v1712
        %1717 = vrot.lane.b32.xlu0 %v1441, 113
        %v1718 = vpop.permute.xlu0 %1717
        %1719 = vrot.lane.b32.xlu0 %v1443, 113
        %v1720 = vpop.permute.xlu0 %1719
        %1721 = vrot.lane.b32.xlu0 %v1445, 113
        %v1722 = vpop.permute.xlu0 %1721
        %1723 = vrot.lane.b32.xlu0 %v1447, 113
        %v1724 = vpop.permute.xlu0 %1723
        %1725 = vrot.lane.b32.xlu0 %v1442, 113
        %v1726 = vpop.permute.xlu0 %1725
        %1727 = vrot.lane.b32.xlu0 %v1444, 113
        %v1728 = vpop.permute.xlu0 %1727
        %1729 = vrot.lane.b32.xlu0 %v1446, 113
        %v1730 = vpop.permute.xlu0 %1729
        %1731 = vrot.lane.b32.xlu0 %v1448, 113
        %v1732 = vpop.permute.xlu0 %1731
        %v1733 = vsel %vm552, %v1718, %v1726
        %v1734 = vsel %vm552, %v1720, %v1728
        %v1735 = vsel %vm552, %v1722, %v1730
        %v1736 = vsel %vm552, %v1724, %v1732
        %v1737 = vsel %vm552, %v1726, %v1718
        %v1738 = vsel %vm552, %v1728, %v1720
        %v1739 = vsel %vm552, %v1730, %v1722
        %v1740 = vsel %vm552, %v1732, %v1724
        %v1741 = vld [vmem:[%s561] ss:$8 sm:$0x3]
        %v1743 = vlaneseq
        %v1744 = vshrl.u32 %v1743, 7
        %v1745 = vsub.s32 0, %v1744
        %v1746 = vrot.slane %v1741, %v1745
        %v1747 = vlaneseq
        %v1748 = vshrl.u32 %v1747, 7
        %v1749 = vsub.s32 1, %v1748
        %v1750 = vrot.slane %v1741, %v1749
        %v1753 = vmul.f32 %v1733, %v1746
        %v1754 = vmul.f32 %v1737, %v1750
        %v1755 = vmul.f32 %v1734, %v1746
        %v1756 = vmul.f32 %v1738, %v1750
        %v1757 = vmul.f32 %v1735, %v1746
        %v1758 = vmul.f32 %v1739, %v1750
        %v1759 = vmul.f32 %v1736, %v1746
        %v1760 = vmul.f32 %v1740, %v1750
        %v1761 = vpack.c.bf16 %v1755, %v1753
        %v1762 = vpack.c.bf16 %v1756, %v1754
        %v1763 = vpack.c.bf16 %v1759, %v1757
        %v1764 = vpack.c.bf16 %v1760, %v1758
        %1765 = vst [vmem:[#allocation3 + $0xc0] sm:$0xff] %v1761
        %1766 = vst [vmem:[#allocation3 + $0xc8] sm:$0xff] %v1762
        %1767 = vst [vmem:[#allocation3 + $0xd0] sm:$0xff] %v1763
        %1768 = vst [vmem:[#allocation3 + $0xd8] sm:$0xff] %v1764
        %1769 = vrot.lane.b32.xlu0 %v1441, 112
        %v1770 = vpop.permute.xlu0 %1769
        %1771 = vrot.lane.b32.xlu0 %v1443, 112
        %v1772 = vpop.permute.xlu0 %1771
        %1773 = vrot.lane.b32.xlu0 %v1445, 112
        %v1774 = vpop.permute.xlu0 %1773
        %1775 = vrot.lane.b32.xlu0 %v1447, 112
        %v1776 = vpop.permute.xlu0 %1775
        %1777 = vrot.lane.b32.xlu0 %v1442, 112
        %v1778 = vpop.permute.xlu0 %1777
        %1779 = vrot.lane.b32.xlu0 %v1444, 112
        %v1780 = vpop.permute.xlu0 %1779
        %1781 = vrot.lane.b32.xlu0 %v1446, 112
        %v1782 = vpop.permute.xlu0 %1781
        %1783 = vrot.lane.b32.xlu0 %v1448, 112
        %v1784 = vpop.permute.xlu0 %1783
        %v1785 = vsel %vm606, %v1770, %v1778
        %v1786 = vsel %vm606, %v1772, %v1780
        %v1787 = vsel %vm606, %v1774, %v1782
        %v1788 = vsel %vm606, %v1776, %v1784
        %v1789 = vsel %vm606, %v1778, %v1770
        %v1790 = vsel %vm606, %v1780, %v1772
        %v1791 = vsel %vm606, %v1782, %v1774
        %v1792 = vsel %vm606, %v1784, %v1776
        %v1793 = vld [vmem:[%s615] ss:$8 sm:$0x3]
        %v1795 = vlaneseq
        %v1796 = vshrl.u32 %v1795, 7
        %v1797 = vsub.s32 0, %v1796
        %v1798 = vrot.slane %v1793, %v1797
        %v1799 = vlaneseq
        %v1800 = vshrl.u32 %v1799, 7
        %v1801 = vsub.s32 1, %v1800
        %v1802 = vrot.slane %v1793, %v1801
        %v1805 = vmul.f32 %v1785, %v1798
        %v1806 = vmul.f32 %v1789, %v1802
        %v1807 = vmul.f32 %v1786, %v1798
        %v1808 = vmul.f32 %v1790, %v1802
        %v1809 = vmul.f32 %v1787, %v1798
        %v1810 = vmul.f32 %v1791, %v1802
        %v1811 = vmul.f32 %v1788, %v1798
        %v1812 = vmul.f32 %v1792, %v1802
        %v1813 = vpack.c.bf16 %v1807, %v1805
        %v1814 = vpack.c.bf16 %v1808, %v1806
        %v1815 = vpack.c.bf16 %v1811, %v1809
        %v1816 = vpack.c.bf16 %v1812, %v1810
        %1817 = vst [vmem:[#allocation3 + $0xe0] sm:$0xff] %v1813
        %1818 = vst [vmem:[#allocation3 + $0xe8] sm:$0xff] %v1814
        %1819 = vst [vmem:[#allocation3 + $0xf0] sm:$0xff] %v1815
        %1820 = vst [vmem:[#allocation3 + $0xf8] sm:$0xff] %v1816
        %1821 = vrot.lane.b32.xlu0 %v1441, 111
        %v1822 = vpop.permute.xlu0 %1821
        %1823 = vrot.lane.b32.xlu0 %v1443, 111
        %v1824 = vpop.permute.xlu0 %1823
        %1825 = vrot.lane.b32.xlu0 %v1445, 111
        %v1826 = vpop.permute.xlu0 %1825
        %1827 = vrot.lane.b32.xlu0 %v1447, 111
        %v1828 = vpop.permute.xlu0 %1827
        %1829 = vrot.lane.b32.xlu0 %v1442, 111
        %v1830 = vpop.permute.xlu0 %1829
        %1831 = vrot.lane.b32.xlu0 %v1444, 111
        %v1832 = vpop.permute.xlu0 %1831
        %1833 = vrot.lane.b32.xlu0 %v1446, 111
        %v1834 = vpop.permute.xlu0 %1833
        %1835 = vrot.lane.b32.xlu0 %v1448, 111
        %v1836 = vpop.permute.xlu0 %1835
        %v1837 = vsel %vm660, %v1822, %v1830
        %v1838 = vsel %vm660, %v1824, %v1832
        %v1839 = vsel %vm660, %v1826, %v1834
        %v1840 = vsel %vm660, %v1828, %v1836
        %v1841 = vsel %vm660, %v1830, %v1822
        %v1842 = vsel %vm660, %v1832, %v1824
        %v1843 = vsel %vm660, %v1834, %v1826
        %v1844 = vsel %vm660, %v1836, %v1828
        %v1845 = vld [vmem:[%s669] ss:$8 sm:$0x3]
        %v1847 = vlaneseq
        %v1848 = vshrl.u32 %v1847, 7
        %v1849 = vsub.s32 0, %v1848
        %v1850 = vrot.slane %v1845, %v1849
        %v1851 = vlaneseq
        %v1852 = vshrl.u32 %v1851, 7
        %v1853 = vsub.s32 1, %v1852
        %v1854 = vrot.slane %v1845, %v1853
        %v1857 = vmul.f32 %v1837, %v1850
        %v1858 = vmul.f32 %v1841, %v1854
        %v1859 = vmul.f32 %v1838, %v1850
        %v1860 = vmul.f32 %v1842, %v1854
        %v1861 = vmul.f32 %v1839, %v1850
        %v1862 = vmul.f32 %v1843, %v1854
        %v1863 = vmul.f32 %v1840, %v1850
        %v1864 = vmul.f32 %v1844, %v1854
        %v1865 = vpack.c.bf16 %v1859, %v1857
        %v1866 = vpack.c.bf16 %v1860, %v1858
        %v1867 = vpack.c.bf16 %v1863, %v1861
        %v1868 = vpack.c.bf16 %v1864, %v1862
        %1869 = vst [vmem:[#allocation3 + $0x100] sm:$0xff] %v1865
        %1870 = vst [vmem:[#allocation3 + $0x108] sm:$0xff] %v1866
        %1871 = vst [vmem:[#allocation3 + $0x110] sm:$0xff] %v1867
        %1872 = vst [vmem:[#allocation3 + $0x118] sm:$0xff] %v1868
        %s1873 = scalar_lea.vmem %s1, 192
        %v1874 = vld [vmem:[%s1873] sm:$0xff]
        %v1875 = vld [vmem:[%s1873 + $0x8] sm:$0xf]
        %v1876 = vld [vmem:[%s1873 + $0xc] sm:$0xff]
        %v1877 = vld [vmem:[%s1873 + $0x14] sm:$0xf]
        %v1878 = vld [vmem:[%s1873 + $0x18] sm:$0xff]
        %v1879 = vld [vmem:[%s1873 + $0x20] sm:$0xf]
        %v1880 = vld [vmem:[%s1873 + $0x24] sm:$0xff]
        %v1881 = vld [vmem:[%s1873 + $0x2c] sm:$0xf]
        %v1882 = vld [vmem:[%s1873 + $0x30] sm:$0xff]
        %v1883 = vld [vmem:[%s1873 + $0x38] sm:$0xf]
        %v1884 = vld [vmem:[%s1873 + $0x3c] sm:$0xff]
        %v1885 = vld [vmem:[%s1873 + $0x44] sm:$0xf]
        %v1886 = vld [vmem:[%s1873 + $0x48] sm:$0xff]
        %v1887 = vld [vmem:[%s1873 + $0x50] sm:$0xf]
        %v1888 = vld [vmem:[%s1873 + $0x54] sm:$0xff]
        %v1889 = vld [vmem:[%s1873 + $0x5c] sm:$0xf]
        %v1890 = vld [vmem:[%s1873 + $0x60] sm:$0xff]
        %v1891 = vld [vmem:[%s1873 + $0x68] sm:$0xf]
        %v1892 = vld [vmem:[%s1873 + $0x6c] sm:$0xff]
        %v1893 = vld [vmem:[%s1873 + $0x74] sm:$0xf]
        %v1894 = vld [vmem:[%s1873 + $0x78] sm:$0xff]
        %v1895 = vld [vmem:[%s1873 + $0x80] sm:$0xf]
        %v1896 = vld [vmem:[%s1873 + $0x84] sm:$0xff]
        %v1897 = vld [vmem:[%s1873 + $0x8c] sm:$0xf]
        %v1898 = vld [vmem:[%s1873 + $0x90] sm:$0xff]
        %v1899 = vld [vmem:[%s1873 + $0x98] sm:$0xf]
        %v1900 = vld [vmem:[%s1873 + $0x9c] sm:$0xff]
        %v1901 = vld [vmem:[%s1873 + $0xa4] sm:$0xf]
        %v1902 = vld [vmem:[%s1873 + $0xa8] sm:$0xff]
        %v1903 = vld [vmem:[%s1873 + $0xb0] sm:$0xf]
        %v1904 = vld [vmem:[%s1873 + $0xb4] sm:$0xff]
        %v1905 = vld [vmem:[%s1873 + $0xbc] sm:$0xf]
        %v1906 = vld [vmem:[#allocation3] sm:$0xff]
        %v1907 = vld [vmem:[#allocation3 + $0x8] sm:$0xff]
        %v1908 = vld [vmem:[#allocation3 + $0x10] sm:$0xff]
        %v1909 = vld [vmem:[#allocation3 + $0x18] sm:$0xff]
        %v1910 = vld [vmem:[#allocation3 + $0x20] sm:$0xff]
        %v1911 = vld [vmem:[#allocation3 + $0x28] sm:$0xff]
        %v1912 = vld [vmem:[#allocation3 + $0x30] sm:$0xff]
        %v1913 = vld [vmem:[#allocation3 + $0x38] sm:$0xff]
        %v1914 = vld [vmem:[#allocation3 + $0x40] sm:$0xff]
        %v1915 = vld [vmem:[#allocation3 + $0x48] sm:$0xff]
        %v1916 = vld [vmem:[#allocation3 + $0x50] sm:$0xff]
        %v1917 = vld [vmem:[#allocation3 + $0x58] sm:$0xff]
        %v1918 = vld [vmem:[#allocation3 + $0x60] sm:$0xff]
        %v1919 = vld [vmem:[#allocation3 + $0x68] sm:$0xff]
        %v1920 = vld [vmem:[#allocation3 + $0x70] sm:$0xff]
        %v1921 = vld [vmem:[#allocation3 + $0x78] sm:$0xff]
        %v1922 = vld [vmem:[#allocation3 + $0x80] sm:$0xff]
        %v1923 = vld [vmem:[#allocation3 + $0x88] sm:$0xff]
        %v1924 = vld [vmem:[#allocation3 + $0x90] sm:$0xff]
        %v1925 = vld [vmem:[#allocation3 + $0x98] sm:$0xff]
        %v1926 = vld [vmem:[#allocation3 + $0xa0] sm:$0xff]
        %v1927 = vld [vmem:[#allocation3 + $0xa8] sm:$0xff]
        %v1928 = vld [vmem:[#allocation3 + $0xb0] sm:$0xff]
        %v1929 = vld [vmem:[#allocation3 + $0xb8] sm:$0xff]
        %v1930 = vld [vmem:[#allocation3 + $0xc0] sm:$0xff]
        %v1931 = vld [vmem:[#allocation3 + $0xc8] sm:$0xff]
        %v1932 = vld [vmem:[#allocation3 + $0xd0] sm:$0xff]
        %v1933 = vld [vmem:[#allocation3 + $0xd8] sm:$0xff]
        %v1934 = vld [vmem:[#allocation3 + $0xe0] sm:$0xff]
        %v1935 = vld [vmem:[#allocation3 + $0xe8] sm:$0xff]
        %v1936 = vld [vmem:[#allocation3 + $0xf0] sm:$0xff]
        %v1937 = vld [vmem:[#allocation3 + $0xf8] sm:$0xff]
        %v1938 = vld [vmem:[#allocation3 + $0x100] sm:$0xff]
        %v1939 = vld [vmem:[#allocation3 + $0x108] sm:$0xff]
        %v1940 = vld [vmem:[#allocation3 + $0x110] sm:$0xff]
        %v1941 = vld [vmem:[#allocation3 + $0x118] sm:$0xff]
        %s1942 = scalar_lea.vmem %s2, 128
        %v1943 = vld [vmem:[%s1942] sm:$0xff]
        %v1944 = vld [vmem:[%s1942 + $0x8] sm:$0xff]
        %v1945 = vld [vmem:[%s1942 + $0x10] sm:$0xff]
        %v1946 = vld [vmem:[%s1942 + $0x18] sm:$0xff]
        %v1947 = vld [vmem:[%s1942 + $0x20] sm:$0xff]
        %v1948 = vld [vmem:[%s1942 + $0x28] sm:$0xff]
        %v1949 = vld [vmem:[%s1942 + $0x30] sm:$0xff]
        %v1950 = vld [vmem:[%s1942 + $0x38] sm:$0xff]
        %v1951 = vld [vmem:[%s1942 + $0x40] sm:$0xff]
        %v1952 = vld [vmem:[%s1942 + $0x48] sm:$0xff]
        %v1953 = vld [vmem:[%s1942 + $0x50] sm:$0xff]
        %v1954 = vld [vmem:[%s1942 + $0x58] sm:$0xff]
        %v1955 = vld [vmem:[%s1942 + $0x60] sm:$0xff]
        %v1956 = vld [vmem:[%s1942 + $0x68] sm:$0xff]
        %v1957 = vld [vmem:[%s1942 + $0x70] sm:$0xff]
        %v1958 = vld [vmem:[%s1942 + $0x78] sm:$0xff]
        %1960 = vset.pattern.permute.xlu0 0
        %1961 = vperm.xlu0 %1960, %v1943
        %v1962 = vpop.permute.xlu0 %1961
        %1965 = vset.pattern.permute.xlu0 0
        %1966 = vperm.xlu0 %1965, %v1944
        %v1967 = vpop.permute.xlu0 %1966
        %1970 = vset.pattern.permute.xlu0 0
        %1971 = vperm.xlu0 %1970, %v1945
        %v1972 = vpop.permute.xlu0 %1971
        %1975 = vset.pattern.permute.xlu0 0
        %1976 = vperm.xlu0 %1975, %v1946
        %v1977 = vpop.permute.xlu0 %1976
        %1980 = vset.pattern.permute.xlu0 0
        %1981 = vperm.xlu0 %1980, %v1947
        %v1982 = vpop.permute.xlu0 %1981
        %1985 = vset.pattern.permute.xlu0 0
        %1986 = vperm.xlu0 %1985, %v1948
        %v1987 = vpop.permute.xlu0 %1986
        %1990 = vset.pattern.permute.xlu0 0
        %1991 = vperm.xlu0 %1990, %v1949
        %v1992 = vpop.permute.xlu0 %1991
        %1995 = vset.pattern.permute.xlu0 0
        %1996 = vperm.xlu0 %1995, %v1950
        %v1997 = vpop.permute.xlu0 %1996
        %2000 = vset.pattern.permute.xlu0 0
        %2001 = vperm.xlu0 %2000, %v1951
        %v2002 = vpop.permute.xlu0 %2001
        %2005 = vset.pattern.permute.xlu0 0
        %2006 = vperm.xlu0 %2005, %v1952
        %v2007 = vpop.permute.xlu0 %2006
        %2010 = vset.pattern.permute.xlu0 0
        %2011 = vperm.xlu0 %2010, %v1953
        %v2012 = vpop.permute.xlu0 %2011
        %2015 = vset.pattern.permute.xlu0 0
        %2016 = vperm.xlu0 %2015, %v1954
        %v2017 = vpop.permute.xlu0 %2016
        %2020 = vset.pattern.permute.xlu0 0
        %2021 = vperm.xlu0 %2020, %v1955
        %v2022 = vpop.permute.xlu0 %2021
        %2025 = vset.pattern.permute.xlu0 0
        %2026 = vperm.xlu0 %2025, %v1956
        %v2027 = vpop.permute.xlu0 %2026
        %2030 = vset.pattern.permute.xlu0 0
        %2031 = vperm.xlu0 %2030, %v1957
        %v2032 = vpop.permute.xlu0 %2031
        %2035 = vset.pattern.permute.xlu0 0
        %2036 = vperm.xlu0 %2035, %v1958
        %v2037 = vpop.permute.xlu0 %2036
        %v2071 = vunpack.c.l.b16 %v1874
        %v2072 = vunpack.c.h.b16 %v1874
        %v2073 = vunpack.c.l.b16 %v1875
        %v2074 = vunpack.c.l.b16 %v1876
        %v2075 = vunpack.c.h.b16 %v1876
        %v2076 = vunpack.c.l.b16 %v1877
        %v2077 = vunpack.c.l.b16 %v1878
        %v2078 = vunpack.c.h.b16 %v1878
        %v2079 = vunpack.c.l.b16 %v1879
        %v2080 = vunpack.c.l.b16 %v1880
        %v2081 = vunpack.c.h.b16 %v1880
        %v2082 = vunpack.c.l.b16 %v1881
        %v2083 = vunpack.c.l.b16 %v1882
        %v2084 = vunpack.c.h.b16 %v1882
        %v2085 = vunpack.c.l.b16 %v1883
        %v2086 = vunpack.c.l.b16 %v1884
        %v2087 = vunpack.c.h.b16 %v1884
        %v2088 = vunpack.c.l.b16 %v1885
        %v2089 = vunpack.c.l.b16 %v1886
        %v2090 = vunpack.c.h.b16 %v1886
        %v2091 = vunpack.c.l.b16 %v1887
        %v2092 = vunpack.c.l.b16 %v1888
        %v2093 = vunpack.c.h.b16 %v1888
        %v2094 = vunpack.c.l.b16 %v1889
        %v2095 = vunpack.c.l.b16 %v1890
        %v2096 = vunpack.c.h.b16 %v1890
        %v2097 = vunpack.c.l.b16 %v1891
        %v2098 = vunpack.c.l.b16 %v1892
        %v2099 = vunpack.c.h.b16 %v1892
        %v2100 = vunpack.c.l.b16 %v1893
        %v2101 = vunpack.c.l.b16 %v1894
        %v2102 = vunpack.c.h.b16 %v1894
        %v2103 = vunpack.c.l.b16 %v1895
        %v2104 = vunpack.c.l.b16 %v1896
        %v2105 = vunpack.c.h.b16 %v1896
        %v2106 = vunpack.c.l.b16 %v1897
        %v2107 = vunpack.c.l.b16 %v1898
        %v2108 = vunpack.c.h.b16 %v1898
        %v2109 = vunpack.c.l.b16 %v1899
        %v2110 = vunpack.c.l.b16 %v1900
        %v2111 = vunpack.c.h.b16 %v1900
        %v2112 = vunpack.c.l.b16 %v1901
        %v2113 = vunpack.c.l.b16 %v1902
        %v2114 = vunpack.c.h.b16 %v1902
        %v2115 = vunpack.c.l.b16 %v1903
        %v2116 = vunpack.c.l.b16 %v1904
        %v2117 = vunpack.c.h.b16 %v1904
        %v2118 = vunpack.c.l.b16 %v1905
        %v2119 = vpack.c.b16 %v2074, %v2071
        %v2120 = vpack.c.b16 %v2075, %v2072
        %v2121 = vpack.c.b16 %v2076, %v2073
        %v2122 = vpack.c.b16 %v2080, %v2077
        %v2123 = vpack.c.b16 %v2081, %v2078
        %v2124 = vpack.c.b16 %v2082, %v2079
        %v2125 = vpack.c.b16 %v2086, %v2083
        %v2126 = vpack.c.b16 %v2087, %v2084
        %v2127 = vpack.c.b16 %v2088, %v2085
        %v2128 = vpack.c.b16 %v2092, %v2089
        %v2129 = vpack.c.b16 %v2093, %v2090
        %v2130 = vpack.c.b16 %v2094, %v2091
        %v2131 = vpack.c.b16 %v2098, %v2095
        %v2132 = vpack.c.b16 %v2099, %v2096
        %v2133 = vpack.c.b16 %v2100, %v2097
        %v2134 = vpack.c.b16 %v2104, %v2101
        %v2135 = vpack.c.b16 %v2105, %v2102
        %v2136 = vpack.c.b16 %v2106, %v2103
        %v2137 = vpack.c.b16 %v2110, %v2107
        %v2138 = vpack.c.b16 %v2111, %v2108
        %v2139 = vpack.c.b16 %v2112, %v2109
        %v2140 = vpack.c.b16 %v2116, %v2113
        %v2141 = vpack.c.b16 %v2117, %v2114
        %v2142 = vpack.c.b16 %v2118, %v2115
        %v2160 = vsel %vm982, %v2121, 0
        %v2163 = vsel %vm982, %v2124, 0
        %v2166 = vsel %vm982, %v2127, 0
        %v2169 = vsel %vm982, %v2130, 0
        %v2172 = vsel %vm982, %v2133, 0
        %v2175 = vsel %vm982, %v2136, 0
        %v2178 = vsel %vm982, %v2139, 0
        %v2181 = vsel %vm982, %v2142, 0
        %2183 = vmatprep.subr.bf16.mxu0 %v1907
        %2184 = vmatpush1.bf16.msra.mxu0 %v1906
        %2185 = vmatprep.subr.bf16.mxu0 %v1909
        %2186 = vmatpush1.bf16.msra.mxu0 %v1908
        %2187 = vmatprep.subr.bf16.mxu0 %v1911
        %2188 = vmatpush1.bf16.msra.mxu0 %v1910
        %2189 = vmatprep.subr.bf16.mxu0 %v1913
        %2190 = vmatpush1.bf16.msra.mxu0 %v1912
        %2191 = vmatprep.subr.bf16.mxu0 %v1915
        %2192 = vmatpush1.bf16.msra.mxu0 %v1914
        %2193 = vmatprep.subr.bf16.mxu0 %v1917
        %2194 = vmatpush1.bf16.msra.mxu0 %v1916
        %2195 = vmatprep.subr.bf16.mxu0 %v1919
        %2196 = vmatpush1.bf16.msra.mxu0 %v1918
        %2197 = vmatprep.subr.bf16.mxu0 %v1921
        %2198 = vmatpush1.bf16.msra.mxu0 %v1920
        %2199 = vmatprep.subr.bf16.mxu0 %v1923
        %2200 = vmatpush1.bf16.msra.mxu0 %v1922
        %2201 = vmatprep.subr.bf16.mxu0 %v1925
        %2202 = vmatpush1.bf16.msra.mxu0 %v1924
        %2203 = vmatprep.subr.bf16.mxu0 %v1927
        %2204 = vmatpush1.bf16.msra.mxu0 %v1926
        %2205 = vmatprep.subr.bf16.mxu0 %v1929
        %2206 = vmatpush1.bf16.msra.mxu0 %v1928
        %2207 = vmatprep.subr.bf16.mxu0 %v1931
        %2208 = vmatpush1.bf16.msra.mxu0 %v1930
        %2209 = vmatprep.subr.bf16.mxu0 %v1933
        %2210 = vmatpush1.bf16.msra.mxu0 %v1932
        %2211 = vmatprep.subr.bf16.mxu0 %v1935
        %2212 = vmatpush1.bf16.msra.mxu0 %v1934
        %2213 = vmatprep.subr.bf16.mxu0 %v1937
        %2214 = vmatpush1.bf16.msra.mxu0 %v1936
        %2215 = vmatprep.mubr.bf16.mxu0 %v2120
        %2216 = vmatmul.mubr.bf16.gmra.mrb[0].mxu0 %v2119
        %v2217 = vpop.f32.mrb[0].mxu0
        %v2218 = vadd.f32 %v1962, %v2217
        %v2219 = vpop.f32.mrb[0].mxu0
        %v2220 = vadd.f32 %v1962, %v2219
        %v2221 = vpop.f32.mrb[0].mxu0
        %v2222 = vadd.f32 %v1967, %v2221
        %v2223 = vpop.f32.mrb[0].mxu0
        %v2224 = vadd.f32 %v1967, %v2223
        %2225 = vmatprep.mubr.bf16.mxu0 %v2123
        %2226 = vmatmul.mubr.bf16.gmra.mrb[0].mxu0 %v2122
        %v2227 = vpop.f32.mrb[0].mxu0
        %v2228 = vadd.f32 %v1972, %v2227
        %v2229 = vpop.f32.mrb[0].mxu0
        %v2230 = vadd.f32 %v1972, %v2229
        %v2231 = vpop.f32.mrb[0].mxu0
        %v2232 = vadd.f32 %v1977, %v2231
        %v2233 = vpop.f32.mrb[0].mxu0
        %v2234 = vadd.f32 %v1977, %v2233
        %2235 = vmatprep.mubr.bf16.mxu0 %v2126
        %2236 = vmatmul.mubr.bf16.gmra.mrb[0].mxu0 %v2125
        %v2237 = vpop.f32.mrb[0].mxu0
        %v2238 = vadd.f32 %v1982, %v2237
        %v2239 = vpop.f32.mrb[0].mxu0
        %v2240 = vadd.f32 %v1982, %v2239
        %v2241 = vpop.f32.mrb[0].mxu0
        %v2242 = vadd.f32 %v1987, %v2241
        %v2243 = vpop.f32.mrb[0].mxu0
        %v2244 = vadd.f32 %v1987, %v2243
        %2245 = vmatprep.mubr.bf16.mxu0 %v2129
        %2246 = vmatmul.mubr.bf16.gmra.mrb[0].mxu0 %v2128
        %v2247 = vpop.f32.mrb[0].mxu0
        %v2248 = vadd.f32 %v1992, %v2247
        %v2249 = vpop.f32.mrb[0].mxu0
        %v2250 = vadd.f32 %v1992, %v2249
        %v2251 = vpop.f32.mrb[0].mxu0
        %v2252 = vadd.f32 %v1997, %v2251
        %v2253 = vpop.f32.mrb[0].mxu0
        %v2254 = vadd.f32 %v1997, %v2253
        %2255 = vmatprep.mubr.bf16.mxu0 %v2132
        %2256 = vmatmul.mubr.bf16.gmra.mrb[0].mxu0 %v2131
        %v2257 = vpop.f32.mrb[0].mxu0
        %v2258 = vadd.f32 %v2002, %v2257
        %v2259 = vpop.f32.mrb[0].mxu0
        %v2260 = vadd.f32 %v2002, %v2259
        %v2261 = vpop.f32.mrb[0].mxu0
        %v2262 = vadd.f32 %v2007, %v2261
        %v2263 = vpop.f32.mrb[0].mxu0
        %v2264 = vadd.f32 %v2007, %v2263
        %2265 = vmatprep.mubr.bf16.mxu0 %v2135
        %2266 = vmatmul.mubr.bf16.gmra.mrb[0].mxu0 %v2134
        %v2267 = vpop.f32.mrb[0].mxu0
        %v2268 = vadd.f32 %v2012, %v2267
        %v2269 = vpop.f32.mrb[0].mxu0
        %v2270 = vadd.f32 %v2012, %v2269
        %v2271 = vpop.f32.mrb[0].mxu0
        %v2272 = vadd.f32 %v2017, %v2271
        %v2273 = vpop.f32.mrb[0].mxu0
        %v2274 = vadd.f32 %v2017, %v2273
        %2275 = vmatprep.mubr.bf16.mxu0 %v2138
        %2276 = vmatmul.mubr.bf16.gmra.mrb[0].mxu0 %v2137
        %v2277 = vpop.f32.mrb[0].mxu0
        %v2278 = vadd.f32 %v2022, %v2277
        %v2279 = vpop.f32.mrb[0].mxu0
        %v2280 = vadd.f32 %v2022, %v2279
        %v2281 = vpop.f32.mrb[0].mxu0
        %v2282 = vadd.f32 %v2027, %v2281
        %v2283 = vpop.f32.mrb[0].mxu0
        %v2284 = vadd.f32 %v2027, %v2283
        %2285 = vmatprep.mubr.bf16.mxu0 %v2141
        %2286 = vmatmul.mubr.bf16.gmra.mrb[0].mxu0 %v2140
        %v2287 = vpop.f32.mrb[0].mxu0
        %v2288 = vadd.f32 %v2032, %v2287
        %v2289 = vpop.f32.mrb[0].mxu0
        %v2290 = vadd.f32 %v2032, %v2289
        %v2291 = vpop.f32.mrb[0].mxu0
        %v2292 = vadd.f32 %v2037, %v2291
        %v2293 = vpop.f32.mrb[0].mxu0
        %v2294 = vadd.f32 %v2037, %v2293
        %2295 = vdwg.mxu0
        %2296 = vmatprep.subr.bf16.mxu0 %v1939
        %2297 = vmatpush1.bf16.msra.mxu0 %v1938
        %2298 = vmatprep.subr.bf16.mxu0 %v1941
        %2299 = vmatpush1.bf16.msra.mxu0 %v1940
        %2300 = vmatprep.subr.bf16.mxu0 0
        %2301 = vmatpush1.bf16.msra.mxu0 0
        %2302 = vmatprep.subr.bf16.mxu0 0
        %2303 = vmatpush1.bf16.msra.mxu0 0
        %2304 = vmatprep.subr.bf16.mxu0 0
        %2305 = vmatpush1.bf16.msra.mxu0 0
        %2306 = vmatprep.subr.bf16.mxu0 0
        %2307 = vmatpush1.bf16.msra.mxu0 0
        %2308 = vmatprep.subr.bf16.mxu0 0
        %2309 = vmatpush1.bf16.msra.mxu0 0
        %2310 = vmatprep.subr.bf16.mxu0 0
        %2311 = vmatpush1.bf16.msra.mxu0 0
        %2312 = vmatprep.subr.bf16.mxu0 0
        %2313 = vmatpush1.bf16.msra.mxu0 0
        %2314 = vmatprep.subr.bf16.mxu0 0
        %2315 = vmatpush1.bf16.msra.mxu0 0
        %2316 = vmatprep.subr.bf16.mxu0 0
        %2317 = vmatpush1.bf16.msra.mxu0 0
        %2318 = vmatprep.subr.bf16.mxu0 0
        %2319 = vmatpush1.bf16.msra.mxu0 0
        %2320 = vmatprep.subr.bf16.mxu0 0
        %2321 = vmatpush1.bf16.msra.mxu0 0
        %2322 = vmatprep.subr.bf16.mxu0 0
        %2323 = vmatpush1.bf16.msra.mxu0 0
        %2324 = vmatprep.subr.bf16.mxu0 0
        %2325 = vmatpush1.bf16.msra.mxu0 0
        %2326 = vmatprep.subr.bf16.mxu0 0
        %2327 = vmatpush1.bf16.msra.mxu0 0
        %2328 = vmatprep.mubr.bf16.mxu0 0
        %2329 = vmatmul.mubr.bf16.gmra.mrb[0].mxu0 %v2160
        %v2330 = vpop.f32.mrb[0].mxu0
        %v2331 = vadd.f32 %v2218, %v2330
        %v2332 = vpop.f32.mrb[0].mxu0
        %v2333 = vadd.f32 %v2220, %v2332
        %v2334 = vpop.f32.mrb[0].mxu0
        %v2335 = vadd.f32 %v2222, %v2334
        %v2336 = vpop.f32.mrb[0].mxu0
        %v2337 = vadd.f32 %v2224, %v2336
        %2338 = vmatprep.mubr.bf16.mxu0 0
        %2339 = vmatmul.mubr.bf16.gmra.mrb[0].mxu0 %v2163
        %v2340 = vpop.f32.mrb[0].mxu0
        %v2341 = vadd.f32 %v2228, %v2340
        %v2342 = vpop.f32.mrb[0].mxu0
        %v2343 = vadd.f32 %v2230, %v2342
        %v2344 = vpop.f32.mrb[0].mxu0
        %v2345 = vadd.f32 %v2232, %v2344
        %v2346 = vpop.f32.mrb[0].mxu0
        %v2347 = vadd.f32 %v2234, %v2346
        %2348 = vmatprep.mubr.bf16.mxu0 0
        %2349 = vmatmul.mubr.bf16.gmra.mrb[0].mxu0 %v2166
        %v2350 = vpop.f32.mrb[0].mxu0
        %v2351 = vadd.f32 %v2238, %v2350
        %v2352 = vpop.f32.mrb[0].mxu0
        %v2353 = vadd.f32 %v2240, %v2352
        %v2354 = vpop.f32.mrb[0].mxu0
        %v2355 = vadd.f32 %v2242, %v2354
        %v2356 = vpop.f32.mrb[0].mxu0
        %v2357 = vadd.f32 %v2244, %v2356
        %2358 = vmatprep.mubr.bf16.mxu0 0
        %2359 = vmatmul.mubr.bf16.gmra.mrb[0].mxu0 %v2169
        %v2360 = vpop.f32.mrb[0].mxu0
        %v2361 = vadd.f32 %v2248, %v2360
        %v2362 = vpop.f32.mrb[0].mxu0
        %v2363 = vadd.f32 %v2250, %v2362
        %v2364 = vpop.f32.mrb[0].mxu0
        %v2365 = vadd.f32 %v2252, %v2364
        %v2366 = vpop.f32.mrb[0].mxu0
        %v2367 = vadd.f32 %v2254, %v2366
        %2368 = vmatprep.mubr.bf16.mxu0 0
        %2369 = vmatmul.mubr.bf16.gmra.mrb[0].mxu0 %v2172
        %v2370 = vpop.f32.mrb[0].mxu0
        %v2371 = vadd.f32 %v2258, %v2370
        %v2372 = vpop.f32.mrb[0].mxu0
        %v2373 = vadd.f32 %v2260, %v2372
        %v2374 = vpop.f32.mrb[0].mxu0
        %v2375 = vadd.f32 %v2262, %v2374
        %v2376 = vpop.f32.mrb[0].mxu0
        %v2377 = vadd.f32 %v2264, %v2376
        %2378 = vmatprep.mubr.bf16.mxu0 0
        %2379 = vmatmul.mubr.bf16.gmra.mrb[0].mxu0 %v2175
        %v2380 = vpop.f32.mrb[0].mxu0
        %v2381 = vadd.f32 %v2268, %v2380
        %v2382 = vpop.f32.mrb[0].mxu0
        %v2383 = vadd.f32 %v2270, %v2382
        %v2384 = vpop.f32.mrb[0].mxu0
        %v2385 = vadd.f32 %v2272, %v2384
        %v2386 = vpop.f32.mrb[0].mxu0
        %v2387 = vadd.f32 %v2274, %v2386
        %2388 = vmatprep.mubr.bf16.mxu0 0
        %2389 = vmatmul.mubr.bf16.gmra.mrb[0].mxu0 %v2178
        %v2390 = vpop.f32.mrb[0].mxu0
        %v2391 = vadd.f32 %v2278, %v2390
        %v2392 = vpop.f32.mrb[0].mxu0
        %v2393 = vadd.f32 %v2280, %v2392
        %v2394 = vpop.f32.mrb[0].mxu0
        %v2395 = vadd.f32 %v2282, %v2394
        %v2396 = vpop.f32.mrb[0].mxu0
        %v2397 = vadd.f32 %v2284, %v2396
        %2398 = vmatprep.mubr.bf16.mxu0 0
        %2399 = vmatmul.mubr.bf16.gmra.mrb[0].mxu0 %v2181
        %v2400 = vpop.f32.mrb[0].mxu0
        %v2401 = vadd.f32 %v2288, %v2400
        %v2402 = vpop.f32.mrb[0].mxu0
        %v2403 = vadd.f32 %v2290, %v2402
        %v2404 = vpop.f32.mrb[0].mxu0
        %v2405 = vadd.f32 %v2292, %v2404
        %v2406 = vpop.f32.mrb[0].mxu0
        %v2407 = vadd.f32 %v2294, %v2406
        %2408 = vdwg.mxu0
        %2409 = vst [vmem:[#allocation4] sm:$0xff] %v2331
        %2410 = vst [vmem:[#allocation4 + $0x8] sm:$0xff] %v2333
        %2411 = vst [vmem:[#allocation4 + $0x10] sm:$0xff] %v2335
        %2412 = vst [vmem:[#allocation4 + $0x18] sm:$0xff] %v2337
        %2413 = vst [vmem:[#allocation4 + $0x20] sm:$0xff] %v2341
        %2414 = vst [vmem:[#allocation4 + $0x28] sm:$0xff] %v2343
        %2415 = vst [vmem:[#allocation4 + $0x30] sm:$0xff] %v2345
        %2416 = vst [vmem:[#allocation4 + $0x38] sm:$0xff] %v2347
        %2417 = vst [vmem:[#allocation4 + $0x40] sm:$0xff] %v2351
        %2418 = vst [vmem:[#allocation4 + $0x48] sm:$0xff] %v2353
        %2419 = vst [vmem:[#allocation4 + $0x50] sm:$0xff] %v2355
        %2420 = vst [vmem:[#allocation4 + $0x58] sm:$0xff] %v2357
        %2421 = vst [vmem:[#allocation4 + $0x60] sm:$0xff] %v2361
        %2422 = vst [vmem:[#allocation4 + $0x68] sm:$0xff] %v2363
        %2423 = vst [vmem:[#allocation4 + $0x70] sm:$0xff] %v2365
        %2424 = vst [vmem:[#allocation4 + $0x78] sm:$0xff] %v2367
        %2425 = vst [vmem:[#allocation4 + $0x80] sm:$0xff] %v2371
        %2426 = vst [vmem:[#allocation4 + $0x88] sm:$0xff] %v2373
        %2427 = vst [vmem:[#allocation4 + $0x90] sm:$0xff] %v2375
        %2428 = vst [vmem:[#allocation4 + $0x98] sm:$0xff] %v2377
        %2429 = vst [vmem:[#allocation4 + $0xa0] sm:$0xff] %v2381
        %2430 = vst [vmem:[#allocation4 + $0xa8] sm:$0xff] %v2383
        %2431 = vst [vmem:[#allocation4 + $0xb0] sm:$0xff] %v2385
        %2432 = vst [vmem:[#allocation4 + $0xb8] sm:$0xff] %v2387
        %2433 = vst [vmem:[#allocation4 + $0xc0] sm:$0xff] %v2391
        %2434 = vst [vmem:[#allocation4 + $0xc8] sm:$0xff] %v2393
        %2435 = vst [vmem:[#allocation4 + $0xd0] sm:$0xff] %v2395
        %2436 = vst [vmem:[#allocation4 + $0xd8] sm:$0xff] %v2397
        %2437 = vst [vmem:[#allocation4 + $0xe0] sm:$0xff] %v2401
        %2438 = vst [vmem:[#allocation4 + $0xe8] sm:$0xff] %v2403
        %2439 = vst [vmem:[#allocation4 + $0xf0] sm:$0xff] %v2405
        %2440 = vst [vmem:[#allocation4 + $0xf8] sm:$0xff] %v2407
        %v2441 = vld [vmem:[#allocation4] sm:$0xff]
        %v2442 = vld [vmem:[#allocation4 + $0x8] sm:$0xff]
        %v2443 = vld [vmem:[#allocation4 + $0x10] sm:$0xff]
        %v2444 = vld [vmem:[#allocation4 + $0x18] sm:$0xff]
        %v2445 = vld [vmem:[#allocation4 + $0x20] sm:$0xff]
        %v2446 = vld [vmem:[#allocation4 + $0x28] sm:$0xff]
        %v2447 = vld [vmem:[#allocation4 + $0x30] sm:$0xff]
        %v2448 = vld [vmem:[#allocation4 + $0x38] sm:$0xff]
        %v2449 = vxor.u32 %v2441, 2147483648
        %v2450 = vxor.u32 %v2442, 2147483648
        %v2451 = vxor.u32 %v2443, 2147483648
        %v2452 = vxor.u32 %v2444, 2147483648
        %v2453 = vxor.u32 %v2445, 2147483648
        %v2454 = vxor.u32 %v2446, 2147483648
        %v2455 = vxor.u32 %v2447, 2147483648
        %v2456 = vxor.u32 %v2448, 2147483648
        %v2457 = vmul.f32 %v2449, 1.442695
        %v2458 = vpow.pop %v2457
        %v2459 = vmul.f32 %v2450, 1.442695
        %v2460 = vpow.pop %v2459
        %v2461 = vmul.f32 %v2451, 1.442695
        %v2462 = vpow.pop %v2461
        %v2463 = vmul.f32 %v2452, 1.442695
        %v2464 = vpow.pop %v2463
        %v2465 = vmul.f32 %v2453, 1.442695
        %v2466 = vpow.pop %v2465
        %v2467 = vmul.f32 %v2454, 1.442695
        %v2468 = vpow.pop %v2467
        %v2469 = vmul.f32 %v2455, 1.442695
        %v2470 = vpow.pop %v2469
        %v2471 = vmul.f32 %v2456, 1.442695
        %v2472 = vpow.pop %v2471
        %v2473 = vadd.f32 %v2458, 1.0
        %v2474 = vadd.f32 %v2460, 1.0
        %v2475 = vadd.f32 %v2462, 1.0
        %v2476 = vadd.f32 %v2464, 1.0
        %v2477 = vadd.f32 %v2466, 1.0
        %v2478 = vadd.f32 %v2468, 1.0
        %v2479 = vadd.f32 %v2470, 1.0
        %v2480 = vadd.f32 %v2472, 1.0
        %v2481 = vrcp.pop %v2473
        %v2482 = vmul.f32 1.0, %v2481
        %v2483 = vrcp.pop %v2474
        %v2484 = vmul.f32 1.0, %v2483
        %v2485 = vrcp.pop %v2475
        %v2486 = vmul.f32 1.0, %v2485
        %v2487 = vrcp.pop %v2476
        %v2488 = vmul.f32 1.0, %v2487
        %v2489 = vrcp.pop %v2477
        %v2490 = vmul.f32 1.0, %v2489
        %v2491 = vrcp.pop %v2478
        %v2492 = vmul.f32 1.0, %v2491
        %v2493 = vrcp.pop %v2479
        %v2494 = vmul.f32 1.0, %v2493
        %v2495 = vrcp.pop %v2480
        %v2496 = vmul.f32 1.0, %v2495
        %v2497 = vld [vmem:[#allocation4 + $0x80] sm:$0xff]
        %v2498 = vld [vmem:[#allocation4 + $0x88] sm:$0xff]
        %v2499 = vld [vmem:[#allocation4 + $0x90] sm:$0xff]
        %v2500 = vld [vmem:[#allocation4 + $0x98] sm:$0xff]
        %v2501 = vld [vmem:[#allocation4 + $0xa0] sm:$0xff]
        %v2502 = vld [vmem:[#allocation4 + $0xa8] sm:$0xff]
        %v2503 = vld [vmem:[#allocation4 + $0xb0] sm:$0xff]
        %v2504 = vld [vmem:[#allocation4 + $0xb8] sm:$0xff]
        %v2505 = vxor.u32 %v2497, 2147483648
        %v2506 = vxor.u32 %v2498, 2147483648
        %v2507 = vxor.u32 %v2499, 2147483648
        %v2508 = vxor.u32 %v2500, 2147483648
        %v2509 = vxor.u32 %v2501, 2147483648
        %v2510 = vxor.u32 %v2502, 2147483648
        %v2511 = vxor.u32 %v2503, 2147483648
        %v2512 = vxor.u32 %v2504, 2147483648
        %v2513 = vmul.f32 %v2505, 1.442695
        %v2514 = vpow.pop %v2513
        %v2515 = vmul.f32 %v2506, 1.442695
        %v2516 = vpow.pop %v2515
        %v2517 = vmul.f32 %v2507, 1.442695
        %v2518 = vpow.pop %v2517
        %v2519 = vmul.f32 %v2508, 1.442695
        %v2520 = vpow.pop %v2519
        %v2521 = vmul.f32 %v2509, 1.442695
        %v2522 = vpow.pop %v2521
        %v2523 = vmul.f32 %v2510, 1.442695
        %v2524 = vpow.pop %v2523
        %v2525 = vmul.f32 %v2511, 1.442695
        %v2526 = vpow.pop %v2525
        %v2527 = vmul.f32 %v2512, 1.442695
        %v2528 = vpow.pop %v2527
        %v2529 = vadd.f32 %v2514, 1.0
        %v2530 = vadd.f32 %v2516, 1.0
        %v2531 = vadd.f32 %v2518, 1.0
        %v2532 = vadd.f32 %v2520, 1.0
        %v2533 = vadd.f32 %v2522, 1.0
        %v2534 = vadd.f32 %v2524, 1.0
        %v2535 = vadd.f32 %v2526, 1.0
        %v2536 = vadd.f32 %v2528, 1.0
        %v2537 = vrcp.pop %v2529
        %v2538 = vmul.f32 1.0, %v2537
        %v2539 = vrcp.pop %v2530
        %v2540 = vmul.f32 1.0, %v2539
        %v2541 = vrcp.pop %v2531
        %v2542 = vmul.f32 1.0, %v2541
        %v2543 = vrcp.pop %v2532
        %v2544 = vmul.f32 1.0, %v2543
        %v2545 = vrcp.pop %v2533
        %v2546 = vmul.f32 1.0, %v2545
        %v2547 = vrcp.pop %v2534
        %v2548 = vmul.f32 1.0, %v2547
        %v2549 = vrcp.pop %v2535
        %v2550 = vmul.f32 1.0, %v2549
        %v2551 = vrcp.pop %v2536
        %v2552 = vmul.f32 1.0, %v2551
        %v2553 = vld [vmem:[#allocation4 + $0xc0] sm:$0xff]
        %v2554 = vld [vmem:[#allocation4 + $0xc8] sm:$0xff]
        %v2555 = vld [vmem:[#allocation4 + $0xd0] sm:$0xff]
        %v2556 = vld [vmem:[#allocation4 + $0xd8] sm:$0xff]
        %v2557 = vld [vmem:[#allocation4 + $0xe0] sm:$0xff]
        %v2558 = vld [vmem:[#allocation4 + $0xe8] sm:$0xff]
        %v2559 = vld [vmem:[#allocation4 + $0xf0] sm:$0xff]
        %v2560 = vld [vmem:[#allocation4 + $0xf8] sm:$0xff]
        %v2561 = vtanh.pop %v2553
        %v2562 = vtanh.pop %v2554
        %v2563 = vtanh.pop %v2555
        %v2564 = vtanh.pop %v2556
        %v2565 = vtanh.pop %v2557
        %v2566 = vtanh.pop %v2558
        %v2567 = vtanh.pop %v2559
        %v2568 = vtanh.pop %v2560
        %v2569 = vmul.f32 %v2482, %v2561
        %v2570 = vmul.f32 %v2484, %v2562
        %v2571 = vmul.f32 %v2486, %v2563
        %v2572 = vmul.f32 %v2488, %v2564
        %v2573 = vmul.f32 %v2490, %v2565
        %v2574 = vmul.f32 %v2492, %v2566
        %v2575 = vmul.f32 %v2494, %v2567
        %v2576 = vmul.f32 %v2496, %v2568
        %v2577 = vtanh.pop %v2569
        %v2578 = vtanh.pop %v2570
        %v2579 = vtanh.pop %v2571
        %v2580 = vtanh.pop %v2572
        %v2581 = vtanh.pop %v2573
        %v2582 = vtanh.pop %v2574
        %v2583 = vtanh.pop %v2575
        %v2584 = vtanh.pop %v2576
        %v2585 = vmul.f32 %v2538, %v2577
        %v2586 = vmul.f32 %v2540, %v2578
        %v2587 = vmul.f32 %v2542, %v2579
        %v2588 = vmul.f32 %v2544, %v2580
        %v2589 = vmul.f32 %v2546, %v2581
        %v2590 = vmul.f32 %v2548, %v2582
        %v2591 = vmul.f32 %v2550, %v2583
        %v2592 = vmul.f32 %v2552, %v2584
        %s2593 = scalar_lea.vmem %s221, 64 [#allocation5]
        %2594 = vst [vmem:[%s2593] sm:$0xff] %v2585
        %2595 = vst [vmem:[%s2593 + $0x8] sm:$0xff] %v2586
        %2596 = vst [vmem:[%s2593 + $0x10] sm:$0xff] %v2587
        %2597 = vst [vmem:[%s2593 + $0x18] sm:$0xff] %v2588
        %2598 = vst [vmem:[%s2593 + $0x20] sm:$0xff] %v2589
        %2599 = vst [vmem:[%s2593 + $0x28] sm:$0xff] %v2590
        %2600 = vst [vmem:[%s2593 + $0x30] sm:$0xff] %v2591
        %2601 = vst [vmem:[%s2593 + $0x38] sm:$0xff] %v2592
        %s2602 = scalar_lea.vmem %s228, 64 [#allocation7]
        %2603 = vst [vmem:[%s2602] sm:$0xff] %v2569
        %2604 = vst [vmem:[%s2602 + $0x8] sm:$0xff] %v2570
        %2605 = vst [vmem:[%s2602 + $0x10] sm:$0xff] %v2571
        %2606 = vst [vmem:[%s2602 + $0x18] sm:$0xff] %v2572
        %2607 = vst [vmem:[%s2602 + $0x20] sm:$0xff] %v2573
        %2608 = vst [vmem:[%s2602 + $0x28] sm:$0xff] %v2574
        %2609 = vst [vmem:[%s2602 + $0x30] sm:$0xff] %v2575
        %2610 = vst [vmem:[%s2602 + $0x38] sm:$0xff] %v2576
        %s2611 = sand.u32 %s120, 1
        %s2612 = scalar_lea.sflag [#allocation6], %s2611
        %s2613 = sand.u32 %s120, 1
        %s2614 = smul.addr %s2613, 128
        %s2615 = scalar_lea.vmem [#allocation5], %s2614
        %s2616 = sand.u32 %s146, 1
        %s2617 = scalar_lea.sflag [#allocation8], %s2616
        %s2618 = sand.u32 %s146, 1
        %s2619 = smul.addr %s2618, 128
        %s2620 = scalar_lea.vmem [#allocation7], %s2619
        // Predicated region
        $region37: #{tpu_custom_call.1} parent=35 // pred_check
          %p2621 = pneg %p130
        $region38: #{tpu_custom_call.1} parent=35 // pred_check_branch
          %2623 = sbr.rel (%p2621) target = $region40
        $region39: #{tpu_custom_call.1} parent=35 // pred_region
          #allocation10 [shape = 'u32[6]{0}', space=smem, size = 0x18, scoped, tag = 'DMA stride descriptor']
          %s2625 = ssub.s32 2048, 2048
          %2626 = vsyncadd %s2612, %s2625
          %s2627 = smul.addr %s23, 8
          %s2628 = smul.addr %s2627, 128
          %s2629 = scalar_lea.hbm %s4, %s2628
          %s2631 = sshll.u32 1, 14
          %s2632 = sxor.u32 4294967295, %s2631
          %s2635 = sshll.u32 7, 18
          %s2636 = sxor.u32 4294967295, %s2635
          %s2637 = sand.u32 0, %s2636
          %s2639 = sor.u32 %s2637, 0
          %s2641 = sshll.u32 3, 24
          %s2642 = sxor.u32 4294967295, %s2641
          %s2643 = sand.u32 %s2639, %s2642
          %s2645 = sor.u32 %s2643, 0
          %s2646 = sshll.u32 %s2615, 4
          %s2647 = int_to_ptr.vmem [resolvable:$true] %s2646
          %2653 = sst [smem:[#allocation10]] 1024
          %s2654 = scalar_lea.smem [#allocation10], 1
          %2655 = sst [smem:[%s2654]] 2048
          %s2656 = scalar_lea.smem [#allocation10], 2
          %2657 = sst [smem:[%s2656]] 4
          %s2658 = scalar_lea.smem [#allocation10], 3
          %2659 = sst [smem:[%s2658]] 256
          %s2660 = scalar_lea.smem [#allocation10], 4
          %2661 = sst [smem:[%s2660]] 256
          %s2662 = scalar_lea.smem [#allocation10], 5
          %2663 = sst [smem:[%s2662]] 16
          %2665 = dma.general %s2647, 2048, %s2629, %s2612, [#allocation9], [#allocation10], %s2645, 0
        $region40: #{tpu_custom_call.1} parent=35 // pred_fallthru
          _
        // Predicated region
        $region41: #{tpu_custom_call.1} parent=35 // pred_check
          %p2666 = pneg %p156
        $region42: #{tpu_custom_call.1} parent=35 // pred_check_branch
          %2668 = sbr.rel (%p2666) target = $region44
        $region43: #{tpu_custom_call.1} parent=35 // pred_region
          #allocation12 [shape = 'u32[6]{0}', space=smem, size = 0x18, scoped, tag = 'DMA stride descriptor']
          %s2670 = ssub.s32 2048, 2048
          %2671 = vsyncadd %s2617, %s2670
          %s2672 = smul.addr %s23, 8
          %s2673 = smul.addr %s2672, 128
          %s2674 = scalar_lea.hbm %s5, %s2673
          %s2676 = sshll.u32 1, 14
          %s2677 = sxor.u32 4294967295, %s2676
          %s2680 = sshll.u32 7, 18
          %s2681 = sxor.u32 4294967295, %s2680
          %s2682 = sand.u32 0, %s2681
          %s2684 = sor.u32 %s2682, 0
          %s2686 = sshll.u32 3, 24
          %s2687 = sxor.u32 4294967295, %s2686
          %s2688 = sand.u32 %s2684, %s2687
          %s2690 = sor.u32 %s2688, 0
          %s2691 = sshll.u32 %s2620, 4
          %s2692 = int_to_ptr.vmem [resolvable:$true] %s2691
          %2698 = sst [smem:[#allocation12]] 1024
          %s2699 = scalar_lea.smem [#allocation12], 1
          %2700 = sst [smem:[%s2699]] 2048
          %s2701 = scalar_lea.smem [#allocation12], 2
          %2702 = sst [smem:[%s2701]] 4
          %s2703 = scalar_lea.smem [#allocation12], 3
          %2704 = sst [smem:[%s2703]] 256
          %s2705 = scalar_lea.smem [#allocation12], 4
          %2706 = sst [smem:[%s2705]] 256
          %s2707 = scalar_lea.smem [#allocation12], 5
          %2708 = sst [smem:[%s2707]] 16
          %2710 = dma.general %s2692, 2048, %s2674, %s2617, [#allocation11], [#allocation12], %s2690, 0
        $region44: #{tpu_custom_call.1} parent=35 // pred_fallthru
          _
      $region36: #{tpu_custom_call.1} parent=5 // pred_fallthru
        _
      %p2711 = scmp.le.s32.totalorder 2, %s18
      // Predicated region
      $region45: #{tpu_custom_call.1} parent=5 // pred_check
        %p2712 = pneg %p2711
      $region46: #{tpu_custom_call.1} parent=5 // pred_check_branch
        %2714 = sbr.rel (%p2712) target = $region48
      $region47: #{tpu_custom_call.1} parent=5 // pred_region
        %s2715 = ssub.s32 %s18, 2
        // Predicated region
        $region49: #{tpu_custom_call.1} parent=47 // pred_check
          %p2716 = pneg %p136
        $region50: #{tpu_custom_call.1} parent=47 // pred_check_branch
          %2718 = sbr.rel (%p2716) target = $region52
        $region51: #{tpu_custom_call.1} parent=47 // pred_region
          %s2719 = sand.u32 %s121, 1
          %s2720 = scalar_lea.sflag [#allocation6], %s2719
          %s2721 = sand.u32 %s121, 1
          %s2722 = smul.addr %s2721, 128
          %s2723 = scalar_lea.vmem [#allocation5], %s2722
          %2724 = dma.done %s2720, 2048
        $region52: #{tpu_custom_call.1} parent=47 // pred_fallthru
          _
        // Predicated region
        $region53: #{tpu_custom_call.1} parent=47 // pred_check
          %p2725 = pneg %p162
        $region54: #{tpu_custom_call.1} parent=47 // pred_check_branch
          %2727 = sbr.rel (%p2725) target = $region56
        $region55: #{tpu_custom_call.1} parent=47 // pred_region
          %s2728 = sand.u32 %s147, 1
          %s2729 = scalar_lea.sflag [#allocation8], %s2728
          %s2730 = sand.u32 %s147, 1
          %s2731 = smul.addr %s2730, 128
          %s2732 = scalar_lea.vmem [#allocation7], %s2731
          %2733 = dma.done %s2729, 2048
        $region56: #{tpu_custom_call.1} parent=47 // pred_fallthru
          _
      $region48: #{tpu_custom_call.1} parent=5 // pred_fallthru
        _
    $region6: #{tpu_custom_call.1} parent=1 // loop_footer
      %s22 = sadd.s32 1, %s18
    $region7: #{tpu_custom_call.1} parent=1 // loop_footer_branch
      %17 = sbr.rel target = $region3
    $region8: #{tpu_custom_call.1} parent=1 // loop_exit
      _
    %2734 = vsyncpa [#allocation6], 1
    %s2735 = scalar_lea.sflag [#allocation6], 1
    %2736 = vsyncpa %s2735, 1
    %2737 = vsyncpa [#allocation8], 1
    %s2738 = scalar_lea.sflag [#allocation8], 1
    %2739 = vsyncpa %s2738, 1

</llo_original>
